<compile_context>
chip_gen: v7x
topology: tpu7x:2x2x1
jax: 0.10.0
libtpu: 0.0.40
codegen_flags: <defaults>
</compile_context>

<pallas_src>
import jax
import jax.numpy as jnp
from jax.experimental import pallas as pl
from jax.experimental.pallas import tpu as pltpu

# ---------------- problem sizes (match the module's __init__ defaults) ----------------
B = 8            # batch
Z_DIM = 512      # latent_dim
UP_DIM = 128     # DenseEmbedder up_dim
# DenseEmbedder dims: np.linspace(512, 128, 4).astype(int) = [512, 384, 256, 128]
D1, D2, D3 = 384, 256, 128
N_CLASSES = 2    # att_names='gender' -> single head with 2 classes
C_PAD = 128      # head padded to a full lane width; cols >= N_CLASSES masked via bias
DIS_TEMP = 1.0
_NEG_MASK = -1e30


def _lrelu(x):
    # LeakyReLU(0.2) == max(x, 0.2*x) for slope < 1: one VPU max+mul, no cmp+select.
    return jnp.maximum(x, 0.2 * x)


def _dense(x, w_ref, b_ref):
    # Native bf16 x bf16 MXU matmul with f32 accumulation; bias add stays f32.
    return jnp.dot(x.astype(jnp.bfloat16), w_ref[...],
                   preferred_element_type=jnp.float32) + b_ref[...]


def ccf_kernel(z_ref, y_ref,
               wm0_ref, bm0_ref, wm1_ref, bm1_ref,
               w1_ref, b1_ref, w2_ref, b2_ref, w3_ref, b3_ref,
               wh_ref, bh_ref,
               o_ref):
    z = z_ref[...].astype(jnp.float32)                      # (TB, Z)
    z_dim = z.shape[1]

    # ---- mapping network g(z): normalize 2nd moment, then MLP (synthetic stand-in) ----
    mz = jnp.mean(z * z, axis=1, keepdims=True)             # reused for the prior term
    zn = z * jax.lax.rsqrt(mz + 1e-8)
    h = _lrelu(_dense(zn, wm0_ref, bm0_ref))
    w = _lrelu(_dense(h, wm1_ref, bm1_ref))

    # ---- DenseEmbedder: 1x1 convs (== Linear) + LeakyReLU(0.2), then head ----
    x = _lrelu(_dense(w, w1_ref, b1_ref))
    x = _lrelu(_dense(x, w2_ref, b2_ref))
    x = _lrelu(_dense(x, w3_ref, b3_ref))
    # Padded head: columns >= N_CLASSES have zero weights and -1e30 bias, so they
    # contribute exactly 0 to the logsumexp and are never selected by the one-hot.
    logits = _dense(x, wh_ref, bh_ref)                      # (TB, C_PAD), f32

    # ---- single conditional energy (n_classes > 1 branch) ----
    # energy = logits[b, y[b]] / dis_temp - logsumexp(logits[b, :])
    y = y_ref[...]                                          # (TB, 1) int32
    cls = jax.lax.broadcasted_iota(jnp.int32, logits.shape, 1)
    onehot = (cls == y).astype(jnp.float32)
    # Temperature applied to the picked scalar only (and DIS_TEMP == 1.0 here).
    picked = jnp.sum(logits * onehot, axis=1, keepdims=True) * (1.0 / DIS_TEMP)
    m = jnp.max(logits, axis=1, keepdims=True)
    lse = m + jnp.log(jnp.sum(jnp.exp(logits - m), axis=1, keepdims=True))  # (TB, 1)
    cond_energy = picked - lse                              # weight 1.0 (seq_indices=[])

    # ---- CCF.forward: cond energy minus 0.5 * ||z||^2 (sum = Z_DIM * mean, reuse mz) ----
    o_ref[...] = cond_energy - (0.5 * z_dim) * mz


def ccf_forward(z, ys, params, *, block_b=256):
    """z: (B, Z_DIM) f32, ys: (B, 1) int32  ->  energy: (B,) f32."""
    (wm0, bm0, wm1, bm1, w1, b1, w2, b2, w3, b3, wh, bh) = params
    batch = z.shape[0]
    tb = batch if batch <= block_b else block_b
    assert batch % tb == 0, (batch, tb)

    # Pad the 2-class head to a full 128-lane output; mask padded classes via bias.
    wh_pad = jnp.zeros((UP_DIM, C_PAD), wh.dtype).at[:, :N_CLASSES].set(wh)
    bh_pad = jnp.full((1, C_PAD), _NEG_MASK, jnp.float32).at[:, :N_CLASSES].set(bh)

    weights = (wm0, bm0, wm1, bm1, w1, b1, w2, b2, w3, b3, wh_pad, bh_pad)
    inputs = (z, ys) + weights

    def batch_spec(a):
        return pl.BlockSpec((tb, a.shape[1]), lambda i: (i, 0))

    def resident_spec(a):
        # Constant block index -> weights DMA'd once, stay VMEM-resident across steps.
        # Single-buffered: the block never revolves, so a 2nd pipeline buffer is waste.
        return pl.BlockSpec(a.shape, lambda i, _n=a.ndim: (0,) * _n,
                            pipeline_mode=pl.Buffered(1))

    flops = 2 * batch * (Z_DIM * Z_DIM * 2 + Z_DIM * D1 + D1 * D2 + D2 * D3 + D3 * C_PAD)
    bytes_accessed = sum(int(a.size) * a.dtype.itemsize for a in inputs) + batch * 4
    cost = pl.CostEstimate(flops=flops,
                           transcendentals=batch * (C_PAD + 4),
                           bytes_accessed=bytes_accessed)

    out = pl.pallas_call(
        ccf_kernel,
        out_shape=jax.ShapeDtypeStruct((batch, 1), jnp.float32),
        grid=(batch // tb,),
        in_specs=[batch_spec(z), batch_spec(ys)] + [resident_spec(a) for a in weights],
        out_specs=pl.BlockSpec((tb, 1), lambda i: (i, 0)),
        compiler_params=pltpu.CompilerParams(
            # Sequential over batch blocks: avoids each v7x TensorCore re-fetching the
            # full weight set while the kernel is weight-DMA bound.
            dimension_semantics=("arbitrary",),
            vmem_limit_bytes=8 * 1024 * 1024),
        cost_estimate=cost,
    )(*inputs)
    return out[:, 0]


def ccf_reference(z, ys, params):
    """Pure-JAX reference of the same forward pass (same bf16 matmul path)."""
    (wm0, bm0, wm1, bm1, w1, b1, w2, b2, w3, b3, wh, bh) = params

    def dense(x, w_, b_):
        return jnp.dot(x.astype(jnp.bfloat16), w_,
                       preferred_element_type=jnp.float32) + b_

    zn = z * jax.lax.rsqrt(jnp.mean(z * z, axis=1, keepdims=True) + 1e-8)
    h = _lrelu(dense(zn, wm0, bm0))
    w = _lrelu(dense(h, wm1, bm1))
    x = _lrelu(dense(w, w1, b1))
    x = _lrelu(dense(x, w2, b2))
    x = _lrelu(dense(x, w3, b3))
    logits = dense(x, wh, bh)
    picked = jnp.take_along_axis(logits / DIS_TEMP, ys, axis=1)[:, 0]
    lse = jax.scipy.special.logsumexp(logits, axis=1)
    return (picked - lse) - 0.5 * jnp.sum(z * z, axis=1)


def init_params(key):
    def dense(key, fan_in, fan_out):
        # Store weights in bf16 (halves HBM traffic), biases in f32.
        w = (jax.random.normal(key, (fan_in, fan_out), jnp.float32)
             / jnp.sqrt(fan_in)).astype(jnp.bfloat16)
        b = jnp.zeros((1, fan_out), jnp.float32)
        return w, b

    ks = jax.random.split(key, 6)
    wm0, bm0 = dense(ks[0], Z_DIM, Z_DIM)       # mapping layer 0
    wm1, bm1 = dense(ks[1], Z_DIM, Z_DIM)       # mapping layer 1
    w1, b1 = dense(ks[2], Z_DIM, D1)            # DenseEmbedder 512 -> 384
    w2, b2 = dense(ks[3], D1, D2)               # 384 -> 256
    w3, b3 = dense(ks[4], D2, D3)               # 256 -> 128
    wh, bh = dense(ks[5], UP_DIM, N_CLASSES)    # head: 128 -> 2
    return (wm0, bm0, wm1, bm1, w1, b1, w2, b2, w3, b3, wh, bh)


if __name__ == "__main__":
    key = jax.random.PRNGKey(0)
    k_param, k_z, k_y = jax.random.split(key, 3)

    params = init_params(k_param)
    z = jax.random.normal(k_z, (B, Z_DIM), jnp.float32)
    ys = jax.random.randint(k_y, (B, 1), 0, N_CLASSES, jnp.int32)

    energy = jax.block_until_ready(ccf_forward(z, ys, params))
    ref = jax.block_until_ready(ccf_reference(z, ys, params))

    assert energy.shape == (B,)
    assert jnp.allclose(energy, ref, rtol=1e-3, atol=1e-2), (energy, ref)
    print("KERNEL_OK")
</pallas_src>

<mosaic_0001>
module attributes {stable_mosaic.version = 11 : i64} {
  func.func @ccf_kernel(%arg0: i32, %arg1: memref<8x512xf32, #tpu.memory_space<vmem>>, %arg2: memref<8x1xi32, #tpu.memory_space<vmem>>, %arg3: memref<512x512xbf16, #tpu.memory_space<vmem>>, %arg4: memref<1x512xf32, #tpu.memory_space<vmem>>, %arg5: memref<512x512xbf16, #tpu.memory_space<vmem>>, %arg6: memref<1x512xf32, #tpu.memory_space<vmem>>, %arg7: memref<512x384xbf16, #tpu.memory_space<vmem>>, %arg8: memref<1x384xf32, #tpu.memory_space<vmem>>, %arg9: memref<384x256xbf16, #tpu.memory_space<vmem>>, %arg10: memref<1x256xf32, #tpu.memory_space<vmem>>, %arg11: memref<256x128xbf16, #tpu.memory_space<vmem>>, %arg12: memref<1x128xf32, #tpu.memory_space<vmem>>, %arg13: memref<128x128xbf16, #tpu.memory_space<vmem>>, %arg14: memref<1x128xf32, #tpu.memory_space<vmem>>, %arg15: memref<8x1xf32, #tpu.memory_space<vmem>>) attributes {dimension_semantics = [#tpu.dimension_semantics<arbitrary>], iteration_bounds = array<i64: 1>, scalar_prefetch = 0 : i64, scratch_operands = 0 : i64, tpu.core_type = #tpu.core_type<tc>, window_params = [{transform_indices = @transform_0, window_bounds = array<i64: 8, 512>}, {transform_indices = @transform_1, window_bounds = array<i64: 8, 1>}, {pipeline_mode = #tpu.pipeline_mode<synchronous>, transform_indices = @transform_2, window_bounds = array<i64: 512, 512>}, {pipeline_mode = #tpu.pipeline_mode<synchronous>, transform_indices = @transform_3, window_bounds = array<i64: 1, 512>}, {pipeline_mode = #tpu.pipeline_mode<synchronous>, transform_indices = @transform_4, window_bounds = array<i64: 512, 512>}, {pipeline_mode = #tpu.pipeline_mode<synchronous>, transform_indices = @transform_5, window_bounds = array<i64: 1, 512>}, {pipeline_mode = #tpu.pipeline_mode<synchronous>, transform_indices = @transform_6, window_bounds = array<i64: 512, 384>}, {pipeline_mode = #tpu.pipeline_mode<synchronous>, transform_indices = @transform_7, window_bounds = array<i64: 1, 384>}, {pipeline_mode = #tpu.pipeline_mode<synchronous>, transform_indices = @transform_8, window_bounds = array<i64: 384, 256>}, {pipeline_mode = #tpu.pipeline_mode<synchronous>, transform_indices = @transform_9, window_bounds = array<i64: 1, 256>}, {pipeline_mode = #tpu.pipeline_mode<synchronous>, transform_indices = @transform_10, window_bounds = array<i64: 256, 128>}, {pipeline_mode = #tpu.pipeline_mode<synchronous>, transform_indices = @transform_11, window_bounds = array<i64: 1, 128>}, {pipeline_mode = #tpu.pipeline_mode<synchronous>, transform_indices = @transform_12, window_bounds = array<i64: 128, 128>}, {pipeline_mode = #tpu.pipeline_mode<synchronous>, transform_indices = @transform_13, window_bounds = array<i64: 1, 128>}, {transform_indices = @transform_14, window_bounds = array<i64: 8, 1>}]} {
    %c0 = arith.constant 0 : index
    %c0_0 = arith.constant 0 : index
    %0 = vector.load %arg1[%c0, %c0_0] : memref<8x512xf32, #tpu.memory_space<vmem>>, vector<8x512xf32>
    %1 = arith.mulf %0, %0 : vector<8x512xf32>
    %cst = arith.constant dense<0.000000e+00> : vector<8xf32>
    %2 = vector.multi_reduction <add>, %1, %cst [1] : vector<8x512xf32> to vector<8xf32>
    %3 = vector.shape_cast %2 : vector<8xf32> to vector<8x1xf32>
    %cst_1 = arith.constant 5.120000e+02 : f32
    %4 = vector.broadcast %cst_1 : f32 to vector<8x1xf32>
    %5 = arith.divf %3, %4 : vector<8x1xf32>
    %cst_2 = arith.constant 9.99999993E-9 : f32
    %6 = vector.broadcast %cst_2 : f32 to vector<8x1xf32>
    %7 = arith.addf %5, %6 : vector<8x1xf32>
    %8 = math.rsqrt %7 : vector<8x1xf32>
    %9 = vector.broadcast %8 : vector<8x1xf32> to vector<8x512xf32>
    %10 = arith.mulf %0, %9 : vector<8x512xf32>
    %11 = arith.truncf %10 : vector<8x512xf32> to vector<8x512xbf16>
    %c0_3 = arith.constant 0 : index
    %c0_4 = arith.constant 0 : index
    %12 = vector.load %arg3[%c0_3, %c0_4] : memref<512x512xbf16, #tpu.memory_space<vmem>>, vector<512x512xbf16>
    %cst_5 = arith.constant dense<0.000000e+00> : vector<8x512xf32>
    %13 = tpu.matmul %11, %12, %cst_5 {dimension_numbers = #tpu.dot_dimension_numbers<[1], [0], [0], [1], [0, 0, 1, 1], [], []>} : vector<8x512xbf16>, vector<512x512xbf16>, vector<8x512xf32> -> vector<8x512xf32>
    %c0_6 = arith.constant 0 : index
    %c0_7 = arith.constant 0 : index
    %14 = vector.load %arg4[%c0_6, %c0_7] : memref<1x512xf32, #tpu.memory_space<vmem>>, vector<1x512xf32>
    %15 = vector.broadcast %14 : vector<1x512xf32> to vector<8x512xf32>
    %16 = arith.addf %13, %15 : vector<8x512xf32>
    %cst_8 = arith.constant 2.000000e-01 : f32
    %17 = vector.broadcast %cst_8 : f32 to vector<8x512xf32>
    %18 = arith.mulf %17, %16 : vector<8x512xf32>
    %19 = arith.maximumf %16, %18 : vector<8x512xf32>
    %20 = arith.truncf %19 : vector<8x512xf32> to vector<8x512xbf16>
    %c0_9 = arith.constant 0 : index
    %c0_10 = arith.constant 0 : index
    %21 = vector.load %arg5[%c0_9, %c0_10] : memref<512x512xbf16, #tpu.memory_space<vmem>>, vector<512x512xbf16>
    %cst_11 = arith.constant dense<0.000000e+00> : vector<8x512xf32>
    %22 = tpu.matmul %20, %21, %cst_11 {dimension_numbers = #tpu.dot_dimension_numbers<[1], [0], [0], [1], [0, 0, 1, 1], [], []>} : vector<8x512xbf16>, vector<512x512xbf16>, vector<8x512xf32> -> vector<8x512xf32>
    %c0_12 = arith.constant 0 : index
    %c0_13 = arith.constant 0 : index
    %23 = vector.load %arg6[%c0_12, %c0_13] : memref<1x512xf32, #tpu.memory_space<vmem>>, vector<1x512xf32>
    %24 = vector.broadcast %23 : vector<1x512xf32> to vector<8x512xf32>
    %25 = arith.addf %22, %24 : vector<8x512xf32>
    %cst_14 = arith.constant 2.000000e-01 : f32
    %26 = vector.broadcast %cst_14 : f32 to vector<8x512xf32>
    %27 = arith.mulf %26, %25 : vector<8x512xf32>
    %28 = arith.maximumf %25, %27 : vector<8x512xf32>
    %29 = arith.truncf %28 : vector<8x512xf32> to vector<8x512xbf16>
    %c0_15 = arith.constant 0 : index
    %c0_16 = arith.constant 0 : index
    %30 = vector.load %arg7[%c0_15, %c0_16] : memref<512x384xbf16, #tpu.memory_space<vmem>>, vector<512x384xbf16>
    %cst_17 = arith.constant dense<0.000000e+00> : vector<8x384xf32>
    %31 = tpu.matmul %29, %30, %cst_17 {dimension_numbers = #tpu.dot_dimension_numbers<[1], [0], [0], [1], [0, 0, 1, 1], [], []>} : vector<8x512xbf16>, vector<512x384xbf16>, vector<8x384xf32> -> vector<8x384xf32>
    %c0_18 = arith.constant 0 : index
    %c0_19 = arith.constant 0 : index
    %32 = vector.load %arg8[%c0_18, %c0_19] : memref<1x384xf32, #tpu.memory_space<vmem>>, vector<1x384xf32>
    %33 = vector.broadcast %32 : vector<1x384xf32> to vector<8x384xf32>
    %34 = arith.addf %31, %33 : vector<8x384xf32>
    %cst_20 = arith.constant 2.000000e-01 : f32
    %35 = vector.broadcast %cst_20 : f32 to vector<8x384xf32>
    %36 = arith.mulf %35, %34 : vector<8x384xf32>
    %37 = arith.maximumf %34, %36 : vector<8x384xf32>
    %38 = arith.truncf %37 : vector<8x384xf32> to vector<8x384xbf16>
    %c0_21 = arith.constant 0 : index
    %c0_22 = arith.constant 0 : index
    %39 = vector.load %arg9[%c0_21, %c0_22] : memref<384x256xbf16, #tpu.memory_space<vmem>>, vector<384x256xbf16>
    %cst_23 = arith.constant dense<0.000000e+00> : vector<8x256xf32>
    %40 = tpu.matmul %38, %39, %cst_23 {dimension_numbers = #tpu.dot_dimension_numbers<[1], [0], [0], [1], [0, 0, 1, 1], [], []>} : vector<8x384xbf16>, vector<384x256xbf16>, vector<8x256xf32> -> vector<8x256xf32>
    %c0_24 = arith.constant 0 : index
    %c0_25 = arith.constant 0 : index
    %41 = vector.load %arg10[%c0_24, %c0_25] : memref<1x256xf32, #tpu.memory_space<vmem>>, vector<1x256xf32>
    %42 = vector.broadcast %41 : vector<1x256xf32> to vector<8x256xf32>
    %43 = arith.addf %40, %42 : vector<8x256xf32>
    %cst_26 = arith.constant 2.000000e-01 : f32
    %44 = vector.broadcast %cst_26 : f32 to vector<8x256xf32>
    %45 = arith.mulf %44, %43 : vector<8x256xf32>
    %46 = arith.maximumf %43, %45 : vector<8x256xf32>
    %47 = arith.truncf %46 : vector<8x256xf32> to vector<8x256xbf16>
    %c0_27 = arith.constant 0 : index
    %c0_28 = arith.constant 0 : index
    %48 = vector.load %arg11[%c0_27, %c0_28] : memref<256x128xbf16, #tpu.memory_space<vmem>>, vector<256x128xbf16>
    %cst_29 = arith.constant dense<0.000000e+00> : vector<8x128xf32>
    %49 = tpu.matmul %47, %48, %cst_29 {dimension_numbers = #tpu.dot_dimension_numbers<[1], [0], [0], [1], [0, 0, 1, 1], [], []>} : vector<8x256xbf16>, vector<256x128xbf16>, vector<8x128xf32> -> vector<8x128xf32>
    %c0_30 = arith.constant 0 : index
    %c0_31 = arith.constant 0 : index
    %50 = vector.load %arg12[%c0_30, %c0_31] : memref<1x128xf32, #tpu.memory_space<vmem>>, vector<1x128xf32>
    %51 = vector.broadcast %50 : vector<1x128xf32> to vector<8x128xf32>
    %52 = arith.addf %49, %51 : vector<8x128xf32>
    %cst_32 = arith.constant 2.000000e-01 : f32
    %53 = vector.broadcast %cst_32 : f32 to vector<8x128xf32>
    %54 = arith.mulf %53, %52 : vector<8x128xf32>
    %55 = arith.maximumf %52, %54 : vector<8x128xf32>
    %56 = arith.truncf %55 : vector<8x128xf32> to vector<8x128xbf16>
    %c0_33 = arith.constant 0 : index
    %c0_34 = arith.constant 0 : index
    %57 = vector.load %arg13[%c0_33, %c0_34] : memref<128x128xbf16, #tpu.memory_space<vmem>>, vector<128x128xbf16>
    %cst_35 = arith.constant dense<0.000000e+00> : vector<8x128xf32>
    %58 = tpu.matmul %56, %57, %cst_35 {dimension_numbers = #tpu.dot_dimension_numbers<[1], [0], [0], [1], [0, 0, 1, 1], [], []>} : vector<8x128xbf16>, vector<128x128xbf16>, vector<8x128xf32> -> vector<8x128xf32>
    %c0_36 = arith.constant 0 : index
    %c0_37 = arith.constant 0 : index
    %59 = vector.load %arg14[%c0_36, %c0_37] : memref<1x128xf32, #tpu.memory_space<vmem>>, vector<1x128xf32>
    %60 = vector.broadcast %59 : vector<1x128xf32> to vector<8x128xf32>
    %61 = arith.addf %58, %60 : vector<8x128xf32>
    %c0_38 = arith.constant 0 : index
    %c0_39 = arith.constant 0 : index
    %62 = vector.load %arg2[%c0_38, %c0_39] : memref<8x1xi32, #tpu.memory_space<vmem>>, vector<8x1xi32>
    %63 = tpu.iota {dimensions = array<i32: 1>} : vector<8x128xi32>
    %64 = vector.broadcast %62 : vector<8x1xi32> to vector<8x128xi32>
    %65 = arith.cmpi eq, %63, %64 : vector<8x128xi32>
    %66 = arith.extui %65 : vector<8x128xi1> to vector<8x128xi32>
    %67 = arith.sitofp %66 : vector<8x128xi32> to vector<8x128xf32>
    %68 = arith.mulf %61, %67 : vector<8x128xf32>
    %cst_40 = arith.constant dense<0.000000e+00> : vector<8xf32>
    %69 = vector.multi_reduction <add>, %68, %cst_40 [1] : vector<8x128xf32> to vector<8xf32>
    %70 = vector.shape_cast %69 : vector<8xf32> to vector<8x1xf32>
    %cst_41 = arith.constant 1.000000e+00 : f32
    %71 = vector.broadcast %cst_41 : f32 to vector<8x1xf32>
    %72 = arith.mulf %70, %71 : vector<8x1xf32>
    %cst_42 = arith.constant dense<0xFF800000> : vector<8xf32>
    %73 = vector.multi_reduction <maximumf>, %61, %cst_42 [1] : vector<8x128xf32> to vector<8xf32>
    %74 = vector.shape_cast %73 : vector<8xf32> to vector<8x1xf32>
    %75 = vector.broadcast %74 : vector<8x1xf32> to vector<8x128xf32>
    %76 = arith.subf %61, %75 : vector<8x128xf32>
    %77 = math.exp %76 : vector<8x128xf32>
    %cst_43 = arith.constant dense<0.000000e+00> : vector<8xf32>
    %78 = vector.multi_reduction <add>, %77, %cst_43 [1] : vector<8x128xf32> to vector<8xf32>
    %79 = vector.shape_cast %78 : vector<8xf32> to vector<8x1xf32>
    %80 = math.log %79 : vector<8x1xf32>
    %81 = arith.addf %74, %80 : vector<8x1xf32>
    %82 = arith.subf %72, %81 : vector<8x1xf32>
    %cst_44 = arith.constant 2.560000e+02 : f32
    %83 = vector.broadcast %cst_44 : f32 to vector<8x1xf32>
    %84 = arith.mulf %83, %5 : vector<8x1xf32>
    %85 = arith.subf %82, %84 : vector<8x1xf32>
    %c0_45 = arith.constant 0 : index
    %c0_46 = arith.constant 0 : index
    %86 = vector.load %arg15[%c0_45, %c0_46] : memref<8x1xf32, #tpu.memory_space<vmem>>, vector<8x1xf32>
    tpu.vector_store %arg15[%c0_45, %c0_46], %85 {strides = array<i32>} : memref<8x1xf32, #tpu.memory_space<vmem>>, vector<8x1xf32>,
    return
  }
  func.func @transform_0(%arg0: i32) -> (i32, i32) {
    %c0_i32 = arith.constant 0 : i32
    %c0_i32_0 = arith.constant 0 : i32
    return %arg0, %c0_i32 : i32, i32
  }
  func.func @transform_1(%arg0: i32) -> (i32, i32) {
    %c0_i32 = arith.constant 0 : i32
    %c0_i32_0 = arith.constant 0 : i32
    return %arg0, %c0_i32 : i32, i32
  }
  func.func @transform_2(%arg0: i32) -> (i32, i32) {
    %c0_i32 = arith.constant 0 : i32
    %c0_i32_0 = arith.constant 0 : i32
    %c0_i32_1 = arith.constant 0 : i32
    return %c0_i32, %c0_i32_0 : i32, i32
  }
  func.func @transform_3(%arg0: i32) -> (i32, i32) {
    %c0_i32 = arith.constant 0 : i32
    %c0_i32_0 = arith.constant 0 : i32
    %c0_i32_1 = arith.constant 0 : i32
    return %c0_i32, %c0_i32_0 : i32, i32
  }
  func.func @transform_4(%arg0: i32) -> (i32, i32) {
    %c0_i32 = arith.constant 0 : i32
    %c0_i32_0 = arith.constant 0 : i32
    %c0_i32_1 = arith.constant 0 : i32
    return %c0_i32, %c0_i32_0 : i32, i32
  }
  func.func @transform_5(%arg0: i32) -> (i32, i32) {
    %c0_i32 = arith.constant 0 : i32
    %c0_i32_0 = arith.constant 0 : i32
    %c0_i32_1 = arith.constant 0 : i32
    return %c0_i32, %c0_i32_0 : i32, i32
  }
  func.func @transform_6(%arg0: i32) -> (i32, i32) {
    %c0_i32 = arith.constant 0 : i32
    %c0_i32_0 = arith.constant 0 : i32
    %c0_i32_1 = arith.constant 0 : i32
    return %c0_i32, %c0_i32_0 : i32, i32
  }
  func.func @transform_7(%arg0: i32) -> (i32, i32) {
    %c0_i32 = arith.constant 0 : i32
    %c0_i32_0 = arith.constant 0 : i32
    %c0_i32_1 = arith.constant 0 : i32
    return %c0_i32, %c0_i32_0 : i32, i32
  }
  func.func @transform_8(%arg0: i32) -> (i32, i32) {
    %c0_i32 = arith.constant 0 : i32
    %c0_i32_0 = arith.constant 0 : i32
    %c0_i32_1 = arith.constant 0 : i32
    return %c0_i32, %c0_i32_0 : i32, i32
  }
  func.func @transform_9(%arg0: i32) -> (i32, i32) {
    %c0_i32 = arith.constant 0 : i32
    %c0_i32_0 = arith.constant 0 : i32
    %c0_i32_1 = arith.constant 0 : i32
    return %c0_i32, %c0_i32_0 : i32, i32
  }
  func.func @transform_10(%arg0: i32) -> (i32, i32) {
    %c0_i32 = arith.constant 0 : i32
    %c0_i32_0 = arith.constant 0 : i32
    %c0_i32_1 = arith.constant 0 : i32
    return %c0_i32, %c0_i32_0 : i32, i32
  }
  func.func @transform_11(%arg0: i32) -> (i32, i32) {
    %c0_i32 = arith.constant 0 : i32
    %c0_i32_0 = arith.constant 0 : i32
    %c0_i32_1 = arith.constant 0 : i32
    return %c0_i32, %c0_i32_0 : i32, i32
  }
  func.func @transform_12(%arg0: i32) -> (i32, i32) {
    %c0_i32 = arith.constant 0 : i32
    %c0_i32_0 = arith.constant 0 : i32
    %c0_i32_1 = arith.constant 0 : i32
    return %c0_i32, %c0_i32_0 : i32, i32
  }
  func.func @transform_13(%arg0: i32) -> (i32, i32) {
    %c0_i32 = arith.constant 0 : i32
    %c0_i32_0 = arith.constant 0 : i32
    %c0_i32_1 = arith.constant 0 : i32
    return %c0_i32, %c0_i32_0 : i32, i32
  }
  func.func @transform_14(%arg0: i32) -> (i32, i32) {
    %c0_i32 = arith.constant 0 : i32
    %c0_i32_0 = arith.constant 0 : i32
    return %arg0, %c0_i32 : i32, i32
  }
}

</mosaic_0001>

<llo_original>
// kernel: tpu_custom_call.1
$region0: #{tpu_custom_call.1}
  #allocation0 [shape = 'u32[]', space=smem, size = 0x4, offset = 0x4, fixed_abs, tag = 'smem constant byte address 0x4 - core index']
  #allocation1 [shape = 'u32[144,128]{1,0:T(1,128)}', space=vmem, size = 0x12000, scoped, tag = 'internal scratch']
  %s0 = inlined_call_operand.hbm [shape: f32[8,512], index: 0, kind: input, shape index: {}]
  %s1 = inlined_call_operand.vmem [shape: s32[8,1], index: 1, kind: input, shape index: {}]
  %s2 = inlined_call_operand.hbm [shape: bf16[512,512], index: 2, kind: input, shape index: {}]
  %s3 = inlined_call_operand.vmem [shape: f32[1,512], index: 3, kind: input, shape index: {}]
  %s4 = inlined_call_operand.hbm [shape: bf16[512,512], index: 4, kind: input, shape index: {}]
  %s5 = inlined_call_operand.vmem [shape: f32[1,512], index: 5, kind: input, shape index: {}]
  %s6 = inlined_call_operand.hbm [shape: bf16[512,384], index: 6, kind: input, shape index: {}]
  %s7 = inlined_call_operand.vmem [shape: f32[1,384], index: 7, kind: input, shape index: {}]
  %s8 = inlined_call_operand.hbm [shape: bf16[384,256], index: 8, kind: input, shape index: {}]
  %s9 = inlined_call_operand.vmem [shape: f32[1,256], index: 9, kind: input, shape index: {}]
  %s10 = inlined_call_operand.hbm [shape: bf16[256,128], index: 10, kind: input, shape index: {}]
  %s11 = inlined_call_operand.vmem [shape: f32[1,128], index: 11, kind: input, shape index: {}]
  %s12 = inlined_call_operand.hbm [shape: bf16[128,128], index: 12, kind: input, shape index: {}]
  %s13 = inlined_call_operand.vmem [shape: f32[1,128], index: 13, kind: input, shape index: {}]
  %s14 = inlined_call_operand.vmem [shape: f32[8,1], index: 14, kind: output, shape index: {}]
  %s15 = sld [smem:[#allocation0]]
  $region94: #{tpu_custom_call.1} parent=0
    _
  %s17 = ssub.s32 1, %s15
  %s18 = scalar_select 0, %s17, %s15
  $region1: #{tpu_custom_call.1} parent=0
    #allocation2 [shape = 'u8[16384]{0}', space=vmem, size = 0x4000, scoped, tag = 'input window, operand 0, single buffered']
    #allocation3 [shape = 's32[1]{0}', space=sflag, size = 0x4, scoped, tag = 'scoped memory for tpu_custom_call.1']
    #allocation4 [shape = 'u8[524288]{0}', space=vmem, size = 0x80000, scoped, tag = 'input window, operand 2, single buffered']
    #allocation5 [shape = 's32[1]{0}', space=sflag, size = 0x4, scoped, tag = 'scoped memory for tpu_custom_call.1']
    #allocation6 [shape = 'u8[524288]{0}', space=vmem, size = 0x80000, scoped, tag = 'input window, operand 4, single buffered']
    #allocation7 [shape = 'u8[393216]{0}', space=vmem, size = 0x60000, scoped, tag = 'input window, operand 6, single buffered']
    #allocation8 [shape = 's32[1]{0}', space=sflag, size = 0x4, scoped, tag = 'scoped memory for tpu_custom_call.1']
    #allocation9 [shape = 'u8[196608]{0}', space=vmem, size = 0x30000, scoped, tag = 'input window, operand 8, single buffered']
    #allocation10 [shape = 'u8[65536]{0}', space=vmem, size = 0x10000, scoped, tag = 'input window, operand 10, single buffered']
    #allocation11 [shape = 's32[1]{0}', space=sflag, size = 0x4, scoped, tag = 'scoped memory for tpu_custom_call.1']
    #allocation12 [shape = 'u8[32768]{0}', space=vmem, size = 0x8000, scoped, tag = 'input window, operand 12, single buffered']
    %19 = vsyncpa [#allocation3], 0
    %20 = vsyncpa [#allocation5], 0
    %21 = vsyncpa [#allocation8], 0
    %22 = vsyncpa [#allocation11], 0
    // Predicated region
    $region2: #{tpu_custom_call.1} parent=1 // pred_check
      _
    $region3: #{tpu_custom_call.1} parent=1 // pred_check_branch
      %24 = sbr.rel (0) target = $region5
    $region4: #{tpu_custom_call.1} parent=1 // pred_region
      %s26 = ssub.s32 512, 512
      %27 = vsyncadd [#allocation3], %s26
      %s29 = sshll.u32 [#allocation2], 4
      %s30 = int_to_ptr.vmem [resolvable:$true] %s29
      %32 = dma.hbm_to_vmem [thread:$0]  %s0, 512, %s30, [#allocation3]
    $region5: #{tpu_custom_call.1} parent=1 // pred_fallthru
      _
    // Predicated region
    $region6: #{tpu_custom_call.1} parent=1 // pred_check
      _
    $region7: #{tpu_custom_call.1} parent=1 // pred_check_branch
      %34 = sbr.rel (0) target = $region9
    $region8: #{tpu_custom_call.1} parent=1 // pred_region
      _
    $region9: #{tpu_custom_call.1} parent=1 // pred_fallthru
      _
    // Predicated region
    $region10: #{tpu_custom_call.1} parent=1 // pred_check
      _
    $region11: #{tpu_custom_call.1} parent=1 // pred_check_branch
      %36 = sbr.rel (0) target = $region13
    $region12: #{tpu_custom_call.1} parent=1 // pred_region
      %s38 = ssub.s32 16384, 16384
      %39 = vsyncadd [#allocation5], %s38
      %s40 = sshll.u32 [#allocation4], 4
      %s41 = int_to_ptr.vmem [resolvable:$true] %s40
      %46 = dma.hbm_to_vmem [thread:$0]  %s2, 16384, %s41, [#allocation5], 256, 256, 16
    $region13: #{tpu_custom_call.1} parent=1 // pred_fallthru
      _
    // Predicated region
    $region14: #{tpu_custom_call.1} parent=1 // pred_check
      _
    $region15: #{tpu_custom_call.1} parent=1 // pred_check_branch
      %48 = sbr.rel (0) target = $region17
    $region16: #{tpu_custom_call.1} parent=1 // pred_region
      _
    $region17: #{tpu_custom_call.1} parent=1 // pred_fallthru
      _
    // Predicated region
    $region18: #{tpu_custom_call.1} parent=1 // pred_check
      _
    $region19: #{tpu_custom_call.1} parent=1 // pred_check_branch
      %50 = sbr.rel (0) target = $region21
    $region20: #{tpu_custom_call.1} parent=1 // pred_region
      %s52 = ssub.s32 16384, 16384
      %53 = vsyncadd [#allocation5], %s52
      %s54 = sshll.u32 [#allocation6], 4
      %s55 = int_to_ptr.vmem [resolvable:$true] %s54
      %60 = dma.hbm_to_vmem [thread:$0]  %s4, 16384, %s55, [#allocation5], 256, 256, 16
    $region21: #{tpu_custom_call.1} parent=1 // pred_fallthru
      _
    // Predicated region
    $region22: #{tpu_custom_call.1} parent=1 // pred_check
      _
    $region23: #{tpu_custom_call.1} parent=1 // pred_check_branch
      %62 = sbr.rel (0) target = $region25
    $region24: #{tpu_custom_call.1} parent=1 // pred_region
      _
    $region25: #{tpu_custom_call.1} parent=1 // pred_fallthru
      _
    // Predicated region
    $region26: #{tpu_custom_call.1} parent=1 // pred_check
      _
    $region27: #{tpu_custom_call.1} parent=1 // pred_check_branch
      %64 = sbr.rel (0) target = $region29
    $region28: #{tpu_custom_call.1} parent=1 // pred_region
      %s66 = ssub.s32 12288, 12288
      %67 = vsyncadd [#allocation8], %s66
      %s68 = sshll.u32 [#allocation7], 4
      %s69 = int_to_ptr.vmem [resolvable:$true] %s68
      %74 = dma.hbm_to_vmem [thread:$0]  %s6, 12288, %s69, [#allocation8], 192, 192, 12
    $region29: #{tpu_custom_call.1} parent=1 // pred_fallthru
      _
    // Predicated region
    $region30: #{tpu_custom_call.1} parent=1 // pred_check
      _
    $region31: #{tpu_custom_call.1} parent=1 // pred_check_branch
      %76 = sbr.rel (0) target = $region33
    $region32: #{tpu_custom_call.1} parent=1 // pred_region
      _
    $region33: #{tpu_custom_call.1} parent=1 // pred_fallthru
      _
    // Predicated region
    $region34: #{tpu_custom_call.1} parent=1 // pred_check
      _
    $region35: #{tpu_custom_call.1} parent=1 // pred_check_branch
      %78 = sbr.rel (0) target = $region37
    $region36: #{tpu_custom_call.1} parent=1 // pred_region
      %s80 = ssub.s32 6144, 6144
      %81 = vsyncadd [#allocation8], %s80
      %s82 = sshll.u32 [#allocation9], 4
      %s83 = int_to_ptr.vmem [resolvable:$true] %s82
      %88 = dma.hbm_to_vmem [thread:$0]  %s8, 6144, %s83, [#allocation8], 128, 128, 8
    $region37: #{tpu_custom_call.1} parent=1 // pred_fallthru
      _
    // Predicated region
    $region38: #{tpu_custom_call.1} parent=1 // pred_check
      _
    $region39: #{tpu_custom_call.1} parent=1 // pred_check_branch
      %90 = sbr.rel (0) target = $region41
    $region40: #{tpu_custom_call.1} parent=1 // pred_region
      _
    $region41: #{tpu_custom_call.1} parent=1 // pred_fallthru
      _
    // Predicated region
    $region42: #{tpu_custom_call.1} parent=1 // pred_check
      _
    $region43: #{tpu_custom_call.1} parent=1 // pred_check_branch
      %92 = sbr.rel (0) target = $region45
    $region44: #{tpu_custom_call.1} parent=1 // pred_region
      %s94 = ssub.s32 2048, 2048
      %95 = vsyncadd [#allocation11], %s94
      %s96 = sshll.u32 [#allocation10], 4
      %s97 = int_to_ptr.vmem [resolvable:$true] %s96
      %102 = dma.hbm_to_vmem [thread:$0]  %s10, 2048, %s97, [#allocation11], 64, 64, 4
    $region45: #{tpu_custom_call.1} parent=1 // pred_fallthru
      _
    // Predicated region
    $region46: #{tpu_custom_call.1} parent=1 // pred_check
      _
    $region47: #{tpu_custom_call.1} parent=1 // pred_check_branch
      %104 = sbr.rel (0) target = $region49
    $region48: #{tpu_custom_call.1} parent=1 // pred_region
      _
    $region49: #{tpu_custom_call.1} parent=1 // pred_fallthru
      _
    // Predicated region
    $region50: #{tpu_custom_call.1} parent=1 // pred_check
      _
    $region51: #{tpu_custom_call.1} parent=1 // pred_check_branch
      %106 = sbr.rel (0) target = $region53
    $region52: #{tpu_custom_call.1} parent=1 // pred_region
      %s108 = ssub.s32 1024, 1024
      %109 = vsyncadd [#allocation11], %s108
      %s110 = sshll.u32 [#allocation12], 4
      %s111 = int_to_ptr.vmem [resolvable:$true] %s110
      %116 = dma.hbm_to_vmem [thread:$0]  %s12, 1024, %s111, [#allocation11], 64, 64, 4
    $region53: #{tpu_custom_call.1} parent=1 // pred_fallthru
      _
    // Predicated region
    $region54: #{tpu_custom_call.1} parent=1 // pred_check
      _
    $region55: #{tpu_custom_call.1} parent=1 // pred_check_branch
      %118 = sbr.rel (0) target = $region57
    $region56: #{tpu_custom_call.1} parent=1 // pred_region
      _
    $region57: #{tpu_custom_call.1} parent=1 // pred_fallthru
      _
    // Predicated region
    $region58: #{tpu_custom_call.1} parent=1 // pred_check
      _
    $region59: #{tpu_custom_call.1} parent=1 // pred_check_branch
      %120 = sbr.rel (0) target = $region61
    $region60: #{tpu_custom_call.1} parent=1 // pred_region
      %121 = dma.done [#allocation3], 512
    $region61: #{tpu_custom_call.1} parent=1 // pred_fallthru
      _
    // Predicated region
    $region62: #{tpu_custom_call.1} parent=1 // pred_check
      _
    $region63: #{tpu_custom_call.1} parent=1 // pred_check_branch
      %123 = sbr.rel (0) target = $region65
    $region64: #{tpu_custom_call.1} parent=1 // pred_region
      %124 = dma.done [#allocation5], 16384
    $region65: #{tpu_custom_call.1} parent=1 // pred_fallthru
      _
    // Predicated region
    $region66: #{tpu_custom_call.1} parent=1 // pred_check
      _
    $region67: #{tpu_custom_call.1} parent=1 // pred_check_branch
      %126 = sbr.rel (0) target = $region69
    $region68: #{tpu_custom_call.1} parent=1 // pred_region
      %127 = dma.done [#allocation5], 16384
    $region69: #{tpu_custom_call.1} parent=1 // pred_fallthru
      _
    // Predicated region
    $region70: #{tpu_custom_call.1} parent=1 // pred_check
      _
    $region71: #{tpu_custom_call.1} parent=1 // pred_check_branch
      %129 = sbr.rel (0) target = $region73
    $region72: #{tpu_custom_call.1} parent=1 // pred_region
      %130 = dma.done [#allocation8], 12288
    $region73: #{tpu_custom_call.1} parent=1 // pred_fallthru
      _
    // Predicated region
    $region74: #{tpu_custom_call.1} parent=1 // pred_check
      _
    $region75: #{tpu_custom_call.1} parent=1 // pred_check_branch
      %132 = sbr.rel (0) target = $region77
    $region76: #{tpu_custom_call.1} parent=1 // pred_region
      %133 = dma.done [#allocation8], 6144
    $region77: #{tpu_custom_call.1} parent=1 // pred_fallthru
      _
    // Predicated region
    $region78: #{tpu_custom_call.1} parent=1 // pred_check
      _
    $region79: #{tpu_custom_call.1} parent=1 // pred_check_branch
      %135 = sbr.rel (0) target = $region81
    $region80: #{tpu_custom_call.1} parent=1 // pred_region
      %136 = dma.done [#allocation11], 2048
    $region81: #{tpu_custom_call.1} parent=1 // pred_fallthru
      _
    // Predicated region
    $region82: #{tpu_custom_call.1} parent=1 // pred_check
      _
    $region83: #{tpu_custom_call.1} parent=1 // pred_check_branch
      %138 = sbr.rel (0) target = $region85
    $region84: #{tpu_custom_call.1} parent=1 // pred_region
      %139 = dma.done [#allocation11], 1024
    $region85: #{tpu_custom_call.1} parent=1 // pred_fallthru
      _
    %v141 = vld [vmem:[#allocation2] sm:$0xff]
    %v142 = vld [vmem:[#allocation2 + $0x8] sm:$0xff]
    %v143 = vld [vmem:[#allocation2 + $0x10] sm:$0xff]
    %v144 = vld [vmem:[#allocation2 + $0x18] sm:$0xff]
    %v145 = vmul.f32 %v141, %v141
    %v146 = vmul.f32 %v142, %v142
    %v147 = vmul.f32 %v143, %v143
    %v148 = vmul.f32 %v144, %v144
    %v149 = vadd.f32 %v145, %v146
    %v150 = vadd.f32 %v149, %v147
    %v151 = vadd.f32 %v150, %v148
    %152 = vadd.xlane.f32.xlu0 %v151
    %v153 = vpop.xlane.xlu0 %152
    %v154 = vrcp.pop 512.0
    %v155 = vmul.f32 %v153, %v154
    %v156 = vadd.f32 %v155, 1e-08
    %v157 = vrsqrt.pop %v156
    %v158 = vmul.f32 %v141, %v157
    %v159 = vmul.f32 %v142, %v157
    %v160 = vmul.f32 %v143, %v157
    %v161 = vmul.f32 %v144, %v157
    %v162 = vpack.c.bf16 %v158, %v158
    %v163 = vpack.c.bf16 %v159, %v159
    %v164 = vpack.c.bf16 %v160, %v160
    %v165 = vpack.c.bf16 %v161, %v161
    %v166 = vld [vmem:[#allocation4] sm:$0xff]
    %v167 = vld [vmem:[#allocation4 + $0x8] sm:$0xff]
    %v168 = vld [vmem:[#allocation4 + $0x10] sm:$0xff]
    %v169 = vld [vmem:[#allocation4 + $0x18] sm:$0xff]
    %v170 = vld [vmem:[#allocation4 + $0x20] sm:$0xff]
    %v171 = vld [vmem:[#allocation4 + $0x28] sm:$0xff]
    %v172 = vld [vmem:[#allocation4 + $0x30] sm:$0xff]
    %v173 = vld [vmem:[#allocation4 + $0x38] sm:$0xff]
    %v174 = vld [vmem:[#allocation4 + $0x40] sm:$0xff]
    %v175 = vld [vmem:[#allocation4 + $0x48] sm:$0xff]
    %v176 = vld [vmem:[#allocation4 + $0x50] sm:$0xff]
    %v177 = vld [vmem:[#allocation4 + $0x58] sm:$0xff]
    %v178 = vld [vmem:[#allocation4 + $0x60] sm:$0xff]
    %v179 = vld [vmem:[#allocation4 + $0x68] sm:$0xff]
    %v180 = vld [vmem:[#allocation4 + $0x70] sm:$0xff]
    %v181 = vld [vmem:[#allocation4 + $0x78] sm:$0xff]
    %v182 = vld [vmem:[#allocation4 + $0x80] sm:$0xff]
    %v183 = vld [vmem:[#allocation4 + $0x88] sm:$0xff]
    %v184 = vld [vmem:[#allocation4 + $0x90] sm:$0xff]
    %v185 = vld [vmem:[#allocation4 + $0x98] sm:$0xff]
    %v186 = vld [vmem:[#allocation4 + $0xa0] sm:$0xff]
    %v187 = vld [vmem:[#allocation4 + $0xa8] sm:$0xff]
    %v188 = vld [vmem:[#allocation4 + $0xb0] sm:$0xff]
    %v189 = vld [vmem:[#allocation4 + $0xb8] sm:$0xff]
    %v190 = vld [vmem:[#allocation4 + $0xc0] sm:$0xff]
    %v191 = vld [vmem:[#allocation4 + $0xc8] sm:$0xff]
    %v192 = vld [vmem:[#allocation4 + $0xd0] sm:$0xff]
    %v193 = vld [vmem:[#allocation4 + $0xd8] sm:$0xff]
    %v194 = vld [vmem:[#allocation4 + $0xe0] sm:$0xff]
    %v195 = vld [vmem:[#allocation4 + $0xe8] sm:$0xff]
    %v196 = vld [vmem:[#allocation4 + $0xf0] sm:$0xff]
    %v197 = vld [vmem:[#allocation4 + $0xf8] sm:$0xff]
    %v198 = vld [vmem:[#allocation4 + $0x100] sm:$0xff]
    %v199 = vld [vmem:[#allocation4 + $0x108] sm:$0xff]
    %v200 = vld [vmem:[#allocation4 + $0x110] sm:$0xff]
    %v201 = vld [vmem:[#allocation4 + $0x118] sm:$0xff]
    %v202 = vld [vmem:[#allocation4 + $0x120] sm:$0xff]
    %v203 = vld [vmem:[#allocation4 + $0x128] sm:$0xff]
    %v204 = vld [vmem:[#allocation4 + $0x130] sm:$0xff]
    %v205 = vld [vmem:[#allocation4 + $0x138] sm:$0xff]
    %v206 = vld [vmem:[#allocation4 + $0x140] sm:$0xff]
    %v207 = vld [vmem:[#allocation4 + $0x148] sm:$0xff]
    %v208 = vld [vmem:[#allocation4 + $0x150] sm:$0xff]
    %v209 = vld [vmem:[#allocation4 + $0x158] sm:$0xff]
    %v210 = vld [vmem:[#allocation4 + $0x160] sm:$0xff]
    %v211 = vld [vmem:[#allocation4 + $0x168] sm:$0xff]
    %v212 = vld [vmem:[#allocation4 + $0x170] sm:$0xff]
    %v213 = vld [vmem:[#allocation4 + $0x178] sm:$0xff]
    %v214 = vld [vmem:[#allocation4 + $0x180] sm:$0xff]
    %v215 = vld [vmem:[#allocation4 + $0x188] sm:$0xff]
    %v216 = vld [vmem:[#allocation4 + $0x190] sm:$0xff]
    %v217 = vld [vmem:[#allocation4 + $0x198] sm:$0xff]
    %v218 = vld [vmem:[#allocation4 + $0x1a0] sm:$0xff]
    %v219 = vld [vmem:[#allocation4 + $0x1a8] sm:$0xff]
    %v220 = vld [vmem:[#allocation4 + $0x1b0] sm:$0xff]
    %v221 = vld [vmem:[#allocation4 + $0x1b8] sm:$0xff]
    %v222 = vld [vmem:[#allocation4 + $0x1c0] sm:$0xff]
    %v223 = vld [vmem:[#allocation4 + $0x1c8] sm:$0xff]
    %v224 = vld [vmem:[#allocation4 + $0x1d0] sm:$0xff]
    %v225 = vld [vmem:[#allocation4 + $0x1d8] sm:$0xff]
    %v226 = vld [vmem:[#allocation4 + $0x1e0] sm:$0xff]
    %v227 = vld [vmem:[#allocation4 + $0x1e8] sm:$0xff]
    %v228 = vld [vmem:[#allocation4 + $0x1f0] sm:$0xff]
    %v229 = vld [vmem:[#allocation4 + $0x1f8] sm:$0xff]
    %v230 = vld [vmem:[#allocation4 + $0x200] sm:$0xff]
    %v231 = vld [vmem:[#allocation4 + $0x208] sm:$0xff]
    %v232 = vld [vmem:[#allocation4 + $0x210] sm:$0xff]
    %v233 = vld [vmem:[#allocation4 + $0x218] sm:$0xff]
    %v234 = vld [vmem:[#allocation4 + $0x220] sm:$0xff]
    %v235 = vld [vmem:[#allocation4 + $0x228] sm:$0xff]
    %v236 = vld [vmem:[#allocation4 + $0x230] sm:$0xff]
    %v237 = vld [vmem:[#allocation4 + $0x238] sm:$0xff]
    %v238 = vld [vmem:[#allocation4 + $0x240] sm:$0xff]
    %v239 = vld [vmem:[#allocation4 + $0x248] sm:$0xff]
    %v240 = vld [vmem:[#allocation4 + $0x250] sm:$0xff]
    %v241 = vld [vmem:[#allocation4 + $0x258] sm:$0xff]
    %v242 = vld [vmem:[#allocation4 + $0x260] sm:$0xff]
    %v243 = vld [vmem:[#allocation4 + $0x268] sm:$0xff]
    %v244 = vld [vmem:[#allocation4 + $0x270] sm:$0xff]
    %v245 = vld [vmem:[#allocation4 + $0x278] sm:$0xff]
    %v246 = vld [vmem:[#allocation4 + $0x280] sm:$0xff]
    %v247 = vld [vmem:[#allocation4 + $0x288] sm:$0xff]
    %v248 = vld [vmem:[#allocation4 + $0x290] sm:$0xff]
    %v249 = vld [vmem:[#allocation4 + $0x298] sm:$0xff]
    %v250 = vld [vmem:[#allocation4 + $0x2a0] sm:$0xff]
    %v251 = vld [vmem:[#allocation4 + $0x2a8] sm:$0xff]
    %v252 = vld [vmem:[#allocation4 + $0x2b0] sm:$0xff]
    %v253 = vld [vmem:[#allocation4 + $0x2b8] sm:$0xff]
    %v254 = vld [vmem:[#allocation4 + $0x2c0] sm:$0xff]
    %v255 = vld [vmem:[#allocation4 + $0x2c8] sm:$0xff]
    %v256 = vld [vmem:[#allocation4 + $0x2d0] sm:$0xff]
    %v257 = vld [vmem:[#allocation4 + $0x2d8] sm:$0xff]
    %v258 = vld [vmem:[#allocation4 + $0x2e0] sm:$0xff]
    %v259 = vld [vmem:[#allocation4 + $0x2e8] sm:$0xff]
    %v260 = vld [vmem:[#allocation4 + $0x2f0] sm:$0xff]
    %v261 = vld [vmem:[#allocation4 + $0x2f8] sm:$0xff]
    %v262 = vld [vmem:[#allocation4 + $0x300] sm:$0xff]
    %v263 = vld [vmem:[#allocation4 + $0x308] sm:$0xff]
    %v264 = vld [vmem:[#allocation4 + $0x310] sm:$0xff]
    %v265 = vld [vmem:[#allocation4 + $0x318] sm:$0xff]
    %v266 = vld [vmem:[#allocation4 + $0x320] sm:$0xff]
    %v267 = vld [vmem:[#allocation4 + $0x328] sm:$0xff]
    %v268 = vld [vmem:[#allocation4 + $0x330] sm:$0xff]
    %v269 = vld [vmem:[#allocation4 + $0x338] sm:$0xff]
    %v270 = vld [vmem:[#allocation4 + $0x340] sm:$0xff]
    %v271 = vld [vmem:[#allocation4 + $0x348] sm:$0xff]
    %v272 = vld [vmem:[#allocation4 + $0x350] sm:$0xff]
    %v273 = vld [vmem:[#allocation4 + $0x358] sm:$0xff]
    %v274 = vld [vmem:[#allocation4 + $0x360] sm:$0xff]
    %v275 = vld [vmem:[#allocation4 + $0x368] sm:$0xff]
    %v276 = vld [vmem:[#allocation4 + $0x370] sm:$0xff]
    %v277 = vld [vmem:[#allocation4 + $0x378] sm:$0xff]
    %v278 = vld [vmem:[#allocation4 + $0x380] sm:$0xff]
    %v279 = vld [vmem:[#allocation4 + $0x388] sm:$0xff]
    %v280 = vld [vmem:[#allocation4 + $0x390] sm:$0xff]
    %v281 = vld [vmem:[#allocation4 + $0x398] sm:$0xff]
    %v282 = vld [vmem:[#allocation4 + $0x3a0] sm:$0xff]
    %v283 = vld [vmem:[#allocation4 + $0x3a8] sm:$0xff]
    %v284 = vld [vmem:[#allocation4 + $0x3b0] sm:$0xff]
    %v285 = vld [vmem:[#allocation4 + $0x3b8] sm:$0xff]
    %v286 = vld [vmem:[#allocation4 + $0x3c0] sm:$0xff]
    %v287 = vld [vmem:[#allocation4 + $0x3c8] sm:$0xff]
    %v288 = vld [vmem:[#allocation4 + $0x3d0] sm:$0xff]
    %v289 = vld [vmem:[#allocation4 + $0x3d8] sm:$0xff]
    %v290 = vld [vmem:[#allocation4 + $0x3e0] sm:$0xff]
    %v291 = vld [vmem:[#allocation4 + $0x3e8] sm:$0xff]
    %v292 = vld [vmem:[#allocation4 + $0x3f0] sm:$0xff]
    %v293 = vld [vmem:[#allocation4 + $0x3f8] sm:$0xff]
    %v294 = vld [vmem:[%s3] sm:$0xf]
    %v296 = vlaneseq
    %v297 = vshrl.u32 %v296, 7
    %v298 = vsub.s32 0, %v297
    %v299 = vrot.slane %v294, %v298
    %v300 = vlaneseq
    %v301 = vshrl.u32 %v300, 7
    %v302 = vsub.s32 1, %v301
    %v303 = vrot.slane %v294, %v302
    %v304 = vlaneseq
    %v305 = vshrl.u32 %v304, 7
    %v306 = vsub.s32 2, %v305
    %v307 = vrot.slane %v294, %v306
    %v308 = vlaneseq
    %v309 = vshrl.u32 %v308, 7
    %v310 = vsub.s32 3, %v309
    %v311 = vrot.slane %v294, %v310
    %v444 = vunpack.c.l.b16 %v166
    %v445 = vunpack.c.h.b16 %v166
    %v446 = vunpack.c.l.b16 %v167
    %v447 = vunpack.c.h.b16 %v167
    %v448 = vunpack.c.l.b16 %v168
    %v449 = vunpack.c.h.b16 %v168
    %v450 = vunpack.c.l.b16 %v169
    %v451 = vunpack.c.h.b16 %v169
    %v452 = vunpack.c.l.b16 %v170
    %v453 = vunpack.c.h.b16 %v170
    %v454 = vunpack.c.l.b16 %v171
    %v455 = vunpack.c.h.b16 %v171
    %v456 = vunpack.c.l.b16 %v172
    %v457 = vunpack.c.h.b16 %v172
    %v458 = vunpack.c.l.b16 %v173
    %v459 = vunpack.c.h.b16 %v173
    %v460 = vunpack.c.l.b16 %v174
    %v461 = vunpack.c.h.b16 %v174
    %v462 = vunpack.c.l.b16 %v175
    %v463 = vunpack.c.h.b16 %v175
    %v464 = vunpack.c.l.b16 %v176
    %v465 = vunpack.c.h.b16 %v176
    %v466 = vunpack.c.l.b16 %v177
    %v467 = vunpack.c.h.b16 %v177
    %v468 = vunpack.c.l.b16 %v178
    %v469 = vunpack.c.h.b16 %v178
    %v470 = vunpack.c.l.b16 %v179
    %v471 = vunpack.c.h.b16 %v179
    %v472 = vunpack.c.l.b16 %v180
    %v473 = vunpack.c.h.b16 %v180
    %v474 = vunpack.c.l.b16 %v181
    %v475 = vunpack.c.h.b16 %v181
    %v476 = vunpack.c.l.b16 %v182
    %v477 = vunpack.c.h.b16 %v182
    %v478 = vunpack.c.l.b16 %v183
    %v479 = vunpack.c.h.b16 %v183
    %v480 = vunpack.c.l.b16 %v184
    %v481 = vunpack.c.h.b16 %v184
    %v482 = vunpack.c.l.b16 %v185
    %v483 = vunpack.c.h.b16 %v185
    %v484 = vunpack.c.l.b16 %v186
    %v485 = vunpack.c.h.b16 %v186
    %v486 = vunpack.c.l.b16 %v187
    %v487 = vunpack.c.h.b16 %v187
    %v488 = vunpack.c.l.b16 %v188
    %v489 = vunpack.c.h.b16 %v188
    %v490 = vunpack.c.l.b16 %v189
    %v491 = vunpack.c.h.b16 %v189
    %v492 = vunpack.c.l.b16 %v190
    %v493 = vunpack.c.h.b16 %v190
    %v494 = vunpack.c.l.b16 %v191
    %v495 = vunpack.c.h.b16 %v191
    %v496 = vunpack.c.l.b16 %v192
    %v497 = vunpack.c.h.b16 %v192
    %v498 = vunpack.c.l.b16 %v193
    %v499 = vunpack.c.h.b16 %v193
    %v500 = vunpack.c.l.b16 %v194
    %v501 = vunpack.c.h.b16 %v194
    %v502 = vunpack.c.l.b16 %v195
    %v503 = vunpack.c.h.b16 %v195
    %v504 = vunpack.c.l.b16 %v196
    %v505 = vunpack.c.h.b16 %v196
    %v506 = vunpack.c.l.b16 %v197
    %v507 = vunpack.c.h.b16 %v197
    %v508 = vunpack.c.l.b16 %v198
    %v509 = vunpack.c.h.b16 %v198
    %v510 = vunpack.c.l.b16 %v199
    %v511 = vunpack.c.h.b16 %v199
    %v512 = vunpack.c.l.b16 %v200
    %v513 = vunpack.c.h.b16 %v200
    %v514 = vunpack.c.l.b16 %v201
    %v515 = vunpack.c.h.b16 %v201
    %v516 = vunpack.c.l.b16 %v202
    %v517 = vunpack.c.h.b16 %v202
    %v518 = vunpack.c.l.b16 %v203
    %v519 = vunpack.c.h.b16 %v203
    %v520 = vunpack.c.l.b16 %v204
    %v521 = vunpack.c.h.b16 %v204
    %v522 = vunpack.c.l.b16 %v205
    %v523 = vunpack.c.h.b16 %v205
    %v524 = vunpack.c.l.b16 %v206
    %v525 = vunpack.c.h.b16 %v206
    %v526 = vunpack.c.l.b16 %v207
    %v527 = vunpack.c.h.b16 %v207
    %v528 = vunpack.c.l.b16 %v208
    %v529 = vunpack.c.h.b16 %v208
    %v530 = vunpack.c.l.b16 %v209
    %v531 = vunpack.c.h.b16 %v209
    %v532 = vunpack.c.l.b16 %v210
    %v533 = vunpack.c.h.b16 %v210
    %v534 = vunpack.c.l.b16 %v211
    %v535 = vunpack.c.h.b16 %v211
    %v536 = vunpack.c.l.b16 %v212
    %v537 = vunpack.c.h.b16 %v212
    %v538 = vunpack.c.l.b16 %v213
    %v539 = vunpack.c.h.b16 %v213
    %v540 = vunpack.c.l.b16 %v214
    %v541 = vunpack.c.h.b16 %v214
    %v542 = vunpack.c.l.b16 %v215
    %v543 = vunpack.c.h.b16 %v215
    %v544 = vunpack.c.l.b16 %v216
    %v545 = vunpack.c.h.b16 %v216
    %v546 = vunpack.c.l.b16 %v217
    %v547 = vunpack.c.h.b16 %v217
    %v548 = vunpack.c.l.b16 %v218
    %v549 = vunpack.c.h.b16 %v218
    %v550 = vunpack.c.l.b16 %v219
    %v551 = vunpack.c.h.b16 %v219
    %v552 = vunpack.c.l.b16 %v220
    %v553 = vunpack.c.h.b16 %v220
    %v554 = vunpack.c.l.b16 %v221
    %v555 = vunpack.c.h.b16 %v221
    %v556 = vunpack.c.l.b16 %v222
    %v557 = vunpack.c.h.b16 %v222
    %v558 = vunpack.c.l.b16 %v223
    %v559 = vunpack.c.h.b16 %v223
    %v560 = vunpack.c.l.b16 %v224
    %v561 = vunpack.c.h.b16 %v224
    %v562 = vunpack.c.l.b16 %v225
    %v563 = vunpack.c.h.b16 %v225
    %v564 = vunpack.c.l.b16 %v226
    %v565 = vunpack.c.h.b16 %v226
    %v566 = vunpack.c.l.b16 %v227
    %v567 = vunpack.c.h.b16 %v227
    %v568 = vunpack.c.l.b16 %v228
    %v569 = vunpack.c.h.b16 %v228
    %v570 = vunpack.c.l.b16 %v229
    %v571 = vunpack.c.h.b16 %v229
    %v572 = vunpack.c.l.b16 %v230
    %v573 = vunpack.c.h.b16 %v230
    %v574 = vunpack.c.l.b16 %v231
    %v575 = vunpack.c.h.b16 %v231
    %v576 = vunpack.c.l.b16 %v232
    %v577 = vunpack.c.h.b16 %v232
    %v578 = vunpack.c.l.b16 %v233
    %v579 = vunpack.c.h.b16 %v233
    %v580 = vunpack.c.l.b16 %v234
    %v581 = vunpack.c.h.b16 %v234
    %v582 = vunpack.c.l.b16 %v235
    %v583 = vunpack.c.h.b16 %v235
    %v584 = vunpack.c.l.b16 %v236
    %v585 = vunpack.c.h.b16 %v236
    %v586 = vunpack.c.l.b16 %v237
    %v587 = vunpack.c.h.b16 %v237
    %v588 = vunpack.c.l.b16 %v238
    %v589 = vunpack.c.h.b16 %v238
    %v590 = vunpack.c.l.b16 %v239
    %v591 = vunpack.c.h.b16 %v239
    %v592 = vunpack.c.l.b16 %v240
    %v593 = vunpack.c.h.b16 %v240
    %v594 = vunpack.c.l.b16 %v241
    %v595 = vunpack.c.h.b16 %v241
    %v596 = vunpack.c.l.b16 %v242
    %v597 = vunpack.c.h.b16 %v242
    %v598 = vunpack.c.l.b16 %v243
    %v599 = vunpack.c.h.b16 %v243
    %v600 = vunpack.c.l.b16 %v244
    %v601 = vunpack.c.h.b16 %v244
    %v602 = vunpack.c.l.b16 %v245
    %v603 = vunpack.c.h.b16 %v245
    %v604 = vunpack.c.l.b16 %v246
    %v605 = vunpack.c.h.b16 %v246
    %v606 = vunpack.c.l.b16 %v247
    %v607 = vunpack.c.h.b16 %v247
    %v608 = vunpack.c.l.b16 %v248
    %v609 = vunpack.c.h.b16 %v248
    %v610 = vunpack.c.l.b16 %v249
    %v611 = vunpack.c.h.b16 %v249
    %v612 = vunpack.c.l.b16 %v250
    %v613 = vunpack.c.h.b16 %v250
    %v614 = vunpack.c.l.b16 %v251
    %v615 = vunpack.c.h.b16 %v251
    %v616 = vunpack.c.l.b16 %v252
    %v617 = vunpack.c.h.b16 %v252
    %v618 = vunpack.c.l.b16 %v253
    %v619 = vunpack.c.h.b16 %v253
    %v620 = vunpack.c.l.b16 %v254
    %v621 = vunpack.c.h.b16 %v254
    %v622 = vunpack.c.l.b16 %v255
    %v623 = vunpack.c.h.b16 %v255
    %v624 = vunpack.c.l.b16 %v256
    %v625 = vunpack.c.h.b16 %v256
    %v626 = vunpack.c.l.b16 %v257
    %v627 = vunpack.c.h.b16 %v257
    %v628 = vunpack.c.l.b16 %v258
    %v629 = vunpack.c.h.b16 %v258
    %v630 = vunpack.c.l.b16 %v259
    %v631 = vunpack.c.h.b16 %v259
    %v632 = vunpack.c.l.b16 %v260
    %v633 = vunpack.c.h.b16 %v260
    %v634 = vunpack.c.l.b16 %v261
    %v635 = vunpack.c.h.b16 %v261
    %v636 = vunpack.c.l.b16 %v262
    %v637 = vunpack.c.h.b16 %v262
    %v638 = vunpack.c.l.b16 %v263
    %v639 = vunpack.c.h.b16 %v263
    %v640 = vunpack.c.l.b16 %v264
    %v641 = vunpack.c.h.b16 %v264
    %v642 = vunpack.c.l.b16 %v265
    %v643 = vunpack.c.h.b16 %v265
    %v644 = vunpack.c.l.b16 %v266
    %v645 = vunpack.c.h.b16 %v266
    %v646 = vunpack.c.l.b16 %v267
    %v647 = vunpack.c.h.b16 %v267
    %v648 = vunpack.c.l.b16 %v268
    %v649 = vunpack.c.h.b16 %v268
    %v650 = vunpack.c.l.b16 %v269
    %v651 = vunpack.c.h.b16 %v269
    %v652 = vunpack.c.l.b16 %v270
    %v653 = vunpack.c.h.b16 %v270
    %v654 = vunpack.c.l.b16 %v271
    %v655 = vunpack.c.h.b16 %v271
    %v656 = vunpack.c.l.b16 %v272
    %v657 = vunpack.c.h.b16 %v272
    %v658 = vunpack.c.l.b16 %v273
    %v659 = vunpack.c.h.b16 %v273
    %v660 = vunpack.c.l.b16 %v274
    %v661 = vunpack.c.h.b16 %v274
    %v662 = vunpack.c.l.b16 %v275
    %v663 = vunpack.c.h.b16 %v275
    %v664 = vunpack.c.l.b16 %v276
    %v665 = vunpack.c.h.b16 %v276
    %v666 = vunpack.c.l.b16 %v277
    %v667 = vunpack.c.h.b16 %v277
    %v668 = vunpack.c.l.b16 %v278
    %v669 = vunpack.c.h.b16 %v278
    %v670 = vunpack.c.l.b16 %v279
    %v671 = vunpack.c.h.b16 %v279
    %v672 = vunpack.c.l.b16 %v280
    %v673 = vunpack.c.h.b16 %v280
    %v674 = vunpack.c.l.b16 %v281
    %v675 = vunpack.c.h.b16 %v281
    %v676 = vunpack.c.l.b16 %v282
    %v677 = vunpack.c.h.b16 %v282
    %v678 = vunpack.c.l.b16 %v283
    %v679 = vunpack.c.h.b16 %v283
    %v680 = vunpack.c.l.b16 %v284
    %v681 = vunpack.c.h.b16 %v284
    %v682 = vunpack.c.l.b16 %v285
    %v683 = vunpack.c.h.b16 %v285
    %v684 = vunpack.c.l.b16 %v286
    %v685 = vunpack.c.h.b16 %v286
    %v686 = vunpack.c.l.b16 %v287
    %v687 = vunpack.c.h.b16 %v287
    %v688 = vunpack.c.l.b16 %v288
    %v689 = vunpack.c.h.b16 %v288
    %v690 = vunpack.c.l.b16 %v289
    %v691 = vunpack.c.h.b16 %v289
    %v692 = vunpack.c.l.b16 %v290
    %v693 = vunpack.c.h.b16 %v290
    %v694 = vunpack.c.l.b16 %v291
    %v695 = vunpack.c.h.b16 %v291
    %v696 = vunpack.c.l.b16 %v292
    %v697 = vunpack.c.h.b16 %v292
    %v698 = vunpack.c.l.b16 %v293
    %v699 = vunpack.c.h.b16 %v293
    %v700 = vpack.c.b16 %v448, %v444
    %v701 = vpack.c.b16 %v449, %v445
    %v702 = vpack.c.b16 %v450, %v446
    %v703 = vpack.c.b16 %v451, %v447
    %v704 = vpack.c.b16 %v456, %v452
    %v705 = vpack.c.b16 %v457, %v453
    %v706 = vpack.c.b16 %v458, %v454
    %v707 = vpack.c.b16 %v459, %v455
    %v708 = vpack.c.b16 %v464, %v460
    %v709 = vpack.c.b16 %v465, %v461
    %v710 = vpack.c.b16 %v466, %v462
    %v711 = vpack.c.b16 %v467, %v463
    %v712 = vpack.c.b16 %v472, %v468
    %v713 = vpack.c.b16 %v473, %v469
    %v714 = vpack.c.b16 %v474, %v470
    %v715 = vpack.c.b16 %v475, %v471
    %v716 = vpack.c.b16 %v480, %v476
    %v717 = vpack.c.b16 %v481, %v477
    %v718 = vpack.c.b16 %v482, %v478
    %v719 = vpack.c.b16 %v483, %v479
    %v720 = vpack.c.b16 %v488, %v484
    %v721 = vpack.c.b16 %v489, %v485
    %v722 = vpack.c.b16 %v490, %v486
    %v723 = vpack.c.b16 %v491, %v487
    %v724 = vpack.c.b16 %v496, %v492
    %v725 = vpack.c.b16 %v497, %v493
    %v726 = vpack.c.b16 %v498, %v494
    %v727 = vpack.c.b16 %v499, %v495
    %v728 = vpack.c.b16 %v504, %v500
    %v729 = vpack.c.b16 %v505, %v501
    %v730 = vpack.c.b16 %v506, %v502
    %v731 = vpack.c.b16 %v507, %v503
    %v732 = vpack.c.b16 %v512, %v508
    %v733 = vpack.c.b16 %v513, %v509
    %v734 = vpack.c.b16 %v514, %v510
    %v735 = vpack.c.b16 %v515, %v511
    %v736 = vpack.c.b16 %v520, %v516
    %v737 = vpack.c.b16 %v521, %v517
    %v738 = vpack.c.b16 %v522, %v518
    %v739 = vpack.c.b16 %v523, %v519
    %v740 = vpack.c.b16 %v528, %v524
    %v741 = vpack.c.b16 %v529, %v525
    %v742 = vpack.c.b16 %v530, %v526
    %v743 = vpack.c.b16 %v531, %v527
    %v744 = vpack.c.b16 %v536, %v532
    %v745 = vpack.c.b16 %v537, %v533
    %v746 = vpack.c.b16 %v538, %v534
    %v747 = vpack.c.b16 %v539, %v535
    %v748 = vpack.c.b16 %v544, %v540
    %v749 = vpack.c.b16 %v545, %v541
    %v750 = vpack.c.b16 %v546, %v542
    %v751 = vpack.c.b16 %v547, %v543
    %v752 = vpack.c.b16 %v552, %v548
    %v753 = vpack.c.b16 %v553, %v549
    %v754 = vpack.c.b16 %v554, %v550
    %v755 = vpack.c.b16 %v555, %v551
    %v756 = vpack.c.b16 %v560, %v556
    %v757 = vpack.c.b16 %v561, %v557
    %v758 = vpack.c.b16 %v562, %v558
    %v759 = vpack.c.b16 %v563, %v559
    %v760 = vpack.c.b16 %v568, %v564
    %v761 = vpack.c.b16 %v569, %v565
    %v762 = vpack.c.b16 %v570, %v566
    %v763 = vpack.c.b16 %v571, %v567
    %v764 = vpack.c.b16 %v576, %v572
    %v765 = vpack.c.b16 %v577, %v573
    %v766 = vpack.c.b16 %v578, %v574
    %v767 = vpack.c.b16 %v579, %v575
    %v768 = vpack.c.b16 %v584, %v580
    %v769 = vpack.c.b16 %v585, %v581
    %v770 = vpack.c.b16 %v586, %v582
    %v771 = vpack.c.b16 %v587, %v583
    %v772 = vpack.c.b16 %v592, %v588
    %v773 = vpack.c.b16 %v593, %v589
    %v774 = vpack.c.b16 %v594, %v590
    %v775 = vpack.c.b16 %v595, %v591
    %v776 = vpack.c.b16 %v600, %v596
    %v777 = vpack.c.b16 %v601, %v597
    %v778 = vpack.c.b16 %v602, %v598
    %v779 = vpack.c.b16 %v603, %v599
    %v780 = vpack.c.b16 %v608, %v604
    %v781 = vpack.c.b16 %v609, %v605
    %v782 = vpack.c.b16 %v610, %v606
    %v783 = vpack.c.b16 %v611, %v607
    %v784 = vpack.c.b16 %v616, %v612
    %v785 = vpack.c.b16 %v617, %v613
    %v786 = vpack.c.b16 %v618, %v614
    %v787 = vpack.c.b16 %v619, %v615
    %v788 = vpack.c.b16 %v624, %v620
    %v789 = vpack.c.b16 %v625, %v621
    %v790 = vpack.c.b16 %v626, %v622
    %v791 = vpack.c.b16 %v627, %v623
    %v792 = vpack.c.b16 %v632, %v628
    %v793 = vpack.c.b16 %v633, %v629
    %v794 = vpack.c.b16 %v634, %v630
    %v795 = vpack.c.b16 %v635, %v631
    %v796 = vpack.c.b16 %v640, %v636
    %v797 = vpack.c.b16 %v641, %v637
    %v798 = vpack.c.b16 %v642, %v638
    %v799 = vpack.c.b16 %v643, %v639
    %v800 = vpack.c.b16 %v648, %v644
    %v801 = vpack.c.b16 %v649, %v645
    %v802 = vpack.c.b16 %v650, %v646
    %v803 = vpack.c.b16 %v651, %v647
    %v804 = vpack.c.b16 %v656, %v652
    %v805 = vpack.c.b16 %v657, %v653
    %v806 = vpack.c.b16 %v658, %v654
    %v807 = vpack.c.b16 %v659, %v655
    %v808 = vpack.c.b16 %v664, %v660
    %v809 = vpack.c.b16 %v665, %v661
    %v810 = vpack.c.b16 %v666, %v662
    %v811 = vpack.c.b16 %v667, %v663
    %v812 = vpack.c.b16 %v672, %v668
    %v813 = vpack.c.b16 %v673, %v669
    %v814 = vpack.c.b16 %v674, %v670
    %v815 = vpack.c.b16 %v675, %v671
    %v816 = vpack.c.b16 %v680, %v676
    %v817 = vpack.c.b16 %v681, %v677
    %v818 = vpack.c.b16 %v682, %v678
    %v819 = vpack.c.b16 %v683, %v679
    %v820 = vpack.c.b16 %v688, %v684
    %v821 = vpack.c.b16 %v689, %v685
    %v822 = vpack.c.b16 %v690, %v686
    %v823 = vpack.c.b16 %v691, %v687
    %v824 = vpack.c.b16 %v696, %v692
    %v825 = vpack.c.b16 %v697, %v693
    %v826 = vpack.c.b16 %v698, %v694
    %v827 = vpack.c.b16 %v699, %v695
    %956 = vmatprep.subr.bf16.mxu0 %v701
    %957 = vmatpush1.bf16.msra.mxu0 %v700
    %958 = vmatprep.subr.bf16.mxu0 %v705
    %959 = vmatpush1.bf16.msra.mxu0 %v704
    %960 = vmatprep.subr.bf16.mxu0 %v709
    %961 = vmatpush1.bf16.msra.mxu0 %v708
    %962 = vmatprep.subr.bf16.mxu0 %v713
    %963 = vmatpush1.bf16.msra.mxu0 %v712
    %964 = vmatprep.subr.bf16.mxu0 %v717
    %965 = vmatpush1.bf16.msra.mxu0 %v716
    %966 = vmatprep.subr.bf16.mxu0 %v721
    %967 = vmatpush1.bf16.msra.mxu0 %v720
    %968 = vmatprep.subr.bf16.mxu0 %v725
    %969 = vmatpush1.bf16.msra.mxu0 %v724
    %970 = vmatprep.subr.bf16.mxu0 %v729
    %971 = vmatpush1.bf16.msra.mxu0 %v728
    %972 = vmatprep.subr.bf16.mxu0 %v733
    %973 = vmatpush1.bf16.msra.mxu0 %v732
    %974 = vmatprep.subr.bf16.mxu0 %v737
    %975 = vmatpush1.bf16.msra.mxu0 %v736
    %976 = vmatprep.subr.bf16.mxu0 %v741
    %977 = vmatpush1.bf16.msra.mxu0 %v740
    %978 = vmatprep.subr.bf16.mxu0 %v745
    %979 = vmatpush1.bf16.msra.mxu0 %v744
    %980 = vmatprep.subr.bf16.mxu0 %v749
    %981 = vmatpush1.bf16.msra.mxu0 %v748
    %982 = vmatprep.subr.bf16.mxu0 %v753
    %983 = vmatpush1.bf16.msra.mxu0 %v752
    %984 = vmatprep.subr.bf16.mxu0 %v757
    %985 = vmatpush1.bf16.msra.mxu0 %v756
    %986 = vmatprep.subr.bf16.mxu0 %v761
    %987 = vmatpush1.bf16.msra.mxu0 %v760
    %988 = vmatprep.mubr.bf16.mxu0 %v163
    %989 = vmatmul.mubr.bf16.gmra.mrb[0].mxu0 %v162
    %v990 = vpop.f32.mrb[0].mxu0
    %v991 = vadd.f32 %v299, %v990
    %v992 = vpop.f32.mrb[0].mxu0
    %v993 = vadd.f32 %v303, %v992
    %v994 = vpop.f32.mrb[0].mxu0
    %v995 = vpop.f32.mrb[0].mxu0
    %996 = vdwg.mxu0
    %997 = vmatprep.subr.bf16.mxu0 %v765
    %998 = vmatpush1.bf16.msra.mxu0 %v764
    %999 = vmatprep.subr.bf16.mxu0 %v769
    %1000 = vmatpush1.bf16.msra.mxu0 %v768
    %1001 = vmatprep.subr.bf16.mxu0 %v773
    %1002 = vmatpush1.bf16.msra.mxu0 %v772
    %1003 = vmatprep.subr.bf16.mxu0 %v777
    %1004 = vmatpush1.bf16.msra.mxu0 %v776
    %1005 = vmatprep.subr.bf16.mxu0 %v781
    %1006 = vmatpush1.bf16.msra.mxu0 %v780
    %1007 = vmatprep.subr.bf16.mxu0 %v785
    %1008 = vmatpush1.bf16.msra.mxu0 %v784
    %1009 = vmatprep.subr.bf16.mxu0 %v789
    %1010 = vmatpush1.bf16.msra.mxu0 %v788
    %1011 = vmatprep.subr.bf16.mxu0 %v793
    %1012 = vmatpush1.bf16.msra.mxu0 %v792
    %1013 = vmatprep.subr.bf16.mxu0 %v797
    %1014 = vmatpush1.bf16.msra.mxu0 %v796
    %1015 = vmatprep.subr.bf16.mxu0 %v801
    %1016 = vmatpush1.bf16.msra.mxu0 %v800
    %1017 = vmatprep.subr.bf16.mxu0 %v805
    %1018 = vmatpush1.bf16.msra.mxu0 %v804
    %1019 = vmatprep.subr.bf16.mxu0 %v809
    %1020 = vmatpush1.bf16.msra.mxu0 %v808
    %1021 = vmatprep.subr.bf16.mxu0 %v813
    %1022 = vmatpush1.bf16.msra.mxu0 %v812
    %1023 = vmatprep.subr.bf16.mxu0 %v817
    %1024 = vmatpush1.bf16.msra.mxu0 %v816
    %1025 = vmatprep.subr.bf16.mxu0 %v821
    %1026 = vmatpush1.bf16.msra.mxu0 %v820
    %1027 = vmatprep.subr.bf16.mxu0 %v825
    %1028 = vmatpush1.bf16.msra.mxu0 %v824
    %1029 = vmatprep.mubr.bf16.mxu0 %v165
    %1030 = vmatmul.mubr.bf16.gmra.mrb[0].mxu0 %v164
    %v1031 = vpop.f32.mrb[0].mxu0
    %v1032 = vadd.f32 %v991, %v1031
    %v1033 = vpop.f32.mrb[0].mxu0
    %v1034 = vadd.f32 %v993, %v1033
    %v1035 = vpop.f32.mrb[0].mxu0
    %v1036 = vpop.f32.mrb[0].mxu0
    %1037 = vdwg.mxu0
    %1038 = vmatprep.subr.bf16.mxu0 %v703
    %1039 = vmatpush1.bf16.msra.mxu0 %v702
    %1040 = vmatprep.subr.bf16.mxu0 %v707
    %1041 = vmatpush1.bf16.msra.mxu0 %v706
    %1042 = vmatprep.subr.bf16.mxu0 %v711
    %1043 = vmatpush1.bf16.msra.mxu0 %v710
    %1044 = vmatprep.subr.bf16.mxu0 %v715
    %1045 = vmatpush1.bf16.msra.mxu0 %v714
    %1046 = vmatprep.subr.bf16.mxu0 %v719
    %1047 = vmatpush1.bf16.msra.mxu0 %v718
    %1048 = vmatprep.subr.bf16.mxu0 %v723
    %1049 = vmatpush1.bf16.msra.mxu0 %v722
    %1050 = vmatprep.subr.bf16.mxu0 %v727
    %1051 = vmatpush1.bf16.msra.mxu0 %v726
    %1052 = vmatprep.subr.bf16.mxu0 %v731
    %1053 = vmatpush1.bf16.msra.mxu0 %v730
    %1054 = vmatprep.subr.bf16.mxu0 %v735
    %1055 = vmatpush1.bf16.msra.mxu0 %v734
    %1056 = vmatprep.subr.bf16.mxu0 %v739
    %1057 = vmatpush1.bf16.msra.mxu0 %v738
    %1058 = vmatprep.subr.bf16.mxu0 %v743
    %1059 = vmatpush1.bf16.msra.mxu0 %v742
    %1060 = vmatprep.subr.bf16.mxu0 %v747
    %1061 = vmatpush1.bf16.msra.mxu0 %v746
    %1062 = vmatprep.subr.bf16.mxu0 %v751
    %1063 = vmatpush1.bf16.msra.mxu0 %v750
    %1064 = vmatprep.subr.bf16.mxu0 %v755
    %1065 = vmatpush1.bf16.msra.mxu0 %v754
    %1066 = vmatprep.subr.bf16.mxu0 %v759
    %1067 = vmatpush1.bf16.msra.mxu0 %v758
    %1068 = vmatprep.subr.bf16.mxu0 %v763
    %1069 = vmatpush1.bf16.msra.mxu0 %v762
    %1070 = vmatprep.mubr.bf16.mxu0 %v163
    %1071 = vmatmul.mubr.bf16.gmra.mrb[0].mxu0 %v162
    %v1072 = vpop.f32.mrb[0].mxu0
    %v1073 = vadd.f32 %v307, %v1072
    %v1074 = vpop.f32.mrb[0].mxu0
    %v1075 = vadd.f32 %v311, %v1074
    %v1076 = vpop.f32.mrb[0].mxu0
    %v1077 = vpop.f32.mrb[0].mxu0
    %1078 = vdwg.mxu0
    %1079 = vmatprep.subr.bf16.mxu0 %v767
    %1080 = vmatpush1.bf16.msra.mxu0 %v766
    %1081 = vmatprep.subr.bf16.mxu0 %v771
    %1082 = vmatpush1.bf16.msra.mxu0 %v770
    %1083 = vmatprep.subr.bf16.mxu0 %v775
    %1084 = vmatpush1.bf16.msra.mxu0 %v774
    %1085 = vmatprep.subr.bf16.mxu0 %v779
    %1086 = vmatpush1.bf16.msra.mxu0 %v778
    %1087 = vmatprep.subr.bf16.mxu0 %v783
    %1088 = vmatpush1.bf16.msra.mxu0 %v782
    %1089 = vmatprep.subr.bf16.mxu0 %v787
    %1090 = vmatpush1.bf16.msra.mxu0 %v786
    %1091 = vmatprep.subr.bf16.mxu0 %v791
    %1092 = vmatpush1.bf16.msra.mxu0 %v790
    %1093 = vmatprep.subr.bf16.mxu0 %v795
    %1094 = vmatpush1.bf16.msra.mxu0 %v794
    %1095 = vmatprep.subr.bf16.mxu0 %v799
    %1096 = vmatpush1.bf16.msra.mxu0 %v798
    %1097 = vmatprep.subr.bf16.mxu0 %v803
    %1098 = vmatpush1.bf16.msra.mxu0 %v802
    %1099 = vmatprep.subr.bf16.mxu0 %v807
    %1100 = vmatpush1.bf16.msra.mxu0 %v806
    %1101 = vmatprep.subr.bf16.mxu0 %v811
    %1102 = vmatpush1.bf16.msra.mxu0 %v810
    %1103 = vmatprep.subr.bf16.mxu0 %v815
    %1104 = vmatpush1.bf16.msra.mxu0 %v814
    %1105 = vmatprep.subr.bf16.mxu0 %v819
    %1106 = vmatpush1.bf16.msra.mxu0 %v818
    %1107 = vmatprep.subr.bf16.mxu0 %v823
    %1108 = vmatpush1.bf16.msra.mxu0 %v822
    %1109 = vmatprep.subr.bf16.mxu0 %v827
    %1110 = vmatpush1.bf16.msra.mxu0 %v826
    %1111 = vmatprep.mubr.bf16.mxu0 %v165
    %1112 = vmatmul.mubr.bf16.gmra.mrb[0].mxu0 %v164
    %v1113 = vpop.f32.mrb[0].mxu0
    %v1114 = vadd.f32 %v1073, %v1113
    %v1115 = vpop.f32.mrb[0].mxu0
    %v1116 = vadd.f32 %v1075, %v1115
    %v1117 = vpop.f32.mrb[0].mxu0
    %v1118 = vpop.f32.mrb[0].mxu0
    %1119 = vdwg.mxu0
    %v1120 = vmul.f32 %v1032, 0.2
    %v1121 = vmul.f32 %v1034, 0.2
    %v1122 = vmul.f32 %v1114, 0.2
    %v1123 = vmul.f32 %v1116, 0.2
    %v1124 = vmax.f32 %v1032, %v1120
    %v1125 = vmax.f32 %v1034, %v1121
    %v1126 = vmax.f32 %v1114, %v1122
    %v1127 = vmax.f32 %v1116, %v1123
    %v1128 = vpack.c.bf16 %v1124, %v1124
    %v1129 = vpack.c.bf16 %v1125, %v1125
    %v1130 = vpack.c.bf16 %v1126, %v1126
    %v1131 = vpack.c.bf16 %v1127, %v1127
    %v1132 = vld [vmem:[#allocation6] sm:$0xff]
    %v1133 = vld [vmem:[#allocation6 + $0x8] sm:$0xff]
    %v1134 = vld [vmem:[#allocation6 + $0x10] sm:$0xff]
    %v1135 = vld [vmem:[#allocation6 + $0x18] sm:$0xff]
    %v1136 = vld [vmem:[#allocation6 + $0x20] sm:$0xff]
    %v1137 = vld [vmem:[#allocation6 + $0x28] sm:$0xff]
    %v1138 = vld [vmem:[#allocation6 + $0x30] sm:$0xff]
    %v1139 = vld [vmem:[#allocation6 + $0x38] sm:$0xff]
    %v1140 = vld [vmem:[#allocation6 + $0x40] sm:$0xff]
    %v1141 = vld [vmem:[#allocation6 + $0x48] sm:$0xff]
    %v1142 = vld [vmem:[#allocation6 + $0x50] sm:$0xff]
    %v1143 = vld [vmem:[#allocation6 + $0x58] sm:$0xff]
    %v1144 = vld [vmem:[#allocation6 + $0x60] sm:$0xff]
    %v1145 = vld [vmem:[#allocation6 + $0x68] sm:$0xff]
    %v1146 = vld [vmem:[#allocation6 + $0x70] sm:$0xff]
    %v1147 = vld [vmem:[#allocation6 + $0x78] sm:$0xff]
    %v1148 = vld [vmem:[#allocation6 + $0x80] sm:$0xff]
    %v1149 = vld [vmem:[#allocation6 + $0x88] sm:$0xff]
    %v1150 = vld [vmem:[#allocation6 + $0x90] sm:$0xff]
    %v1151 = vld [vmem:[#allocation6 + $0x98] sm:$0xff]
    %v1152 = vld [vmem:[#allocation6 + $0xa0] sm:$0xff]
    %v1153 = vld [vmem:[#allocation6 + $0xa8] sm:$0xff]
    %v1154 = vld [vmem:[#allocation6 + $0xb0] sm:$0xff]
    %v1155 = vld [vmem:[#allocation6 + $0xb8] sm:$0xff]
    %v1156 = vld [vmem:[#allocation6 + $0xc0] sm:$0xff]
    %v1157 = vld [vmem:[#allocation6 + $0xc8] sm:$0xff]
    %v1158 = vld [vmem:[#allocation6 + $0xd0] sm:$0xff]
    %v1159 = vld [vmem:[#allocation6 + $0xd8] sm:$0xff]
    %v1160 = vld [vmem:[#allocation6 + $0xe0] sm:$0xff]
    %v1161 = vld [vmem:[#allocation6 + $0xe8] sm:$0xff]
    %v1162 = vld [vmem:[#allocation6 + $0xf0] sm:$0xff]
    %v1163 = vld [vmem:[#allocation6 + $0xf8] sm:$0xff]
    %v1164 = vld [vmem:[#allocation6 + $0x100] sm:$0xff]
    %v1165 = vld [vmem:[#allocation6 + $0x108] sm:$0xff]
    %v1166 = vld [vmem:[#allocation6 + $0x110] sm:$0xff]
    %v1167 = vld [vmem:[#allocation6 + $0x118] sm:$0xff]
    %v1168 = vld [vmem:[#allocation6 + $0x120] sm:$0xff]
    %v1169 = vld [vmem:[#allocation6 + $0x128] sm:$0xff]
    %v1170 = vld [vmem:[#allocation6 + $0x130] sm:$0xff]
    %v1171 = vld [vmem:[#allocation6 + $0x138] sm:$0xff]
    %v1172 = vld [vmem:[#allocation6 + $0x140] sm:$0xff]
    %v1173 = vld [vmem:[#allocation6 + $0x148] sm:$0xff]
    %v1174 = vld [vmem:[#allocation6 + $0x150] sm:$0xff]
    %v1175 = vld [vmem:[#allocation6 + $0x158] sm:$0xff]
    %v1176 = vld [vmem:[#allocation6 + $0x160] sm:$0xff]
    %v1177 = vld [vmem:[#allocation6 + $0x168] sm:$0xff]
    %v1178 = vld [vmem:[#allocation6 + $0x170] sm:$0xff]
    %v1179 = vld [vmem:[#allocation6 + $0x178] sm:$0xff]
    %v1180 = vld [vmem:[#allocation6 + $0x180] sm:$0xff]
    %v1181 = vld [vmem:[#allocation6 + $0x188] sm:$0xff]
    %v1182 = vld [vmem:[#allocation6 + $0x190] sm:$0xff]
    %v1183 = vld [vmem:[#allocation6 + $0x198] sm:$0xff]
    %v1184 = vld [vmem:[#allocation6 + $0x1a0] sm:$0xff]
    %v1185 = vld [vmem:[#allocation6 + $0x1a8] sm:$0xff]
    %v1186 = vld [vmem:[#allocation6 + $0x1b0] sm:$0xff]
    %v1187 = vld [vmem:[#allocation6 + $0x1b8] sm:$0xff]
    %v1188 = vld [vmem:[#allocation6 + $0x1c0] sm:$0xff]
    %v1189 = vld [vmem:[#allocation6 + $0x1c8] sm:$0xff]
    %v1190 = vld [vmem:[#allocation6 + $0x1d0] sm:$0xff]
    %v1191 = vld [vmem:[#allocation6 + $0x1d8] sm:$0xff]
    %v1192 = vld [vmem:[#allocation6 + $0x1e0] sm:$0xff]
    %v1193 = vld [vmem:[#allocation6 + $0x1e8] sm:$0xff]
    %v1194 = vld [vmem:[#allocation6 + $0x1f0] sm:$0xff]
    %v1195 = vld [vmem:[#allocation6 + $0x1f8] sm:$0xff]
    %v1196 = vld [vmem:[#allocation6 + $0x200] sm:$0xff]
    %v1197 = vld [vmem:[#allocation6 + $0x208] sm:$0xff]
    %v1198 = vld [vmem:[#allocation6 + $0x210] sm:$0xff]
    %v1199 = vld [vmem:[#allocation6 + $0x218] sm:$0xff]
    %v1200 = vld [vmem:[#allocation6 + $0x220] sm:$0xff]
    %v1201 = vld [vmem:[#allocation6 + $0x228] sm:$0xff]
    %v1202 = vld [vmem:[#allocation6 + $0x230] sm:$0xff]
    %v1203 = vld [vmem:[#allocation6 + $0x238] sm:$0xff]
    %v1204 = vld [vmem:[#allocation6 + $0x240] sm:$0xff]
    %v1205 = vld [vmem:[#allocation6 + $0x248] sm:$0xff]
    %v1206 = vld [vmem:[#allocation6 + $0x250] sm:$0xff]
    %v1207 = vld [vmem:[#allocation6 + $0x258] sm:$0xff]
    %v1208 = vld [vmem:[#allocation6 + $0x260] sm:$0xff]
    %v1209 = vld [vmem:[#allocation6 + $0x268] sm:$0xff]
    %v1210 = vld [vmem:[#allocation6 + $0x270] sm:$0xff]
    %v1211 = vld [vmem:[#allocation6 + $0x278] sm:$0xff]
    %v1212 = vld [vmem:[#allocation6 + $0x280] sm:$0xff]
    %v1213 = vld [vmem:[#allocation6 + $0x288] sm:$0xff]
    %v1214 = vld [vmem:[#allocation6 + $0x290] sm:$0xff]
    %v1215 = vld [vmem:[#allocation6 + $0x298] sm:$0xff]
    %v1216 = vld [vmem:[#allocation6 + $0x2a0] sm:$0xff]
    %v1217 = vld [vmem:[#allocation6 + $0x2a8] sm:$0xff]
    %v1218 = vld [vmem:[#allocation6 + $0x2b0] sm:$0xff]
    %v1219 = vld [vmem:[#allocation6 + $0x2b8] sm:$0xff]
    %v1220 = vld [vmem:[#allocation6 + $0x2c0] sm:$0xff]
    %v1221 = vld [vmem:[#allocation6 + $0x2c8] sm:$0xff]
    %v1222 = vld [vmem:[#allocation6 + $0x2d0] sm:$0xff]
    %v1223 = vld [vmem:[#allocation6 + $0x2d8] sm:$0xff]
    %v1224 = vld [vmem:[#allocation6 + $0x2e0] sm:$0xff]
    %v1225 = vld [vmem:[#allocation6 + $0x2e8] sm:$0xff]
    %v1226 = vld [vmem:[#allocation6 + $0x2f0] sm:$0xff]
    %v1227 = vld [vmem:[#allocation6 + $0x2f8] sm:$0xff]
    %v1228 = vld [vmem:[#allocation6 + $0x300] sm:$0xff]
    %v1229 = vld [vmem:[#allocation6 + $0x308] sm:$0xff]
    %v1230 = vld [vmem:[#allocation6 + $0x310] sm:$0xff]
    %v1231 = vld [vmem:[#allocation6 + $0x318] sm:$0xff]
    %v1232 = vld [vmem:[#allocation6 + $0x320] sm:$0xff]
    %v1233 = vld [vmem:[#allocation6 + $0x328] sm:$0xff]
    %v1234 = vld [vmem:[#allocation6 + $0x330] sm:$0xff]
    %v1235 = vld [vmem:[#allocation6 + $0x338] sm:$0xff]
    %v1236 = vld [vmem:[#allocation6 + $0x340] sm:$0xff]
    %v1237 = vld [vmem:[#allocation6 + $0x348] sm:$0xff]
    %v1238 = vld [vmem:[#allocation6 + $0x350] sm:$0xff]
    %v1239 = vld [vmem:[#allocation6 + $0x358] sm:$0xff]
    %v1240 = vld [vmem:[#allocation6 + $0x360] sm:$0xff]
    %v1241 = vld [vmem:[#allocation6 + $0x368] sm:$0xff]
    %v1242 = vld [vmem:[#allocation6 + $0x370] sm:$0xff]
    %v1243 = vld [vmem:[#allocation6 + $0x378] sm:$0xff]
    %v1244 = vld [vmem:[#allocation6 + $0x380] sm:$0xff]
    %v1245 = vld [vmem:[#allocation6 + $0x388] sm:$0xff]
    %v1246 = vld [vmem:[#allocation6 + $0x390] sm:$0xff]
    %v1247 = vld [vmem:[#allocation6 + $0x398] sm:$0xff]
    %v1248 = vld [vmem:[#allocation6 + $0x3a0] sm:$0xff]
    %v1249 = vld [vmem:[#allocation6 + $0x3a8] sm:$0xff]
    %v1250 = vld [vmem:[#allocation6 + $0x3b0] sm:$0xff]
    %v1251 = vld [vmem:[#allocation6 + $0x3b8] sm:$0xff]
    %v1252 = vld [vmem:[#allocation6 + $0x3c0] sm:$0xff]
    %v1253 = vld [vmem:[#allocation6 + $0x3c8] sm:$0xff]
    %v1254 = vld [vmem:[#allocation6 + $0x3d0] sm:$0xff]
    %v1255 = vld [vmem:[#allocation6 + $0x3d8] sm:$0xff]
    %v1256 = vld [vmem:[#allocation6 + $0x3e0] sm:$0xff]
    %v1257 = vld [vmem:[#allocation6 + $0x3e8] sm:$0xff]
    %v1258 = vld [vmem:[#allocation6 + $0x3f0] sm:$0xff]
    %v1259 = vld [vmem:[#allocation6 + $0x3f8] sm:$0xff]
    %v1260 = vld [vmem:[%s5] sm:$0xf]
    %v1262 = vlaneseq
    %v1263 = vshrl.u32 %v1262, 7
    %v1264 = vsub.s32 0, %v1263
    %v1265 = vrot.slane %v1260, %v1264
    %v1266 = vlaneseq
    %v1267 = vshrl.u32 %v1266, 7
    %v1268 = vsub.s32 1, %v1267
    %v1269 = vrot.slane %v1260, %v1268
    %v1270 = vlaneseq
    %v1271 = vshrl.u32 %v1270, 7
    %v1272 = vsub.s32 2, %v1271
    %v1273 = vrot.slane %v1260, %v1272
    %v1274 = vlaneseq
    %v1275 = vshrl.u32 %v1274, 7
    %v1276 = vsub.s32 3, %v1275
    %v1277 = vrot.slane %v1260, %v1276
    %v1410 = vunpack.c.l.b16 %v1132
    %v1411 = vunpack.c.h.b16 %v1132
    %v1412 = vunpack.c.l.b16 %v1133
    %v1413 = vunpack.c.h.b16 %v1133
    %v1414 = vunpack.c.l.b16 %v1134
    %v1415 = vunpack.c.h.b16 %v1134
    %v1416 = vunpack.c.l.b16 %v1135
    %v1417 = vunpack.c.h.b16 %v1135
    %v1418 = vunpack.c.l.b16 %v1136
    %v1419 = vunpack.c.h.b16 %v1136
    %v1420 = vunpack.c.l.b16 %v1137
    %v1421 = vunpack.c.h.b16 %v1137
    %v1422 = vunpack.c.l.b16 %v1138
    %v1423 = vunpack.c.h.b16 %v1138
    %v1424 = vunpack.c.l.b16 %v1139
    %v1425 = vunpack.c.h.b16 %v1139
    %v1426 = vunpack.c.l.b16 %v1140
    %v1427 = vunpack.c.h.b16 %v1140
    %v1428 = vunpack.c.l.b16 %v1141
    %v1429 = vunpack.c.h.b16 %v1141
    %v1430 = vunpack.c.l.b16 %v1142
    %v1431 = vunpack.c.h.b16 %v1142
    %v1432 = vunpack.c.l.b16 %v1143
    %v1433 = vunpack.c.h.b16 %v1143
    %v1434 = vunpack.c.l.b16 %v1144
    %v1435 = vunpack.c.h.b16 %v1144
    %v1436 = vunpack.c.l.b16 %v1145
    %v1437 = vunpack.c.h.b16 %v1145
    %v1438 = vunpack.c.l.b16 %v1146
    %v1439 = vunpack.c.h.b16 %v1146
    %v1440 = vunpack.c.l.b16 %v1147
    %v1441 = vunpack.c.h.b16 %v1147
    %v1442 = vunpack.c.l.b16 %v1148
    %v1443 = vunpack.c.h.b16 %v1148
    %v1444 = vunpack.c.l.b16 %v1149
    %v1445 = vunpack.c.h.b16 %v1149
    %v1446 = vunpack.c.l.b16 %v1150
    %v1447 = vunpack.c.h.b16 %v1150
    %v1448 = vunpack.c.l.b16 %v1151
    %v1449 = vunpack.c.h.b16 %v1151
    %v1450 = vunpack.c.l.b16 %v1152
    %v1451 = vunpack.c.h.b16 %v1152
    %v1452 = vunpack.c.l.b16 %v1153
    %v1453 = vunpack.c.h.b16 %v1153
    %v1454 = vunpack.c.l.b16 %v1154
    %v1455 = vunpack.c.h.b16 %v1154
    %v1456 = vunpack.c.l.b16 %v1155
    %v1457 = vunpack.c.h.b16 %v1155
    %v1458 = vunpack.c.l.b16 %v1156
    %v1459 = vunpack.c.h.b16 %v1156
    %v1460 = vunpack.c.l.b16 %v1157
    %v1461 = vunpack.c.h.b16 %v1157
    %v1462 = vunpack.c.l.b16 %v1158
    %v1463 = vunpack.c.h.b16 %v1158
    %v1464 = vunpack.c.l.b16 %v1159
    %v1465 = vunpack.c.h.b16 %v1159
    %v1466 = vunpack.c.l.b16 %v1160
    %v1467 = vunpack.c.h.b16 %v1160
    %v1468 = vunpack.c.l.b16 %v1161
    %v1469 = vunpack.c.h.b16 %v1161
    %v1470 = vunpack.c.l.b16 %v1162
    %v1471 = vunpack.c.h.b16 %v1162
    %v1472 = vunpack.c.l.b16 %v1163
    %v1473 = vunpack.c.h.b16 %v1163
    %v1474 = vunpack.c.l.b16 %v1164
    %v1475 = vunpack.c.h.b16 %v1164
    %v1476 = vunpack.c.l.b16 %v1165
    %v1477 = vunpack.c.h.b16 %v1165
    %v1478 = vunpack.c.l.b16 %v1166
    %v1479 = vunpack.c.h.b16 %v1166
    %v1480 = vunpack.c.l.b16 %v1167
    %v1481 = vunpack.c.h.b16 %v1167
    %v1482 = vunpack.c.l.b16 %v1168
    %v1483 = vunpack.c.h.b16 %v1168
    %v1484 = vunpack.c.l.b16 %v1169
    %v1485 = vunpack.c.h.b16 %v1169
    %v1486 = vunpack.c.l.b16 %v1170
    %v1487 = vunpack.c.h.b16 %v1170
    %v1488 = vunpack.c.l.b16 %v1171
    %v1489 = vunpack.c.h.b16 %v1171
    %v1490 = vunpack.c.l.b16 %v1172
    %v1491 = vunpack.c.h.b16 %v1172
    %v1492 = vunpack.c.l.b16 %v1173
    %v1493 = vunpack.c.h.b16 %v1173
    %v1494 = vunpack.c.l.b16 %v1174
    %v1495 = vunpack.c.h.b16 %v1174
    %v1496 = vunpack.c.l.b16 %v1175
    %v1497 = vunpack.c.h.b16 %v1175
    %v1498 = vunpack.c.l.b16 %v1176
    %v1499 = vunpack.c.h.b16 %v1176
    %v1500 = vunpack.c.l.b16 %v1177
    %v1501 = vunpack.c.h.b16 %v1177
    %v1502 = vunpack.c.l.b16 %v1178
    %v1503 = vunpack.c.h.b16 %v1178
    %v1504 = vunpack.c.l.b16 %v1179
    %v1505 = vunpack.c.h.b16 %v1179
    %v1506 = vunpack.c.l.b16 %v1180
    %v1507 = vunpack.c.h.b16 %v1180
    %v1508 = vunpack.c.l.b16 %v1181
    %v1509 = vunpack.c.h.b16 %v1181
    %v1510 = vunpack.c.l.b16 %v1182
    %v1511 = vunpack.c.h.b16 %v1182
    %v1512 = vunpack.c.l.b16 %v1183
    %v1513 = vunpack.c.h.b16 %v1183
    %v1514 = vunpack.c.l.b16 %v1184
    %v1515 = vunpack.c.h.b16 %v1184
    %v1516 = vunpack.c.l.b16 %v1185
    %v1517 = vunpack.c.h.b16 %v1185
    %v1518 = vunpack.c.l.b16 %v1186
    %v1519 = vunpack.c.h.b16 %v1186
    %v1520 = vunpack.c.l.b16 %v1187
    %v1521 = vunpack.c.h.b16 %v1187
    %v1522 = vunpack.c.l.b16 %v1188
    %v1523 = vunpack.c.h.b16 %v1188
    %v1524 = vunpack.c.l.b16 %v1189
    %v1525 = vunpack.c.h.b16 %v1189
    %v1526 = vunpack.c.l.b16 %v1190
    %v1527 = vunpack.c.h.b16 %v1190
    %v1528 = vunpack.c.l.b16 %v1191
    %v1529 = vunpack.c.h.b16 %v1191
    %v1530 = vunpack.c.l.b16 %v1192
    %v1531 = vunpack.c.h.b16 %v1192
    %v1532 = vunpack.c.l.b16 %v1193
    %v1533 = vunpack.c.h.b16 %v1193
    %v1534 = vunpack.c.l.b16 %v1194
    %v1535 = vunpack.c.h.b16 %v1194
    %v1536 = vunpack.c.l.b16 %v1195
    %v1537 = vunpack.c.h.b16 %v1195
    %v1538 = vunpack.c.l.b16 %v1196
    %v1539 = vunpack.c.h.b16 %v1196
    %v1540 = vunpack.c.l.b16 %v1197
    %v1541 = vunpack.c.h.b16 %v1197
    %v1542 = vunpack.c.l.b16 %v1198
    %v1543 = vunpack.c.h.b16 %v1198
    %v1544 = vunpack.c.l.b16 %v1199
    %v1545 = vunpack.c.h.b16 %v1199
    %v1546 = vunpack.c.l.b16 %v1200
    %v1547 = vunpack.c.h.b16 %v1200
    %v1548 = vunpack.c.l.b16 %v1201
    %v1549 = vunpack.c.h.b16 %v1201
    %v1550 = vunpack.c.l.b16 %v1202
    %v1551 = vunpack.c.h.b16 %v1202
    %v1552 = vunpack.c.l.b16 %v1203
    %v1553 = vunpack.c.h.b16 %v1203
    %v1554 = vunpack.c.l.b16 %v1204
    %v1555 = vunpack.c.h.b16 %v1204
    %v1556 = vunpack.c.l.b16 %v1205
    %v1557 = vunpack.c.h.b16 %v1205
    %v1558 = vunpack.c.l.b16 %v1206
    %v1559 = vunpack.c.h.b16 %v1206
    %v1560 = vunpack.c.l.b16 %v1207
    %v1561 = vunpack.c.h.b16 %v1207
    %v1562 = vunpack.c.l.b16 %v1208
    %v1563 = vunpack.c.h.b16 %v1208
    %v1564 = vunpack.c.l.b16 %v1209
    %v1565 = vunpack.c.h.b16 %v1209
    %v1566 = vunpack.c.l.b16 %v1210
    %v1567 = vunpack.c.h.b16 %v1210
    %v1568 = vunpack.c.l.b16 %v1211
    %v1569 = vunpack.c.h.b16 %v1211
    %v1570 = vunpack.c.l.b16 %v1212
    %v1571 = vunpack.c.h.b16 %v1212
    %v1572 = vunpack.c.l.b16 %v1213
    %v1573 = vunpack.c.h.b16 %v1213
    %v1574 = vunpack.c.l.b16 %v1214
    %v1575 = vunpack.c.h.b16 %v1214
    %v1576 = vunpack.c.l.b16 %v1215
    %v1577 = vunpack.c.h.b16 %v1215
    %v1578 = vunpack.c.l.b16 %v1216
    %v1579 = vunpack.c.h.b16 %v1216
    %v1580 = vunpack.c.l.b16 %v1217
    %v1581 = vunpack.c.h.b16 %v1217
    %v1582 = vunpack.c.l.b16 %v1218
    %v1583 = vunpack.c.h.b16 %v1218
    %v1584 = vunpack.c.l.b16 %v1219
    %v1585 = vunpack.c.h.b16 %v1219
    %v1586 = vunpack.c.l.b16 %v1220
    %v1587 = vunpack.c.h.b16 %v1220
    %v1588 = vunpack.c.l.b16 %v1221
    %v1589 = vunpack.c.h.b16 %v1221
    %v1590 = vunpack.c.l.b16 %v1222
    %v1591 = vunpack.c.h.b16 %v1222
    %v1592 = vunpack.c.l.b16 %v1223
    %v1593 = vunpack.c.h.b16 %v1223
    %v1594 = vunpack.c.l.b16 %v1224
    %v1595 = vunpack.c.h.b16 %v1224
    %v1596 = vunpack.c.l.b16 %v1225
    %v1597 = vunpack.c.h.b16 %v1225
    %v1598 = vunpack.c.l.b16 %v1226
    %v1599 = vunpack.c.h.b16 %v1226
    %v1600 = vunpack.c.l.b16 %v1227
    %v1601 = vunpack.c.h.b16 %v1227
    %v1602 = vunpack.c.l.b16 %v1228
    %v1603 = vunpack.c.h.b16 %v1228
    %v1604 = vunpack.c.l.b16 %v1229
    %v1605 = vunpack.c.h.b16 %v1229
    %v1606 = vunpack.c.l.b16 %v1230
    %v1607 = vunpack.c.h.b16 %v1230
    %v1608 = vunpack.c.l.b16 %v1231
    %v1609 = vunpack.c.h.b16 %v1231
    %v1610 = vunpack.c.l.b16 %v1232
    %v1611 = vunpack.c.h.b16 %v1232
    %v1612 = vunpack.c.l.b16 %v1233
    %v1613 = vunpack.c.h.b16 %v1233
    %v1614 = vunpack.c.l.b16 %v1234
    %v1615 = vunpack.c.h.b16 %v1234
    %v1616 = vunpack.c.l.b16 %v1235
    %v1617 = vunpack.c.h.b16 %v1235
    %v1618 = vunpack.c.l.b16 %v1236
    %v1619 = vunpack.c.h.b16 %v1236
    %v1620 = vunpack.c.l.b16 %v1237
    %v1621 = vunpack.c.h.b16 %v1237
    %v1622 = vunpack.c.l.b16 %v1238
    %v1623 = vunpack.c.h.b16 %v1238
    %v1624 = vunpack.c.l.b16 %v1239
    %v1625 = vunpack.c.h.b16 %v1239
    %v1626 = vunpack.c.l.b16 %v1240
    %v1627 = vunpack.c.h.b16 %v1240
    %v1628 = vunpack.c.l.b16 %v1241
    %v1629 = vunpack.c.h.b16 %v1241
    %v1630 = vunpack.c.l.b16 %v1242
    %v1631 = vunpack.c.h.b16 %v1242
    %v1632 = vunpack.c.l.b16 %v1243
    %v1633 = vunpack.c.h.b16 %v1243
    %v1634 = vunpack.c.l.b16 %v1244
    %v1635 = vunpack.c.h.b16 %v1244
    %v1636 = vunpack.c.l.b16 %v1245
    %v1637 = vunpack.c.h.b16 %v1245
    %v1638 = vunpack.c.l.b16 %v1246
    %v1639 = vunpack.c.h.b16 %v1246
    %v1640 = vunpack.c.l.b16 %v1247
    %v1641 = vunpack.c.h.b16 %v1247
    %v1642 = vunpack.c.l.b16 %v1248
    %v1643 = vunpack.c.h.b16 %v1248
    %v1644 = vunpack.c.l.b16 %v1249
    %v1645 = vunpack.c.h.b16 %v1249
    %v1646 = vunpack.c.l.b16 %v1250
    %v1647 = vunpack.c.h.b16 %v1250
    %v1648 = vunpack.c.l.b16 %v1251
    %v1649 = vunpack.c.h.b16 %v1251
    %v1650 = vunpack.c.l.b16 %v1252
    %v1651 = vunpack.c.h.b16 %v1252
    %v1652 = vunpack.c.l.b16 %v1253
    %v1653 = vunpack.c.h.b16 %v1253
    %v1654 = vunpack.c.l.b16 %v1254
    %v1655 = vunpack.c.h.b16 %v1254
    %v1656 = vunpack.c.l.b16 %v1255
    %v1657 = vunpack.c.h.b16 %v1255
    %v1658 = vunpack.c.l.b16 %v1256
    %v1659 = vunpack.c.h.b16 %v1256
    %v1660 = vunpack.c.l.b16 %v1257
    %v1661 = vunpack.c.h.b16 %v1257
    %v1662 = vunpack.c.l.b16 %v1258
    %v1663 = vunpack.c.h.b16 %v1258
    %v1664 = vunpack.c.l.b16 %v1259
    %v1665 = vunpack.c.h.b16 %v1259
    %v1666 = vpack.c.b16 %v1414, %v1410
    %v1667 = vpack.c.b16 %v1415, %v1411
    %v1668 = vpack.c.b16 %v1416, %v1412
    %v1669 = vpack.c.b16 %v1417, %v1413
    %v1670 = vpack.c.b16 %v1422, %v1418
    %v1671 = vpack.c.b16 %v1423, %v1419
    %v1672 = vpack.c.b16 %v1424, %v1420
    %v1673 = vpack.c.b16 %v1425, %v1421
    %v1674 = vpack.c.b16 %v1430, %v1426
    %v1675 = vpack.c.b16 %v1431, %v1427
    %v1676 = vpack.c.b16 %v1432, %v1428
    %v1677 = vpack.c.b16 %v1433, %v1429
    %v1678 = vpack.c.b16 %v1438, %v1434
    %v1679 = vpack.c.b16 %v1439, %v1435
    %v1680 = vpack.c.b16 %v1440, %v1436
    %v1681 = vpack.c.b16 %v1441, %v1437
    %v1682 = vpack.c.b16 %v1446, %v1442
    %v1683 = vpack.c.b16 %v1447, %v1443
    %v1684 = vpack.c.b16 %v1448, %v1444
    %v1685 = vpack.c.b16 %v1449, %v1445
    %v1686 = vpack.c.b16 %v1454, %v1450
    %v1687 = vpack.c.b16 %v1455, %v1451
    %v1688 = vpack.c.b16 %v1456, %v1452
    %v1689 = vpack.c.b16 %v1457, %v1453
    %v1690 = vpack.c.b16 %v1462, %v1458
    %v1691 = vpack.c.b16 %v1463, %v1459
    %v1692 = vpack.c.b16 %v1464, %v1460
    %v1693 = vpack.c.b16 %v1465, %v1461
    %v1694 = vpack.c.b16 %v1470, %v1466
    %v1695 = vpack.c.b16 %v1471, %v1467
    %v1696 = vpack.c.b16 %v1472, %v1468
    %v1697 = vpack.c.b16 %v1473, %v1469
    %v1698 = vpack.c.b16 %v1478, %v1474
    %v1699 = vpack.c.b16 %v1479, %v1475
    %v1700 = vpack.c.b16 %v1480, %v1476
    %v1701 = vpack.c.b16 %v1481, %v1477
    %v1702 = vpack.c.b16 %v1486, %v1482
    %v1703 = vpack.c.b16 %v1487, %v1483
    %v1704 = vpack.c.b16 %v1488, %v1484
    %v1705 = vpack.c.b16 %v1489, %v1485
    %v1706 = vpack.c.b16 %v1494, %v1490
    %v1707 = vpack.c.b16 %v1495, %v1491
    %v1708 = vpack.c.b16 %v1496, %v1492
    %v1709 = vpack.c.b16 %v1497, %v1493
    %v1710 = vpack.c.b16 %v1502, %v1498
    %v1711 = vpack.c.b16 %v1503, %v1499
    %v1712 = vpack.c.b16 %v1504, %v1500
    %v1713 = vpack.c.b16 %v1505, %v1501
    %v1714 = vpack.c.b16 %v1510, %v1506
    %v1715 = vpack.c.b16 %v1511, %v1507
    %v1716 = vpack.c.b16 %v1512, %v1508
    %v1717 = vpack.c.b16 %v1513, %v1509
    %v1718 = vpack.c.b16 %v1518, %v1514
    %v1719 = vpack.c.b16 %v1519, %v1515
    %v1720 = vpack.c.b16 %v1520, %v1516
    %v1721 = vpack.c.b16 %v1521, %v1517
    %v1722 = vpack.c.b16 %v1526, %v1522
    %v1723 = vpack.c.b16 %v1527, %v1523
    %v1724 = vpack.c.b16 %v1528, %v1524
    %v1725 = vpack.c.b16 %v1529, %v1525
    %v1726 = vpack.c.b16 %v1534, %v1530
    %v1727 = vpack.c.b16 %v1535, %v1531
    %v1728 = vpack.c.b16 %v1536, %v1532
    %v1729 = vpack.c.b16 %v1537, %v1533
    %v1730 = vpack.c.b16 %v1542, %v1538
    %v1731 = vpack.c.b16 %v1543, %v1539
    %v1732 = vpack.c.b16 %v1544, %v1540
    %v1733 = vpack.c.b16 %v1545, %v1541
    %v1734 = vpack.c.b16 %v1550, %v1546
    %v1735 = vpack.c.b16 %v1551, %v1547
    %v1736 = vpack.c.b16 %v1552, %v1548
    %v1737 = vpack.c.b16 %v1553, %v1549
    %v1738 = vpack.c.b16 %v1558, %v1554
    %v1739 = vpack.c.b16 %v1559, %v1555
    %v1740 = vpack.c.b16 %v1560, %v1556
    %v1741 = vpack.c.b16 %v1561, %v1557
    %v1742 = vpack.c.b16 %v1566, %v1562
    %v1743 = vpack.c.b16 %v1567, %v1563
    %v1744 = vpack.c.b16 %v1568, %v1564
    %v1745 = vpack.c.b16 %v1569, %v1565
    %v1746 = vpack.c.b16 %v1574, %v1570
    %v1747 = vpack.c.b16 %v1575, %v1571
    %v1748 = vpack.c.b16 %v1576, %v1572
    %v1749 = vpack.c.b16 %v1577, %v1573
    %v1750 = vpack.c.b16 %v1582, %v1578
    %v1751 = vpack.c.b16 %v1583, %v1579
    %v1752 = vpack.c.b16 %v1584, %v1580
    %v1753 = vpack.c.b16 %v1585, %v1581
    %v1754 = vpack.c.b16 %v1590, %v1586
    %v1755 = vpack.c.b16 %v1591, %v1587
    %v1756 = vpack.c.b16 %v1592, %v1588
    %v1757 = vpack.c.b16 %v1593, %v1589
    %v1758 = vpack.c.b16 %v1598, %v1594
    %v1759 = vpack.c.b16 %v1599, %v1595
    %v1760 = vpack.c.b16 %v1600, %v1596
    %v1761 = vpack.c.b16 %v1601, %v1597
    %v1762 = vpack.c.b16 %v1606, %v1602
    %v1763 = vpack.c.b16 %v1607, %v1603
    %v1764 = vpack.c.b16 %v1608, %v1604
    %v1765 = vpack.c.b16 %v1609, %v1605
    %v1766 = vpack.c.b16 %v1614, %v1610
    %v1767 = vpack.c.b16 %v1615, %v1611
    %v1768 = vpack.c.b16 %v1616, %v1612
    %v1769 = vpack.c.b16 %v1617, %v1613
    %v1770 = vpack.c.b16 %v1622, %v1618
    %v1771 = vpack.c.b16 %v1623, %v1619
    %v1772 = vpack.c.b16 %v1624, %v1620
    %v1773 = vpack.c.b16 %v1625, %v1621
    %v1774 = vpack.c.b16 %v1630, %v1626
    %v1775 = vpack.c.b16 %v1631, %v1627
    %v1776 = vpack.c.b16 %v1632, %v1628
    %v1777 = vpack.c.b16 %v1633, %v1629
    %v1778 = vpack.c.b16 %v1638, %v1634
    %v1779 = vpack.c.b16 %v1639, %v1635
    %v1780 = vpack.c.b16 %v1640, %v1636
    %v1781 = vpack.c.b16 %v1641, %v1637
    %v1782 = vpack.c.b16 %v1646, %v1642
    %v1783 = vpack.c.b16 %v1647, %v1643
    %v1784 = vpack.c.b16 %v1648, %v1644
    %v1785 = vpack.c.b16 %v1649, %v1645
    %v1786 = vpack.c.b16 %v1654, %v1650
    %v1787 = vpack.c.b16 %v1655, %v1651
    %v1788 = vpack.c.b16 %v1656, %v1652
    %v1789 = vpack.c.b16 %v1657, %v1653
    %v1790 = vpack.c.b16 %v1662, %v1658
    %v1791 = vpack.c.b16 %v1663, %v1659
    %v1792 = vpack.c.b16 %v1664, %v1660
    %v1793 = vpack.c.b16 %v1665, %v1661
    %1922 = vmatprep.subr.bf16.mxu0 %v1667
    %1923 = vmatpush1.bf16.msra.mxu0 %v1666
    %1924 = vmatprep.subr.bf16.mxu0 %v1671
    %1925 = vmatpush1.bf16.msra.mxu0 %v1670
    %1926 = vmatprep.subr.bf16.mxu0 %v1675
    %1927 = vmatpush1.bf16.msra.mxu0 %v1674
    %1928 = vmatprep.subr.bf16.mxu0 %v1679
    %1929 = vmatpush1.bf16.msra.mxu0 %v1678
    %1930 = vmatprep.subr.bf16.mxu0 %v1683
    %1931 = vmatpush1.bf16.msra.mxu0 %v1682
    %1932 = vmatprep.subr.bf16.mxu0 %v1687
    %1933 = vmatpush1.bf16.msra.mxu0 %v1686
    %1934 = vmatprep.subr.bf16.mxu0 %v1691
    %1935 = vmatpush1.bf16.msra.mxu0 %v1690
    %1936 = vmatprep.subr.bf16.mxu0 %v1695
    %1937 = vmatpush1.bf16.msra.mxu0 %v1694
    %1938 = vmatprep.subr.bf16.mxu0 %v1699
    %1939 = vmatpush1.bf16.msra.mxu0 %v1698
    %1940 = vmatprep.subr.bf16.mxu0 %v1703
    %1941 = vmatpush1.bf16.msra.mxu0 %v1702
    %1942 = vmatprep.subr.bf16.mxu0 %v1707
    %1943 = vmatpush1.bf16.msra.mxu0 %v1706
    %1944 = vmatprep.subr.bf16.mxu0 %v1711
    %1945 = vmatpush1.bf16.msra.mxu0 %v1710
    %1946 = vmatprep.subr.bf16.mxu0 %v1715
    %1947 = vmatpush1.bf16.msra.mxu0 %v1714
    %1948 = vmatprep.subr.bf16.mxu0 %v1719
    %1949 = vmatpush1.bf16.msra.mxu0 %v1718
    %1950 = vmatprep.subr.bf16.mxu0 %v1723
    %1951 = vmatpush1.bf16.msra.mxu0 %v1722
    %1952 = vmatprep.subr.bf16.mxu0 %v1727
    %1953 = vmatpush1.bf16.msra.mxu0 %v1726
    %1954 = vmatprep.mubr.bf16.mxu0 %v1129
    %1955 = vmatmul.mubr.bf16.gmra.mrb[0].mxu0 %v1128
    %v1956 = vpop.f32.mrb[0].mxu0
    %v1957 = vadd.f32 %v1265, %v1956
    %v1958 = vpop.f32.mrb[0].mxu0
    %v1959 = vadd.f32 %v1269, %v1958
    %v1960 = vpop.f32.mrb[0].mxu0
    %v1961 = vpop.f32.mrb[0].mxu0
    %1962 = vdwg.mxu0
    %1963 = vmatprep.subr.bf16.mxu0 %v1731
    %1964 = vmatpush1.bf16.msra.mxu0 %v1730
    %1965 = vmatprep.subr.bf16.mxu0 %v1735
    %1966 = vmatpush1.bf16.msra.mxu0 %v1734
    %1967 = vmatprep.subr.bf16.mxu0 %v1739
    %1968 = vmatpush1.bf16.msra.mxu0 %v1738
    %1969 = vmatprep.subr.bf16.mxu0 %v1743
    %1970 = vmatpush1.bf16.msra.mxu0 %v1742
    %1971 = vmatprep.subr.bf16.mxu0 %v1747
    %1972 = vmatpush1.bf16.msra.mxu0 %v1746
    %1973 = vmatprep.subr.bf16.mxu0 %v1751
    %1974 = vmatpush1.bf16.msra.mxu0 %v1750
    %1975 = vmatprep.subr.bf16.mxu0 %v1755
    %1976 = vmatpush1.bf16.msra.mxu0 %v1754
    %1977 = vmatprep.subr.bf16.mxu0 %v1759
    %1978 = vmatpush1.bf16.msra.mxu0 %v1758
    %1979 = vmatprep.subr.bf16.mxu0 %v1763
    %1980 = vmatpush1.bf16.msra.mxu0 %v1762
    %1981 = vmatprep.subr.bf16.mxu0 %v1767
    %1982 = vmatpush1.bf16.msra.mxu0 %v1766
    %1983 = vmatprep.subr.bf16.mxu0 %v1771
    %1984 = vmatpush1.bf16.msra.mxu0 %v1770
    %1985 = vmatprep.subr.bf16.mxu0 %v1775
    %1986 = vmatpush1.bf16.msra.mxu0 %v1774
    %1987 = vmatprep.subr.bf16.mxu0 %v1779
    %1988 = vmatpush1.bf16.msra.mxu0 %v1778
    %1989 = vmatprep.subr.bf16.mxu0 %v1783
    %1990 = vmatpush1.bf16.msra.mxu0 %v1782
    %1991 = vmatprep.subr.bf16.mxu0 %v1787
    %1992 = vmatpush1.bf16.msra.mxu0 %v1786
    %1993 = vmatprep.subr.bf16.mxu0 %v1791
    %1994 = vmatpush1.bf16.msra.mxu0 %v1790
    %1995 = vmatprep.mubr.bf16.mxu0 %v1131
    %1996 = vmatmul.mubr.bf16.gmra.mrb[0].mxu0 %v1130
    %v1997 = vpop.f32.mrb[0].mxu0
    %v1998 = vadd.f32 %v1957, %v1997
    %v1999 = vpop.f32.mrb[0].mxu0
    %v2000 = vadd.f32 %v1959, %v1999
    %v2001 = vpop.f32.mrb[0].mxu0
    %v2002 = vpop.f32.mrb[0].mxu0
    %2003 = vdwg.mxu0
    %2004 = vmatprep.subr.bf16.mxu0 %v1669
    %2005 = vmatpush1.bf16.msra.mxu0 %v1668
    %2006 = vmatprep.subr.bf16.mxu0 %v1673
    %2007 = vmatpush1.bf16.msra.mxu0 %v1672
    %2008 = vmatprep.subr.bf16.mxu0 %v1677
    %2009 = vmatpush1.bf16.msra.mxu0 %v1676
    %2010 = vmatprep.subr.bf16.mxu0 %v1681
    %2011 = vmatpush1.bf16.msra.mxu0 %v1680
    %2012 = vmatprep.subr.bf16.mxu0 %v1685
    %2013 = vmatpush1.bf16.msra.mxu0 %v1684
    %2014 = vmatprep.subr.bf16.mxu0 %v1689
    %2015 = vmatpush1.bf16.msra.mxu0 %v1688
    %2016 = vmatprep.subr.bf16.mxu0 %v1693
    %2017 = vmatpush1.bf16.msra.mxu0 %v1692
    %2018 = vmatprep.subr.bf16.mxu0 %v1697
    %2019 = vmatpush1.bf16.msra.mxu0 %v1696
    %2020 = vmatprep.subr.bf16.mxu0 %v1701
    %2021 = vmatpush1.bf16.msra.mxu0 %v1700
    %2022 = vmatprep.subr.bf16.mxu0 %v1705
    %2023 = vmatpush1.bf16.msra.mxu0 %v1704
    %2024 = vmatprep.subr.bf16.mxu0 %v1709
    %2025 = vmatpush1.bf16.msra.mxu0 %v1708
    %2026 = vmatprep.subr.bf16.mxu0 %v1713
    %2027 = vmatpush1.bf16.msra.mxu0 %v1712
    %2028 = vmatprep.subr.bf16.mxu0 %v1717
    %2029 = vmatpush1.bf16.msra.mxu0 %v1716
    %2030 = vmatprep.subr.bf16.mxu0 %v1721
    %2031 = vmatpush1.bf16.msra.mxu0 %v1720
    %2032 = vmatprep.subr.bf16.mxu0 %v1725
    %2033 = vmatpush1.bf16.msra.mxu0 %v1724
    %2034 = vmatprep.subr.bf16.mxu0 %v1729
    %2035 = vmatpush1.bf16.msra.mxu0 %v1728
    %2036 = vmatprep.mubr.bf16.mxu0 %v1129
    %2037 = vmatmul.mubr.bf16.gmra.mrb[0].mxu0 %v1128
    %v2038 = vpop.f32.mrb[0].mxu0
    %v2039 = vadd.f32 %v1273, %v2038
    %v2040 = vpop.f32.mrb[0].mxu0
    %v2041 = vadd.f32 %v1277, %v2040
    %v2042 = vpop.f32.mrb[0].mxu0
    %v2043 = vpop.f32.mrb[0].mxu0
    %2044 = vdwg.mxu0
    %2045 = vmatprep.subr.bf16.mxu0 %v1733
    %2046 = vmatpush1.bf16.msra.mxu0 %v1732
    %2047 = vmatprep.subr.bf16.mxu0 %v1737
    %2048 = vmatpush1.bf16.msra.mxu0 %v1736
    %2049 = vmatprep.subr.bf16.mxu0 %v1741
    %2050 = vmatpush1.bf16.msra.mxu0 %v1740
    %2051 = vmatprep.subr.bf16.mxu0 %v1745
    %2052 = vmatpush1.bf16.msra.mxu0 %v1744
    %2053 = vmatprep.subr.bf16.mxu0 %v1749
    %2054 = vmatpush1.bf16.msra.mxu0 %v1748
    %2055 = vmatprep.subr.bf16.mxu0 %v1753
    %2056 = vmatpush1.bf16.msra.mxu0 %v1752
    %2057 = vmatprep.subr.bf16.mxu0 %v1757
    %2058 = vmatpush1.bf16.msra.mxu0 %v1756
    %2059 = vmatprep.subr.bf16.mxu0 %v1761
    %2060 = vmatpush1.bf16.msra.mxu0 %v1760
    %2061 = vmatprep.subr.bf16.mxu0 %v1765
    %2062 = vmatpush1.bf16.msra.mxu0 %v1764
    %2063 = vmatprep.subr.bf16.mxu0 %v1769
    %2064 = vmatpush1.bf16.msra.mxu0 %v1768
    %2065 = vmatprep.subr.bf16.mxu0 %v1773
    %2066 = vmatpush1.bf16.msra.mxu0 %v1772
    %2067 = vmatprep.subr.bf16.mxu0 %v1777
    %2068 = vmatpush1.bf16.msra.mxu0 %v1776
    %2069 = vmatprep.subr.bf16.mxu0 %v1781
    %2070 = vmatpush1.bf16.msra.mxu0 %v1780
    %2071 = vmatprep.subr.bf16.mxu0 %v1785
    %2072 = vmatpush1.bf16.msra.mxu0 %v1784
    %2073 = vmatprep.subr.bf16.mxu0 %v1789
    %2074 = vmatpush1.bf16.msra.mxu0 %v1788
    %2075 = vmatprep.subr.bf16.mxu0 %v1793
    %2076 = vmatpush1.bf16.msra.mxu0 %v1792
    %2077 = vmatprep.mubr.bf16.mxu0 %v1131
    %2078 = vmatmul.mubr.bf16.gmra.mrb[0].mxu0 %v1130
    %v2079 = vpop.f32.mrb[0].mxu0
    %v2080 = vadd.f32 %v2039, %v2079
    %v2081 = vpop.f32.mrb[0].mxu0
    %v2082 = vadd.f32 %v2041, %v2081
    %v2083 = vpop.f32.mrb[0].mxu0
    %v2084 = vpop.f32.mrb[0].mxu0
    %2085 = vdwg.mxu0
    %v2086 = vmul.f32 %v1998, 0.2
    %v2087 = vmul.f32 %v2000, 0.2
    %v2088 = vmul.f32 %v2080, 0.2
    %v2089 = vmul.f32 %v2082, 0.2
    %v2090 = vmax.f32 %v1998, %v2086
    %v2091 = vmax.f32 %v2000, %v2087
    %v2092 = vmax.f32 %v2080, %v2088
    %v2093 = vmax.f32 %v2082, %v2089
    %v2094 = vpack.c.bf16 %v2090, %v2090
    %v2095 = vpack.c.bf16 %v2091, %v2091
    %v2096 = vpack.c.bf16 %v2092, %v2092
    %v2097 = vpack.c.bf16 %v2093, %v2093
    %v2098 = vld [vmem:[#allocation7] sm:$0xff]
    %v2099 = vld [vmem:[#allocation7 + $0x8] sm:$0xf]
    %v2100 = vld [vmem:[#allocation7 + $0xc] sm:$0xff]
    %v2101 = vld [vmem:[#allocation7 + $0x14] sm:$0xf]
    %v2102 = vld [vmem:[#allocation7 + $0x18] sm:$0xff]
    %v2103 = vld [vmem:[#allocation7 + $0x20] sm:$0xf]
    %v2104 = vld [vmem:[#allocation7 + $0x24] sm:$0xff]
    %v2105 = vld [vmem:[#allocation7 + $0x2c] sm:$0xf]
    %v2106 = vld [vmem:[#allocation7 + $0x30] sm:$0xff]
    %v2107 = vld [vmem:[#allocation7 + $0x38] sm:$0xf]
    %v2108 = vld [vmem:[#allocation7 + $0x3c] sm:$0xff]
    %v2109 = vld [vmem:[#allocation7 + $0x44] sm:$0xf]
    %v2110 = vld [vmem:[#allocation7 + $0x48] sm:$0xff]
    %v2111 = vld [vmem:[#allocation7 + $0x50] sm:$0xf]
    %v2112 = vld [vmem:[#allocation7 + $0x54] sm:$0xff]
    %v2113 = vld [vmem:[#allocation7 + $0x5c] sm:$0xf]
    %v2114 = vld [vmem:[#allocation7 + $0x60] sm:$0xff]
    %v2115 = vld [vmem:[#allocation7 + $0x68] sm:$0xf]
    %v2116 = vld [vmem:[#allocation7 + $0x6c] sm:$0xff]
    %v2117 = vld [vmem:[#allocation7 + $0x74] sm:$0xf]
    %v2118 = vld [vmem:[#allocation7 + $0x78] sm:$0xff]
    %v2119 = vld [vmem:[#allocation7 + $0x80] sm:$0xf]
    %v2120 = vld [vmem:[#allocation7 + $0x84] sm:$0xff]
    %v2121 = vld [vmem:[#allocation7 + $0x8c] sm:$0xf]
    %v2122 = vld [vmem:[#allocation7 + $0x90] sm:$0xff]
    %v2123 = vld [vmem:[#allocation7 + $0x98] sm:$0xf]
    %v2124 = vld [vmem:[#allocation7 + $0x9c] sm:$0xff]
    %v2125 = vld [vmem:[#allocation7 + $0xa4] sm:$0xf]
    %v2126 = vld [vmem:[#allocation7 + $0xa8] sm:$0xff]
    %v2127 = vld [vmem:[#allocation7 + $0xb0] sm:$0xf]
    %v2128 = vld [vmem:[#allocation7 + $0xb4] sm:$0xff]
    %v2129 = vld [vmem:[#allocation7 + $0xbc] sm:$0xf]
    %v2130 = vld [vmem:[#allocation7 + $0xc0] sm:$0xff]
    %v2131 = vld [vmem:[#allocation7 + $0xc8] sm:$0xf]
    %v2132 = vld [vmem:[#allocation7 + $0xcc] sm:$0xff]
    %v2133 = vld [vmem:[#allocation7 + $0xd4] sm:$0xf]
    %v2134 = vld [vmem:[#allocation7 + $0xd8] sm:$0xff]
    %v2135 = vld [vmem:[#allocation7 + $0xe0] sm:$0xf]
    %v2136 = vld [vmem:[#allocation7 + $0xe4] sm:$0xff]
    %v2137 = vld [vmem:[#allocation7 + $0xec] sm:$0xf]
    %v2138 = vld [vmem:[#allocation7 + $0xf0] sm:$0xff]
    %v2139 = vld [vmem:[#allocation7 + $0xf8] sm:$0xf]
    %v2140 = vld [vmem:[#allocation7 + $0xfc] sm:$0xff]
    %v2141 = vld [vmem:[#allocation7 + $0x104] sm:$0xf]
    %v2142 = vld [vmem:[#allocation7 + $0x108] sm:$0xff]
    %v2143 = vld [vmem:[#allocation7 + $0x110] sm:$0xf]
    %v2144 = vld [vmem:[#allocation7 + $0x114] sm:$0xff]
    %v2145 = vld [vmem:[#allocation7 + $0x11c] sm:$0xf]
    %v2146 = vld [vmem:[#allocation7 + $0x120] sm:$0xff]
    %v2147 = vld [vmem:[#allocation7 + $0x128] sm:$0xf]
    %v2148 = vld [vmem:[#allocation7 + $0x12c] sm:$0xff]
    %v2149 = vld [vmem:[#allocation7 + $0x134] sm:$0xf]
    %v2150 = vld [vmem:[#allocation7 + $0x138] sm:$0xff]
    %v2151 = vld [vmem:[#allocation7 + $0x140] sm:$0xf]
    %v2152 = vld [vmem:[#allocation7 + $0x144] sm:$0xff]
    %v2153 = vld [vmem:[#allocation7 + $0x14c] sm:$0xf]
    %v2154 = vld [vmem:[#allocation7 + $0x150] sm:$0xff]
    %v2155 = vld [vmem:[#allocation7 + $0x158] sm:$0xf]
    %v2156 = vld [vmem:[#allocation7 + $0x15c] sm:$0xff]
    %v2157 = vld [vmem:[#allocation7 + $0x164] sm:$0xf]
    %v2158 = vld [vmem:[#allocation7 + $0x168] sm:$0xff]
    %v2159 = vld [vmem:[#allocation7 + $0x170] sm:$0xf]
    %v2160 = vld [vmem:[#allocation7 + $0x174] sm:$0xff]
    %v2161 = vld [vmem:[#allocation7 + $0x17c] sm:$0xf]
    %v2162 = vld [vmem:[#allocation7 + $0x180] sm:$0xff]
    %v2163 = vld [vmem:[#allocation7 + $0x188] sm:$0xf]
    %v2164 = vld [vmem:[#allocation7 + $0x18c] sm:$0xff]
    %v2165 = vld [vmem:[#allocation7 + $0x194] sm:$0xf]
    %v2166 = vld [vmem:[#allocation7 + $0x198] sm:$0xff]
    %v2167 = vld [vmem:[#allocation7 + $0x1a0] sm:$0xf]
    %v2168 = vld [vmem:[#allocation7 + $0x1a4] sm:$0xff]
    %v2169 = vld [vmem:[#allocation7 + $0x1ac] sm:$0xf]
    %v2170 = vld [vmem:[#allocation7 + $0x1b0] sm:$0xff]
    %v2171 = vld [vmem:[#allocation7 + $0x1b8] sm:$0xf]
    %v2172 = vld [vmem:[#allocation7 + $0x1bc] sm:$0xff]
    %v2173 = vld [vmem:[#allocation7 + $0x1c4] sm:$0xf]
    %v2174 = vld [vmem:[#allocation7 + $0x1c8] sm:$0xff]
    %v2175 = vld [vmem:[#allocation7 + $0x1d0] sm:$0xf]
    %v2176 = vld [vmem:[#allocation7 + $0x1d4] sm:$0xff]
    %v2177 = vld [vmem:[#allocation7 + $0x1dc] sm:$0xf]
    %v2178 = vld [vmem:[#allocation7 + $0x1e0] sm:$0xff]
    %v2179 = vld [vmem:[#allocation7 + $0x1e8] sm:$0xf]
    %v2180 = vld [vmem:[#allocation7 + $0x1ec] sm:$0xff]
    %v2181 = vld [vmem:[#allocation7 + $0x1f4] sm:$0xf]
    %v2182 = vld [vmem:[#allocation7 + $0x1f8] sm:$0xff]
    %v2183 = vld [vmem:[#allocation7 + $0x200] sm:$0xf]
    %v2184 = vld [vmem:[#allocation7 + $0x204] sm:$0xff]
    %v2185 = vld [vmem:[#allocation7 + $0x20c] sm:$0xf]
    %v2186 = vld [vmem:[#allocation7 + $0x210] sm:$0xff]
    %v2187 = vld [vmem:[#allocation7 + $0x218] sm:$0xf]
    %v2188 = vld [vmem:[#allocation7 + $0x21c] sm:$0xff]
    %v2189 = vld [vmem:[#allocation7 + $0x224] sm:$0xf]
    %v2190 = vld [vmem:[#allocation7 + $0x228] sm:$0xff]
    %v2191 = vld [vmem:[#allocation7 + $0x230] sm:$0xf]
    %v2192 = vld [vmem:[#allocation7 + $0x234] sm:$0xff]
    %v2193 = vld [vmem:[#allocation7 + $0x23c] sm:$0xf]
    %v2194 = vld [vmem:[#allocation7 + $0x240] sm:$0xff]
    %v2195 = vld [vmem:[#allocation7 + $0x248] sm:$0xf]
    %v2196 = vld [vmem:[#allocation7 + $0x24c] sm:$0xff]
    %v2197 = vld [vmem:[#allocation7 + $0x254] sm:$0xf]
    %v2198 = vld [vmem:[#allocation7 + $0x258] sm:$0xff]
    %v2199 = vld [vmem:[#allocation7 + $0x260] sm:$0xf]
    %v2200 = vld [vmem:[#allocation7 + $0x264] sm:$0xff]
    %v2201 = vld [vmem:[#allocation7 + $0x26c] sm:$0xf]
    %v2202 = vld [vmem:[#allocation7 + $0x270] sm:$0xff]
    %v2203 = vld [vmem:[#allocation7 + $0x278] sm:$0xf]
    %v2204 = vld [vmem:[#allocation7 + $0x27c] sm:$0xff]
    %v2205 = vld [vmem:[#allocation7 + $0x284] sm:$0xf]
    %v2206 = vld [vmem:[#allocation7 + $0x288] sm:$0xff]
    %v2207 = vld [vmem:[#allocation7 + $0x290] sm:$0xf]
    %v2208 = vld [vmem:[#allocation7 + $0x294] sm:$0xff]
    %v2209 = vld [vmem:[#allocation7 + $0x29c] sm:$0xf]
    %v2210 = vld [vmem:[#allocation7 + $0x2a0] sm:$0xff]
    %v2211 = vld [vmem:[#allocation7 + $0x2a8] sm:$0xf]
    %v2212 = vld [vmem:[#allocation7 + $0x2ac] sm:$0xff]
    %v2213 = vld [vmem:[#allocation7 + $0x2b4] sm:$0xf]
    %v2214 = vld [vmem:[#allocation7 + $0x2b8] sm:$0xff]
    %v2215 = vld [vmem:[#allocation7 + $0x2c0] sm:$0xf]
    %v2216 = vld [vmem:[#allocation7 + $0x2c4] sm:$0xff]
    %v2217 = vld [vmem:[#allocation7 + $0x2cc] sm:$0xf]
    %v2218 = vld [vmem:[#allocation7 + $0x2d0] sm:$0xff]
    %v2219 = vld [vmem:[#allocation7 + $0x2d8] sm:$0xf]
    %v2220 = vld [vmem:[#allocation7 + $0x2dc] sm:$0xff]
    %v2221 = vld [vmem:[#allocation7 + $0x2e4] sm:$0xf]
    %v2222 = vld [vmem:[#allocation7 + $0x2e8] sm:$0xff]
    %v2223 = vld [vmem:[#allocation7 + $0x2f0] sm:$0xf]
    %v2224 = vld [vmem:[#allocation7 + $0x2f4] sm:$0xff]
    %v2225 = vld [vmem:[#allocation7 + $0x2fc] sm:$0xf]
    %v2226 = vld [vmem:[%s7] sm:$0x7]
    %v2228 = vlaneseq
    %v2229 = vshrl.u32 %v2228, 7
    %v2230 = vsub.s32 0, %v2229
    %v2231 = vrot.slane %v2226, %v2230
    %v2232 = vlaneseq
    %v2233 = vshrl.u32 %v2232, 7
    %v2234 = vsub.s32 1, %v2233
    %v2235 = vrot.slane %v2226, %v2234
    %v2236 = vlaneseq
    %v2237 = vshrl.u32 %v2236, 7
    %v2238 = vsub.s32 2, %v2237
    %v2239 = vrot.slane %v2226, %v2238
    %v2371 = vunpack.c.l.b16 %v2098
    %v2372 = vunpack.c.h.b16 %v2098
    %v2373 = vunpack.c.l.b16 %v2099
    %v2374 = vunpack.c.l.b16 %v2100
    %v2375 = vunpack.c.h.b16 %v2100
    %v2376 = vunpack.c.l.b16 %v2101
    %v2377 = vunpack.c.l.b16 %v2102
    %v2378 = vunpack.c.h.b16 %v2102
    %v2379 = vunpack.c.l.b16 %v2103
    %v2380 = vunpack.c.l.b16 %v2104
    %v2381 = vunpack.c.h.b16 %v2104
    %v2382 = vunpack.c.l.b16 %v2105
    %v2383 = vunpack.c.l.b16 %v2106
    %v2384 = vunpack.c.h.b16 %v2106
    %v2385 = vunpack.c.l.b16 %v2107
    %v2386 = vunpack.c.l.b16 %v2108
    %v2387 = vunpack.c.h.b16 %v2108
    %v2388 = vunpack.c.l.b16 %v2109
    %v2389 = vunpack.c.l.b16 %v2110
    %v2390 = vunpack.c.h.b16 %v2110
    %v2391 = vunpack.c.l.b16 %v2111
    %v2392 = vunpack.c.l.b16 %v2112
    %v2393 = vunpack.c.h.b16 %v2112
    %v2394 = vunpack.c.l.b16 %v2113
    %v2395 = vunpack.c.l.b16 %v2114
    %v2396 = vunpack.c.h.b16 %v2114
    %v2397 = vunpack.c.l.b16 %v2115
    %v2398 = vunpack.c.l.b16 %v2116
    %v2399 = vunpack.c.h.b16 %v2116
    %v2400 = vunpack.c.l.b16 %v2117
    %v2401 = vunpack.c.l.b16 %v2118
    %v2402 = vunpack.c.h.b16 %v2118
    %v2403 = vunpack.c.l.b16 %v2119
    %v2404 = vunpack.c.l.b16 %v2120
    %v2405 = vunpack.c.h.b16 %v2120
    %v2406 = vunpack.c.l.b16 %v2121
    %v2407 = vunpack.c.l.b16 %v2122
    %v2408 = vunpack.c.h.b16 %v2122
    %v2409 = vunpack.c.l.b16 %v2123
    %v2410 = vunpack.c.l.b16 %v2124
    %v2411 = vunpack.c.h.b16 %v2124
    %v2412 = vunpack.c.l.b16 %v2125
    %v2413 = vunpack.c.l.b16 %v2126
    %v2414 = vunpack.c.h.b16 %v2126
    %v2415 = vunpack.c.l.b16 %v2127
    %v2416 = vunpack.c.l.b16 %v2128
    %v2417 = vunpack.c.h.b16 %v2128
    %v2418 = vunpack.c.l.b16 %v2129
    %v2419 = vunpack.c.l.b16 %v2130
    %v2420 = vunpack.c.h.b16 %v2130
    %v2421 = vunpack.c.l.b16 %v2131
    %v2422 = vunpack.c.l.b16 %v2132
    %v2423 = vunpack.c.h.b16 %v2132
    %v2424 = vunpack.c.l.b16 %v2133
    %v2425 = vunpack.c.l.b16 %v2134
    %v2426 = vunpack.c.h.b16 %v2134
    %v2427 = vunpack.c.l.b16 %v2135
    %v2428 = vunpack.c.l.b16 %v2136
    %v2429 = vunpack.c.h.b16 %v2136
    %v2430 = vunpack.c.l.b16 %v2137
    %v2431 = vunpack.c.l.b16 %v2138
    %v2432 = vunpack.c.h.b16 %v2138
    %v2433 = vunpack.c.l.b16 %v2139
    %v2434 = vunpack.c.l.b16 %v2140
    %v2435 = vunpack.c.h.b16 %v2140
    %v2436 = vunpack.c.l.b16 %v2141
    %v2437 = vunpack.c.l.b16 %v2142
    %v2438 = vunpack.c.h.b16 %v2142
    %v2439 = vunpack.c.l.b16 %v2143
    %v2440 = vunpack.c.l.b16 %v2144
    %v2441 = vunpack.c.h.b16 %v2144
    %v2442 = vunpack.c.l.b16 %v2145
    %v2443 = vunpack.c.l.b16 %v2146
    %v2444 = vunpack.c.h.b16 %v2146
    %v2445 = vunpack.c.l.b16 %v2147
    %v2446 = vunpack.c.l.b16 %v2148
    %v2447 = vunpack.c.h.b16 %v2148
    %v2448 = vunpack.c.l.b16 %v2149
    %v2449 = vunpack.c.l.b16 %v2150
    %v2450 = vunpack.c.h.b16 %v2150
    %v2451 = vunpack.c.l.b16 %v2151
    %v2452 = vunpack.c.l.b16 %v2152
    %v2453 = vunpack.c.h.b16 %v2152
    %v2454 = vunpack.c.l.b16 %v2153
    %v2455 = vunpack.c.l.b16 %v2154
    %v2456 = vunpack.c.h.b16 %v2154
    %v2457 = vunpack.c.l.b16 %v2155
    %v2458 = vunpack.c.l.b16 %v2156
    %v2459 = vunpack.c.h.b16 %v2156
    %v2460 = vunpack.c.l.b16 %v2157
    %v2461 = vunpack.c.l.b16 %v2158
    %v2462 = vunpack.c.h.b16 %v2158
    %v2463 = vunpack.c.l.b16 %v2159
    %v2464 = vunpack.c.l.b16 %v2160
    %v2465 = vunpack.c.h.b16 %v2160
    %v2466 = vunpack.c.l.b16 %v2161
    %v2467 = vunpack.c.l.b16 %v2162
    %v2468 = vunpack.c.h.b16 %v2162
    %v2469 = vunpack.c.l.b16 %v2163
    %v2470 = vunpack.c.l.b16 %v2164
    %v2471 = vunpack.c.h.b16 %v2164
    %v2472 = vunpack.c.l.b16 %v2165
    %v2473 = vunpack.c.l.b16 %v2166
    %v2474 = vunpack.c.h.b16 %v2166
    %v2475 = vunpack.c.l.b16 %v2167
    %v2476 = vunpack.c.l.b16 %v2168
    %v2477 = vunpack.c.h.b16 %v2168
    %v2478 = vunpack.c.l.b16 %v2169
    %v2479 = vunpack.c.l.b16 %v2170
    %v2480 = vunpack.c.h.b16 %v2170
    %v2481 = vunpack.c.l.b16 %v2171
    %v2482 = vunpack.c.l.b16 %v2172
    %v2483 = vunpack.c.h.b16 %v2172
    %v2484 = vunpack.c.l.b16 %v2173
    %v2485 = vunpack.c.l.b16 %v2174
    %v2486 = vunpack.c.h.b16 %v2174
    %v2487 = vunpack.c.l.b16 %v2175
    %v2488 = vunpack.c.l.b16 %v2176
    %v2489 = vunpack.c.h.b16 %v2176
    %v2490 = vunpack.c.l.b16 %v2177
    %v2491 = vunpack.c.l.b16 %v2178
    %v2492 = vunpack.c.h.b16 %v2178
    %v2493 = vunpack.c.l.b16 %v2179
    %v2494 = vunpack.c.l.b16 %v2180
    %v2495 = vunpack.c.h.b16 %v2180
    %v2496 = vunpack.c.l.b16 %v2181
    %v2497 = vunpack.c.l.b16 %v2182
    %v2498 = vunpack.c.h.b16 %v2182
    %v2499 = vunpack.c.l.b16 %v2183
    %v2500 = vunpack.c.l.b16 %v2184
    %v2501 = vunpack.c.h.b16 %v2184
    %v2502 = vunpack.c.l.b16 %v2185
    %v2503 = vunpack.c.l.b16 %v2186
    %v2504 = vunpack.c.h.b16 %v2186
    %v2505 = vunpack.c.l.b16 %v2187
    %v2506 = vunpack.c.l.b16 %v2188
    %v2507 = vunpack.c.h.b16 %v2188
    %v2508 = vunpack.c.l.b16 %v2189
    %v2509 = vunpack.c.l.b16 %v2190
    %v2510 = vunpack.c.h.b16 %v2190
    %v2511 = vunpack.c.l.b16 %v2191
    %v2512 = vunpack.c.l.b16 %v2192
    %v2513 = vunpack.c.h.b16 %v2192
    %v2514 = vunpack.c.l.b16 %v2193
    %v2515 = vunpack.c.l.b16 %v2194
    %v2516 = vunpack.c.h.b16 %v2194
    %v2517 = vunpack.c.l.b16 %v2195
    %v2518 = vunpack.c.l.b16 %v2196
    %v2519 = vunpack.c.h.b16 %v2196
    %v2520 = vunpack.c.l.b16 %v2197
    %v2521 = vunpack.c.l.b16 %v2198
    %v2522 = vunpack.c.h.b16 %v2198
    %v2523 = vunpack.c.l.b16 %v2199
    %v2524 = vunpack.c.l.b16 %v2200
    %v2525 = vunpack.c.h.b16 %v2200
    %v2526 = vunpack.c.l.b16 %v2201
    %v2527 = vunpack.c.l.b16 %v2202
    %v2528 = vunpack.c.h.b16 %v2202
    %v2529 = vunpack.c.l.b16 %v2203
    %v2530 = vunpack.c.l.b16 %v2204
    %v2531 = vunpack.c.h.b16 %v2204
    %v2532 = vunpack.c.l.b16 %v2205
    %v2533 = vunpack.c.l.b16 %v2206
    %v2534 = vunpack.c.h.b16 %v2206
    %v2535 = vunpack.c.l.b16 %v2207
    %v2536 = vunpack.c.l.b16 %v2208
    %v2537 = vunpack.c.h.b16 %v2208
    %v2538 = vunpack.c.l.b16 %v2209
    %v2539 = vunpack.c.l.b16 %v2210
    %v2540 = vunpack.c.h.b16 %v2210
    %v2541 = vunpack.c.l.b16 %v2211
    %v2542 = vunpack.c.l.b16 %v2212
    %v2543 = vunpack.c.h.b16 %v2212
    %v2544 = vunpack.c.l.b16 %v2213
    %v2545 = vunpack.c.l.b16 %v2214
    %v2546 = vunpack.c.h.b16 %v2214
    %v2547 = vunpack.c.l.b16 %v2215
    %v2548 = vunpack.c.l.b16 %v2216
    %v2549 = vunpack.c.h.b16 %v2216
    %v2550 = vunpack.c.l.b16 %v2217
    %v2551 = vunpack.c.l.b16 %v2218
    %v2552 = vunpack.c.h.b16 %v2218
    %v2553 = vunpack.c.l.b16 %v2219
    %v2554 = vunpack.c.l.b16 %v2220
    %v2555 = vunpack.c.h.b16 %v2220
    %v2556 = vunpack.c.l.b16 %v2221
    %v2557 = vunpack.c.l.b16 %v2222
    %v2558 = vunpack.c.h.b16 %v2222
    %v2559 = vunpack.c.l.b16 %v2223
    %v2560 = vunpack.c.l.b16 %v2224
    %v2561 = vunpack.c.h.b16 %v2224
    %v2562 = vunpack.c.l.b16 %v2225
    %v2563 = vpack.c.b16 %v2374, %v2371
    %v2564 = vpack.c.b16 %v2375, %v2372
    %v2565 = vpack.c.b16 %v2376, %v2373
    %v2566 = vpack.c.b16 %v2380, %v2377
    %v2567 = vpack.c.b16 %v2381, %v2378
    %v2568 = vpack.c.b16 %v2382, %v2379
    %v2569 = vpack.c.b16 %v2386, %v2383
    %v2570 = vpack.c.b16 %v2387, %v2384
    %v2571 = vpack.c.b16 %v2388, %v2385
    %v2572 = vpack.c.b16 %v2392, %v2389
    %v2573 = vpack.c.b16 %v2393, %v2390
    %v2574 = vpack.c.b16 %v2394, %v2391
    %v2575 = vpack.c.b16 %v2398, %v2395
    %v2576 = vpack.c.b16 %v2399, %v2396
    %v2577 = vpack.c.b16 %v2400, %v2397
    %v2578 = vpack.c.b16 %v2404, %v2401
    %v2579 = vpack.c.b16 %v2405, %v2402
    %v2580 = vpack.c.b16 %v2406, %v2403
    %v2581 = vpack.c.b16 %v2410, %v2407
    %v2582 = vpack.c.b16 %v2411, %v2408
    %v2583 = vpack.c.b16 %v2412, %v2409
    %v2584 = vpack.c.b16 %v2416, %v2413
    %v2585 = vpack.c.b16 %v2417, %v2414
    %v2586 = vpack.c.b16 %v2418, %v2415
    %v2587 = vpack.c.b16 %v2422, %v2419
    %v2588 = vpack.c.b16 %v2423, %v2420
    %v2589 = vpack.c.b16 %v2424, %v2421
    %v2590 = vpack.c.b16 %v2428, %v2425
    %v2591 = vpack.c.b16 %v2429, %v2426
    %v2592 = vpack.c.b16 %v2430, %v2427
    %v2593 = vpack.c.b16 %v2434, %v2431
    %v2594 = vpack.c.b16 %v2435, %v2432
    %v2595 = vpack.c.b16 %v2436, %v2433
    %v2596 = vpack.c.b16 %v2440, %v2437
    %v2597 = vpack.c.b16 %v2441, %v2438
    %v2598 = vpack.c.b16 %v2442, %v2439
    %v2599 = vpack.c.b16 %v2446, %v2443
    %v2600 = vpack.c.b16 %v2447, %v2444
    %v2601 = vpack.c.b16 %v2448, %v2445
    %v2602 = vpack.c.b16 %v2452, %v2449
    %v2603 = vpack.c.b16 %v2453, %v2450
    %v2604 = vpack.c.b16 %v2454, %v2451
    %v2605 = vpack.c.b16 %v2458, %v2455
    %v2606 = vpack.c.b16 %v2459, %v2456
    %v2607 = vpack.c.b16 %v2460, %v2457
    %v2608 = vpack.c.b16 %v2464, %v2461
    %v2609 = vpack.c.b16 %v2465, %v2462
    %v2610 = vpack.c.b16 %v2466, %v2463
    %v2611 = vpack.c.b16 %v2470, %v2467
    %v2612 = vpack.c.b16 %v2471, %v2468
    %v2613 = vpack.c.b16 %v2472, %v2469
    %v2614 = vpack.c.b16 %v2476, %v2473
    %v2615 = vpack.c.b16 %v2477, %v2474
    %v2616 = vpack.c.b16 %v2478, %v2475
    %v2617 = vpack.c.b16 %v2482, %v2479
    %v2618 = vpack.c.b16 %v2483, %v2480
    %v2619 = vpack.c.b16 %v2484, %v2481
    %v2620 = vpack.c.b16 %v2488, %v2485
    %v2621 = vpack.c.b16 %v2489, %v2486
    %v2622 = vpack.c.b16 %v2490, %v2487
    %v2623 = vpack.c.b16 %v2494, %v2491
    %v2624 = vpack.c.b16 %v2495, %v2492
    %v2625 = vpack.c.b16 %v2496, %v2493
    %v2626 = vpack.c.b16 %v2500, %v2497
    %v2627 = vpack.c.b16 %v2501, %v2498
    %v2628 = vpack.c.b16 %v2502, %v2499
    %v2629 = vpack.c.b16 %v2506, %v2503
    %v2630 = vpack.c.b16 %v2507, %v2504
    %v2631 = vpack.c.b16 %v2508, %v2505
    %v2632 = vpack.c.b16 %v2512, %v2509
    %v2633 = vpack.c.b16 %v2513, %v2510
    %v2634 = vpack.c.b16 %v2514, %v2511
    %v2635 = vpack.c.b16 %v2518, %v2515
    %v2636 = vpack.c.b16 %v2519, %v2516
    %v2637 = vpack.c.b16 %v2520, %v2517
    %v2638 = vpack.c.b16 %v2524, %v2521
    %v2639 = vpack.c.b16 %v2525, %v2522
    %v2640 = vpack.c.b16 %v2526, %v2523
    %v2641 = vpack.c.b16 %v2530, %v2527
    %v2642 = vpack.c.b16 %v2531, %v2528
    %v2643 = vpack.c.b16 %v2532, %v2529
    %v2644 = vpack.c.b16 %v2536, %v2533
    %v2645 = vpack.c.b16 %v2537, %v2534
    %v2646 = vpack.c.b16 %v2538, %v2535
    %v2647 = vpack.c.b16 %v2542, %v2539
    %v2648 = vpack.c.b16 %v2543, %v2540
    %v2649 = vpack.c.b16 %v2544, %v2541
    %v2650 = vpack.c.b16 %v2548, %v2545
    %v2651 = vpack.c.b16 %v2549, %v2546
    %v2652 = vpack.c.b16 %v2550, %v2547
    %v2653 = vpack.c.b16 %v2554, %v2551
    %v2654 = vpack.c.b16 %v2555, %v2552
    %v2655 = vpack.c.b16 %v2556, %v2553
    %v2656 = vpack.c.b16 %v2560, %v2557
    %v2657 = vpack.c.b16 %v2561, %v2558
    %v2658 = vpack.c.b16 %v2562, %v2559
    %2755 = vmatprep.subr.bf16.mxu0 %v2564
    %2756 = vmatpush1.bf16.msra.mxu0 %v2563
    %2757 = vmatprep.subr.bf16.mxu0 %v2567
    %2758 = vmatpush1.bf16.msra.mxu0 %v2566
    %2759 = vmatprep.subr.bf16.mxu0 %v2570
    %2760 = vmatpush1.bf16.msra.mxu0 %v2569
    %2761 = vmatprep.subr.bf16.mxu0 %v2573
    %2762 = vmatpush1.bf16.msra.mxu0 %v2572
    %2763 = vmatprep.subr.bf16.mxu0 %v2576
    %2764 = vmatpush1.bf16.msra.mxu0 %v2575
    %2765 = vmatprep.subr.bf16.mxu0 %v2579
    %2766 = vmatpush1.bf16.msra.mxu0 %v2578
    %2767 = vmatprep.subr.bf16.mxu0 %v2582
    %2768 = vmatpush1.bf16.msra.mxu0 %v2581
    %2769 = vmatprep.subr.bf16.mxu0 %v2585
    %2770 = vmatpush1.bf16.msra.mxu0 %v2584
    %2771 = vmatprep.subr.bf16.mxu0 %v2588
    %2772 = vmatpush1.bf16.msra.mxu0 %v2587
    %2773 = vmatprep.subr.bf16.mxu0 %v2591
    %2774 = vmatpush1.bf16.msra.mxu0 %v2590
    %2775 = vmatprep.subr.bf16.mxu0 %v2594
    %2776 = vmatpush1.bf16.msra.mxu0 %v2593
    %2777 = vmatprep.subr.bf16.mxu0 %v2597
    %2778 = vmatpush1.bf16.msra.mxu0 %v2596
    %2779 = vmatprep.subr.bf16.mxu0 %v2600
    %2780 = vmatpush1.bf16.msra.mxu0 %v2599
    %2781 = vmatprep.subr.bf16.mxu0 %v2603
    %2782 = vmatpush1.bf16.msra.mxu0 %v2602
    %2783 = vmatprep.subr.bf16.mxu0 %v2606
    %2784 = vmatpush1.bf16.msra.mxu0 %v2605
    %2785 = vmatprep.subr.bf16.mxu0 %v2609
    %2786 = vmatpush1.bf16.msra.mxu0 %v2608
    %2787 = vmatprep.mubr.bf16.mxu0 %v2095
    %2788 = vmatmul.mubr.bf16.gmra.mrb[0].mxu0 %v2094
    %v2789 = vpop.f32.mrb[0].mxu0
    %v2790 = vadd.f32 %v2231, %v2789
    %v2791 = vpop.f32.mrb[0].mxu0
    %v2792 = vadd.f32 %v2235, %v2791
    %v2793 = vpop.f32.mrb[0].mxu0
    %v2794 = vpop.f32.mrb[0].mxu0
    %2795 = vdwg.mxu0
    %2796 = vmatprep.subr.bf16.mxu0 %v2612
    %2797 = vmatpush1.bf16.msra.mxu0 %v2611
    %2798 = vmatprep.subr.bf16.mxu0 %v2615
    %2799 = vmatpush1.bf16.msra.mxu0 %v2614
    %2800 = vmatprep.subr.bf16.mxu0 %v2618
    %2801 = vmatpush1.bf16.msra.mxu0 %v2617
    %2802 = vmatprep.subr.bf16.mxu0 %v2621
    %2803 = vmatpush1.bf16.msra.mxu0 %v2620
    %2804 = vmatprep.subr.bf16.mxu0 %v2624
    %2805 = vmatpush1.bf16.msra.mxu0 %v2623
    %2806 = vmatprep.subr.bf16.mxu0 %v2627
    %2807 = vmatpush1.bf16.msra.mxu0 %v2626
    %2808 = vmatprep.subr.bf16.mxu0 %v2630
    %2809 = vmatpush1.bf16.msra.mxu0 %v2629
    %2810 = vmatprep.subr.bf16.mxu0 %v2633
    %2811 = vmatpush1.bf16.msra.mxu0 %v2632
    %2812 = vmatprep.subr.bf16.mxu0 %v2636
    %2813 = vmatpush1.bf16.msra.mxu0 %v2635
    %2814 = vmatprep.subr.bf16.mxu0 %v2639
    %2815 = vmatpush1.bf16.msra.mxu0 %v2638
    %2816 = vmatprep.subr.bf16.mxu0 %v2642
    %2817 = vmatpush1.bf16.msra.mxu0 %v2641
    %2818 = vmatprep.subr.bf16.mxu0 %v2645
    %2819 = vmatpush1.bf16.msra.mxu0 %v2644
    %2820 = vmatprep.subr.bf16.mxu0 %v2648
    %2821 = vmatpush1.bf16.msra.mxu0 %v2647
    %2822 = vmatprep.subr.bf16.mxu0 %v2651
    %2823 = vmatpush1.bf16.msra.mxu0 %v2650
    %2824 = vmatprep.subr.bf16.mxu0 %v2654
    %2825 = vmatpush1.bf16.msra.mxu0 %v2653
    %2826 = vmatprep.subr.bf16.mxu0 %v2657
    %2827 = vmatpush1.bf16.msra.mxu0 %v2656
    %2828 = vmatprep.mubr.bf16.mxu0 %v2097
    %2829 = vmatmul.mubr.bf16.gmra.mrb[0].mxu0 %v2096
    %v2830 = vpop.f32.mrb[0].mxu0
    %v2831 = vadd.f32 %v2790, %v2830
    %v2832 = vpop.f32.mrb[0].mxu0
    %v2833 = vadd.f32 %v2792, %v2832
    %v2834 = vpop.f32.mrb[0].mxu0
    %v2835 = vpop.f32.mrb[0].mxu0
    %2836 = vdwg.mxu0
    %2837 = vmatprep.subr.bf16.mxu0 0
    %2838 = vmatpush1.bf16.msra.mxu0 %v2565
    %2839 = vmatprep.subr.bf16.mxu0 0
    %2840 = vmatpush1.bf16.msra.mxu0 %v2568
    %2841 = vmatprep.subr.bf16.mxu0 0
    %2842 = vmatpush1.bf16.msra.mxu0 %v2571
    %2843 = vmatprep.subr.bf16.mxu0 0
    %2844 = vmatpush1.bf16.msra.mxu0 %v2574
    %2845 = vmatprep.subr.bf16.mxu0 0
    %2846 = vmatpush1.bf16.msra.mxu0 %v2577
    %2847 = vmatprep.subr.bf16.mxu0 0
    %2848 = vmatpush1.bf16.msra.mxu0 %v2580
    %2849 = vmatprep.subr.bf16.mxu0 0
    %2850 = vmatpush1.bf16.msra.mxu0 %v2583
    %2851 = vmatprep.subr.bf16.mxu0 0
    %2852 = vmatpush1.bf16.msra.mxu0 %v2586
    %2853 = vmatprep.subr.bf16.mxu0 0
    %2854 = vmatpush1.bf16.msra.mxu0 %v2589
    %2855 = vmatprep.subr.bf16.mxu0 0
    %2856 = vmatpush1.bf16.msra.mxu0 %v2592
    %2857 = vmatprep.subr.bf16.mxu0 0
    %2858 = vmatpush1.bf16.msra.mxu0 %v2595
    %2859 = vmatprep.subr.bf16.mxu0 0
    %2860 = vmatpush1.bf16.msra.mxu0 %v2598
    %2861 = vmatprep.subr.bf16.mxu0 0
    %2862 = vmatpush1.bf16.msra.mxu0 %v2601
    %2863 = vmatprep.subr.bf16.mxu0 0
    %2864 = vmatpush1.bf16.msra.mxu0 %v2604
    %2865 = vmatprep.subr.bf16.mxu0 0
    %2866 = vmatpush1.bf16.msra.mxu0 %v2607
    %2867 = vmatprep.subr.bf16.mxu0 0
    %2868 = vmatpush1.bf16.msra.mxu0 %v2610
    %2869 = vmatprep.mubr.bf16.mxu0 %v2095
    %2870 = vmatmul.mubr.bf16.gmra.mrb[0].mxu0 %v2094
    %v2871 = vpop.f32.mrb[0].mxu0
    %v2872 = vadd.f32 %v2239, %v2871
    %v2873 = vpop.f32.mrb[0].mxu0
    %v2874 = vpop.f32.mrb[0].mxu0
    %v2875 = vpop.f32.mrb[0].mxu0
    %2876 = vdwg.mxu0
    %2877 = vmatprep.subr.bf16.mxu0 0
    %2878 = vmatpush1.bf16.msra.mxu0 %v2613
    %2879 = vmatprep.subr.bf16.mxu0 0
    %2880 = vmatpush1.bf16.msra.mxu0 %v2616
    %2881 = vmatprep.subr.bf16.mxu0 0
    %2882 = vmatpush1.bf16.msra.mxu0 %v2619
    %2883 = vmatprep.subr.bf16.mxu0 0
    %2884 = vmatpush1.bf16.msra.mxu0 %v2622
    %2885 = vmatprep.subr.bf16.mxu0 0
    %2886 = vmatpush1.bf16.msra.mxu0 %v2625
    %2887 = vmatprep.subr.bf16.mxu0 0
    %2888 = vmatpush1.bf16.msra.mxu0 %v2628
    %2889 = vmatprep.subr.bf16.mxu0 0
    %2890 = vmatpush1.bf16.msra.mxu0 %v2631
    %2891 = vmatprep.subr.bf16.mxu0 0
    %2892 = vmatpush1.bf16.msra.mxu0 %v2634
    %2893 = vmatprep.subr.bf16.mxu0 0
    %2894 = vmatpush1.bf16.msra.mxu0 %v2637
    %2895 = vmatprep.subr.bf16.mxu0 0
    %2896 = vmatpush1.bf16.msra.mxu0 %v2640
    %2897 = vmatprep.subr.bf16.mxu0 0
    %2898 = vmatpush1.bf16.msra.mxu0 %v2643
    %2899 = vmatprep.subr.bf16.mxu0 0
    %2900 = vmatpush1.bf16.msra.mxu0 %v2646
    %2901 = vmatprep.subr.bf16.mxu0 0
    %2902 = vmatpush1.bf16.msra.mxu0 %v2649
    %2903 = vmatprep.subr.bf16.mxu0 0
    %2904 = vmatpush1.bf16.msra.mxu0 %v2652
    %2905 = vmatprep.subr.bf16.mxu0 0
    %2906 = vmatpush1.bf16.msra.mxu0 %v2655
    %2907 = vmatprep.subr.bf16.mxu0 0
    %2908 = vmatpush1.bf16.msra.mxu0 %v2658
    %2909 = vmatprep.mubr.bf16.mxu0 %v2097
    %2910 = vmatmul.mubr.bf16.gmra.mrb[0].mxu0 %v2096
    %v2911 = vpop.f32.mrb[0].mxu0
    %v2912 = vadd.f32 %v2872, %v2911
    %v2913 = vpop.f32.mrb[0].mxu0
    %v2914 = vpop.f32.mrb[0].mxu0
    %v2915 = vpop.f32.mrb[0].mxu0
    %2916 = vdwg.mxu0
    %v2917 = vmul.f32 %v2831, 0.2
    %v2918 = vmul.f32 %v2833, 0.2
    %v2919 = vmul.f32 %v2912, 0.2
    %v2920 = vmax.f32 %v2831, %v2917
    %v2921 = vmax.f32 %v2833, %v2918
    %v2922 = vmax.f32 %v2912, %v2919
    %v2923 = vpack.c.bf16 %v2920, %v2920
    %v2924 = vpack.c.bf16 %v2921, %v2921
    %v2925 = vpack.c.bf16 %v2922, %v2922
    %v2926 = vld [vmem:[#allocation9] sm:$0xff]
    %v2927 = vld [vmem:[#allocation9 + $0x8] sm:$0xff]
    %v2928 = vld [vmem:[#allocation9 + $0x10] sm:$0xff]
    %v2929 = vld [vmem:[#allocation9 + $0x18] sm:$0xff]
    %v2930 = vld [vmem:[#allocation9 + $0x20] sm:$0xff]
    %v2931 = vld [vmem:[#allocation9 + $0x28] sm:$0xff]
    %v2932 = vld [vmem:[#allocation9 + $0x30] sm:$0xff]
    %v2933 = vld [vmem:[#allocation9 + $0x38] sm:$0xff]
    %v2934 = vld [vmem:[#allocation9 + $0x40] sm:$0xff]
    %v2935 = vld [vmem:[#allocation9 + $0x48] sm:$0xff]
    %v2936 = vld [vmem:[#allocation9 + $0x50] sm:$0xff]
    %v2937 = vld [vmem:[#allocation9 + $0x58] sm:$0xff]
    %v2938 = vld [vmem:[#allocation9 + $0x60] sm:$0xff]
    %v2939 = vld [vmem:[#allocation9 + $0x68] sm:$0xff]
    %v2940 = vld [vmem:[#allocation9 + $0x70] sm:$0xff]
    %v2941 = vld [vmem:[#allocation9 + $0x78] sm:$0xff]
    %v2942 = vld [vmem:[#allocation9 + $0x80] sm:$0xff]
    %v2943 = vld [vmem:[#allocation9 + $0x88] sm:$0xff]
    %v2944 = vld [vmem:[#allocation9 + $0x90] sm:$0xff]
    %v2945 = vld [vmem:[#allocation9 + $0x98] sm:$0xff]
    %v2946 = vld [vmem:[#allocation9 + $0xa0] sm:$0xff]
    %v2947 = vld [vmem:[#allocation9 + $0xa8] sm:$0xff]
    %v2948 = vld [vmem:[#allocation9 + $0xb0] sm:$0xff]
    %v2949 = vld [vmem:[#allocation9 + $0xb8] sm:$0xff]
    %v2950 = vld [vmem:[#allocation9 + $0xc0] sm:$0xff]
    %v2951 = vld [vmem:[#allocation9 + $0xc8] sm:$0xff]
    %v2952 = vld [vmem:[#allocation9 + $0xd0] sm:$0xff]
    %v2953 = vld [vmem:[#allocation9 + $0xd8] sm:$0xff]
    %v2954 = vld [vmem:[#allocation9 + $0xe0] sm:$0xff]
    %v2955 = vld [vmem:[#allocation9 + $0xe8] sm:$0xff]
    %v2956 = vld [vmem:[#allocation9 + $0xf0] sm:$0xff]
    %v2957 = vld [vmem:[#allocation9 + $0xf8] sm:$0xff]
    %v2958 = vld [vmem:[#allocation9 + $0x100] sm:$0xff]
    %v2959 = vld [vmem:[#allocation9 + $0x108] sm:$0xff]
    %v2960 = vld [vmem:[#allocation9 + $0x110] sm:$0xff]
    %v2961 = vld [vmem:[#allocation9 + $0x118] sm:$0xff]
    %v2962 = vld [vmem:[#allocation9 + $0x120] sm:$0xff]
    %v2963 = vld [vmem:[#allocation9 + $0x128] sm:$0xff]
    %v2964 = vld [vmem:[#allocation9 + $0x130] sm:$0xff]
    %v2965 = vld [vmem:[#allocation9 + $0x138] sm:$0xff]
    %v2966 = vld [vmem:[#allocation9 + $0x140] sm:$0xff]
    %v2967 = vld [vmem:[#allocation9 + $0x148] sm:$0xff]
    %v2968 = vld [vmem:[#allocation9 + $0x150] sm:$0xff]
    %v2969 = vld [vmem:[#allocation9 + $0x158] sm:$0xff]
    %v2970 = vld [vmem:[#allocation9 + $0x160] sm:$0xff]
    %v2971 = vld [vmem:[#allocation9 + $0x168] sm:$0xff]
    %v2972 = vld [vmem:[#allocation9 + $0x170] sm:$0xff]
    %v2973 = vld [vmem:[#allocation9 + $0x178] sm:$0xff]
    %v2974 = vld [vmem:[%s9] sm:$0x3]
    %v2976 = vlaneseq
    %v2977 = vshrl.u32 %v2976, 7
    %v2978 = vsub.s32 0, %v2977
    %v2979 = vrot.slane %v2974, %v2978
    %v2980 = vlaneseq
    %v2981 = vshrl.u32 %v2980, 7
    %v2982 = vsub.s32 1, %v2981
    %v2983 = vrot.slane %v2974, %v2982
    %v3034 = vunpack.c.l.b16 %v2926
    %v3035 = vunpack.c.h.b16 %v2926
    %v3036 = vunpack.c.l.b16 %v2927
    %v3037 = vunpack.c.h.b16 %v2927
    %v3038 = vunpack.c.l.b16 %v2928
    %v3039 = vunpack.c.h.b16 %v2928
    %v3040 = vunpack.c.l.b16 %v2929
    %v3041 = vunpack.c.h.b16 %v2929
    %v3042 = vunpack.c.l.b16 %v2930
    %v3043 = vunpack.c.h.b16 %v2930
    %v3044 = vunpack.c.l.b16 %v2931
    %v3045 = vunpack.c.h.b16 %v2931
    %v3046 = vunpack.c.l.b16 %v2932
    %v3047 = vunpack.c.h.b16 %v2932
    %v3048 = vunpack.c.l.b16 %v2933
    %v3049 = vunpack.c.h.b16 %v2933
    %v3050 = vunpack.c.l.b16 %v2934
    %v3051 = vunpack.c.h.b16 %v2934
    %v3052 = vunpack.c.l.b16 %v2935
    %v3053 = vunpack.c.h.b16 %v2935
    %v3054 = vunpack.c.l.b16 %v2936
    %v3055 = vunpack.c.h.b16 %v2936
    %v3056 = vunpack.c.l.b16 %v2937
    %v3057 = vunpack.c.h.b16 %v2937
    %v3058 = vunpack.c.l.b16 %v2938
    %v3059 = vunpack.c.h.b16 %v2938
    %v3060 = vunpack.c.l.b16 %v2939
    %v3061 = vunpack.c.h.b16 %v2939
    %v3062 = vunpack.c.l.b16 %v2940
    %v3063 = vunpack.c.h.b16 %v2940
    %v3064 = vunpack.c.l.b16 %v2941
    %v3065 = vunpack.c.h.b16 %v2941
    %v3066 = vunpack.c.l.b16 %v2942
    %v3067 = vunpack.c.h.b16 %v2942
    %v3068 = vunpack.c.l.b16 %v2943
    %v3069 = vunpack.c.h.b16 %v2943
    %v3070 = vunpack.c.l.b16 %v2944
    %v3071 = vunpack.c.h.b16 %v2944
    %v3072 = vunpack.c.l.b16 %v2945
    %v3073 = vunpack.c.h.b16 %v2945
    %v3074 = vunpack.c.l.b16 %v2946
    %v3075 = vunpack.c.h.b16 %v2946
    %v3076 = vunpack.c.l.b16 %v2947
    %v3077 = vunpack.c.h.b16 %v2947
    %v3078 = vunpack.c.l.b16 %v2948
    %v3079 = vunpack.c.h.b16 %v2948
    %v3080 = vunpack.c.l.b16 %v2949
    %v3081 = vunpack.c.h.b16 %v2949
    %v3082 = vunpack.c.l.b16 %v2950
    %v3083 = vunpack.c.h.b16 %v2950
    %v3084 = vunpack.c.l.b16 %v2951
    %v3085 = vunpack.c.h.b16 %v2951
    %v3086 = vunpack.c.l.b16 %v2952
    %v3087 = vunpack.c.h.b16 %v2952
    %v3088 = vunpack.c.l.b16 %v2953
    %v3089 = vunpack.c.h.b16 %v2953
    %v3090 = vunpack.c.l.b16 %v2954
    %v3091 = vunpack.c.h.b16 %v2954
    %v3092 = vunpack.c.l.b16 %v2955
    %v3093 = vunpack.c.h.b16 %v2955
    %v3094 = vunpack.c.l.b16 %v2956
    %v3095 = vunpack.c.h.b16 %v2956
    %v3096 = vunpack.c.l.b16 %v2957
    %v3097 = vunpack.c.h.b16 %v2957
    %v3098 = vunpack.c.l.b16 %v2958
    %v3099 = vunpack.c.h.b16 %v2958
    %v3100 = vunpack.c.l.b16 %v2959
    %v3101 = vunpack.c.h.b16 %v2959
    %v3102 = vunpack.c.l.b16 %v2960
    %v3103 = vunpack.c.h.b16 %v2960
    %v3104 = vunpack.c.l.b16 %v2961
    %v3105 = vunpack.c.h.b16 %v2961
    %v3106 = vunpack.c.l.b16 %v2962
    %v3107 = vunpack.c.h.b16 %v2962
    %v3108 = vunpack.c.l.b16 %v2963
    %v3109 = vunpack.c.h.b16 %v2963
    %v3110 = vunpack.c.l.b16 %v2964
    %v3111 = vunpack.c.h.b16 %v2964
    %v3112 = vunpack.c.l.b16 %v2965
    %v3113 = vunpack.c.h.b16 %v2965
    %v3114 = vunpack.c.l.b16 %v2966
    %v3115 = vunpack.c.h.b16 %v2966
    %v3116 = vunpack.c.l.b16 %v2967
    %v3117 = vunpack.c.h.b16 %v2967
    %v3118 = vunpack.c.l.b16 %v2968
    %v3119 = vunpack.c.h.b16 %v2968
    %v3120 = vunpack.c.l.b16 %v2969
    %v3121 = vunpack.c.h.b16 %v2969
    %v3122 = vunpack.c.l.b16 %v2970
    %v3123 = vunpack.c.h.b16 %v2970
    %v3124 = vunpack.c.l.b16 %v2971
    %v3125 = vunpack.c.h.b16 %v2971
    %v3126 = vunpack.c.l.b16 %v2972
    %v3127 = vunpack.c.h.b16 %v2972
    %v3128 = vunpack.c.l.b16 %v2973
    %v3129 = vunpack.c.h.b16 %v2973
    %v3130 = vpack.c.b16 %v3036, %v3034
    %v3131 = vpack.c.b16 %v3037, %v3035
    %v3132 = vpack.c.b16 %v3040, %v3038
    %v3133 = vpack.c.b16 %v3041, %v3039
    %v3134 = vpack.c.b16 %v3044, %v3042
    %v3135 = vpack.c.b16 %v3045, %v3043
    %v3136 = vpack.c.b16 %v3048, %v3046
    %v3137 = vpack.c.b16 %v3049, %v3047
    %v3138 = vpack.c.b16 %v3052, %v3050
    %v3139 = vpack.c.b16 %v3053, %v3051
    %v3140 = vpack.c.b16 %v3056, %v3054
    %v3141 = vpack.c.b16 %v3057, %v3055
    %v3142 = vpack.c.b16 %v3060, %v3058
    %v3143 = vpack.c.b16 %v3061, %v3059
    %v3144 = vpack.c.b16 %v3064, %v3062
    %v3145 = vpack.c.b16 %v3065, %v3063
    %v3146 = vpack.c.b16 %v3068, %v3066
    %v3147 = vpack.c.b16 %v3069, %v3067
    %v3148 = vpack.c.b16 %v3072, %v3070
    %v3149 = vpack.c.b16 %v3073, %v3071
    %v3150 = vpack.c.b16 %v3076, %v3074
    %v3151 = vpack.c.b16 %v3077, %v3075
    %v3152 = vpack.c.b16 %v3080, %v3078
    %v3153 = vpack.c.b16 %v3081, %v3079
    %v3154 = vpack.c.b16 %v3084, %v3082
    %v3155 = vpack.c.b16 %v3085, %v3083
    %v3156 = vpack.c.b16 %v3088, %v3086
    %v3157 = vpack.c.b16 %v3089, %v3087
    %v3158 = vpack.c.b16 %v3092, %v3090
    %v3159 = vpack.c.b16 %v3093, %v3091
    %v3160 = vpack.c.b16 %v3096, %v3094
    %v3161 = vpack.c.b16 %v3097, %v3095
    %v3162 = vpack.c.b16 %v3100, %v3098
    %v3163 = vpack.c.b16 %v3101, %v3099
    %v3164 = vpack.c.b16 %v3104, %v3102
    %v3165 = vpack.c.b16 %v3105, %v3103
    %v3166 = vpack.c.b16 %v3108, %v3106
    %v3167 = vpack.c.b16 %v3109, %v3107
    %v3168 = vpack.c.b16 %v3112, %v3110
    %v3169 = vpack.c.b16 %v3113, %v3111
    %v3170 = vpack.c.b16 %v3116, %v3114
    %v3171 = vpack.c.b16 %v3117, %v3115
    %v3172 = vpack.c.b16 %v3120, %v3118
    %v3173 = vpack.c.b16 %v3121, %v3119
    %v3174 = vpack.c.b16 %v3124, %v3122
    %v3175 = vpack.c.b16 %v3125, %v3123
    %v3176 = vpack.c.b16 %v3128, %v3126
    %v3177 = vpack.c.b16 %v3129, %v3127
    %3226 = vmatprep.subr.bf16.mxu0 %v3131
    %3227 = vmatpush1.bf16.msra.mxu0 %v3130
    %3228 = vmatprep.subr.bf16.mxu0 %v3133
    %3229 = vmatpush1.bf16.msra.mxu0 %v3132
    %3230 = vmatprep.subr.bf16.mxu0 %v3135
    %3231 = vmatpush1.bf16.msra.mxu0 %v3134
    %3232 = vmatprep.subr.bf16.mxu0 %v3137
    %3233 = vmatpush1.bf16.msra.mxu0 %v3136
    %3234 = vmatprep.subr.bf16.mxu0 %v3139
    %3235 = vmatpush1.bf16.msra.mxu0 %v3138
    %3236 = vmatprep.subr.bf16.mxu0 %v3141
    %3237 = vmatpush1.bf16.msra.mxu0 %v3140
    %3238 = vmatprep.subr.bf16.mxu0 %v3143
    %3239 = vmatpush1.bf16.msra.mxu0 %v3142
    %3240 = vmatprep.subr.bf16.mxu0 %v3145
    %3241 = vmatpush1.bf16.msra.mxu0 %v3144
    %3242 = vmatprep.subr.bf16.mxu0 %v3147
    %3243 = vmatpush1.bf16.msra.mxu0 %v3146
    %3244 = vmatprep.subr.bf16.mxu0 %v3149
    %3245 = vmatpush1.bf16.msra.mxu0 %v3148
    %3246 = vmatprep.subr.bf16.mxu0 %v3151
    %3247 = vmatpush1.bf16.msra.mxu0 %v3150
    %3248 = vmatprep.subr.bf16.mxu0 %v3153
    %3249 = vmatpush1.bf16.msra.mxu0 %v3152
    %3250 = vmatprep.subr.bf16.mxu0 %v3155
    %3251 = vmatpush1.bf16.msra.mxu0 %v3154
    %3252 = vmatprep.subr.bf16.mxu0 %v3157
    %3253 = vmatpush1.bf16.msra.mxu0 %v3156
    %3254 = vmatprep.subr.bf16.mxu0 %v3159
    %3255 = vmatpush1.bf16.msra.mxu0 %v3158
    %3256 = vmatprep.subr.bf16.mxu0 %v3161
    %3257 = vmatpush1.bf16.msra.mxu0 %v3160
    %3258 = vmatprep.mubr.bf16.mxu0 %v2924
    %3259 = vmatmul.mubr.bf16.gmra.mrb[0].mxu0 %v2923
    %v3260 = vpop.f32.mrb[0].mxu0
    %v3261 = vadd.f32 %v2979, %v3260
    %v3262 = vpop.f32.mrb[0].mxu0
    %v3263 = vadd.f32 %v2983, %v3262
    %v3264 = vpop.f32.mrb[0].mxu0
    %v3265 = vpop.f32.mrb[0].mxu0
    %3266 = vdwg.mxu0
    %3267 = vmatprep.subr.bf16.mxu0 %v3163
    %3268 = vmatpush1.bf16.msra.mxu0 %v3162
    %3269 = vmatprep.subr.bf16.mxu0 %v3165
    %3270 = vmatpush1.bf16.msra.mxu0 %v3164
    %3271 = vmatprep.subr.bf16.mxu0 %v3167
    %3272 = vmatpush1.bf16.msra.mxu0 %v3166
    %3273 = vmatprep.subr.bf16.mxu0 %v3169
    %3274 = vmatpush1.bf16.msra.mxu0 %v3168
    %3275 = vmatprep.subr.bf16.mxu0 %v3171
    %3276 = vmatpush1.bf16.msra.mxu0 %v3170
    %3277 = vmatprep.subr.bf16.mxu0 %v3173
    %3278 = vmatpush1.bf16.msra.mxu0 %v3172
    %3279 = vmatprep.subr.bf16.mxu0 %v3175
    %3280 = vmatpush1.bf16.msra.mxu0 %v3174
    %3281 = vmatprep.subr.bf16.mxu0 %v3177
    %3282 = vmatpush1.bf16.msra.mxu0 %v3176
    %3283 = vmatprep.subr.bf16.mxu0 0
    %3284 = vmatpush1.bf16.msra.mxu0 0
    %3285 = vmatprep.subr.bf16.mxu0 0
    %3286 = vmatpush1.bf16.msra.mxu0 0
    %3287 = vmatprep.subr.bf16.mxu0 0
    %3288 = vmatpush1.bf16.msra.mxu0 0
    %3289 = vmatprep.subr.bf16.mxu0 0
    %3290 = vmatpush1.bf16.msra.mxu0 0
    %3291 = vmatprep.subr.bf16.mxu0 0
    %3292 = vmatpush1.bf16.msra.mxu0 0
    %3293 = vmatprep.subr.bf16.mxu0 0
    %3294 = vmatpush1.bf16.msra.mxu0 0
    %3295 = vmatprep.subr.bf16.mxu0 0
    %3296 = vmatpush1.bf16.msra.mxu0 0
    %3297 = vmatprep.subr.bf16.mxu0 0
    %3298 = vmatpush1.bf16.msra.mxu0 0
    %3299 = vmatprep.mubr.bf16.mxu0 0
    %3300 = vmatmul.mubr.bf16.gmra.mrb[0].mxu0 %v2925
    %v3301 = vpop.f32.mrb[0].mxu0
    %v3302 = vadd.f32 %v3261, %v3301
    %v3303 = vpop.f32.mrb[0].mxu0
    %v3304 = vadd.f32 %v3263, %v3303
    %v3305 = vpop.f32.mrb[0].mxu0
    %v3306 = vpop.f32.mrb[0].mxu0
    %3307 = vdwg.mxu0
    %v3308 = vmul.f32 %v3302, 0.2
    %v3309 = vmul.f32 %v3304, 0.2
    %v3310 = vmax.f32 %v3302, %v3308
    %v3311 = vmax.f32 %v3304, %v3309
    %v3312 = vpack.c.bf16 %v3310, %v3310
    %v3313 = vpack.c.bf16 %v3311, %v3311
    %v3314 = vld [vmem:[#allocation10] sm:$0xf]
    %v3315 = vld [vmem:[#allocation10 + $0x4] sm:$0xf]
    %v3316 = vld [vmem:[#allocation10 + $0x8] sm:$0xf]
    %v3317 = vld [vmem:[#allocation10 + $0xc] sm:$0xf]
    %v3318 = vld [vmem:[#allocation10 + $0x10] sm:$0xf]
    %v3319 = vld [vmem:[#allocation10 + $0x14] sm:$0xf]
    %v3320 = vld [vmem:[#allocation10 + $0x18] sm:$0xf]
    %v3321 = vld [vmem:[#allocation10 + $0x1c] sm:$0xf]
    %v3322 = vld [vmem:[#allocation10 + $0x20] sm:$0xf]
    %v3323 = vld [vmem:[#allocation10 + $0x24] sm:$0xf]
    %v3324 = vld [vmem:[#allocation10 + $0x28] sm:$0xf]
    %v3325 = vld [vmem:[#allocation10 + $0x2c] sm:$0xf]
    %v3326 = vld [vmem:[#allocation10 + $0x30] sm:$0xf]
    %v3327 = vld [vmem:[#allocation10 + $0x34] sm:$0xf]
    %v3328 = vld [vmem:[#allocation10 + $0x38] sm:$0xf]
    %v3329 = vld [vmem:[#allocation10 + $0x3c] sm:$0xf]
    %v3330 = vld [vmem:[#allocation10 + $0x40] sm:$0xf]
    %v3331 = vld [vmem:[#allocation10 + $0x44] sm:$0xf]
    %v3332 = vld [vmem:[#allocation10 + $0x48] sm:$0xf]
    %v3333 = vld [vmem:[#allocation10 + $0x4c] sm:$0xf]
    %v3334 = vld [vmem:[#allocation10 + $0x50] sm:$0xf]
    %v3335 = vld [vmem:[#allocation10 + $0x54] sm:$0xf]
    %v3336 = vld [vmem:[#allocation10 + $0x58] sm:$0xf]
    %v3337 = vld [vmem:[#allocation10 + $0x5c] sm:$0xf]
    %v3338 = vld [vmem:[#allocation10 + $0x60] sm:$0xf]
    %v3339 = vld [vmem:[#allocation10 + $0x64] sm:$0xf]
    %v3340 = vld [vmem:[#allocation10 + $0x68] sm:$0xf]
    %v3341 = vld [vmem:[#allocation10 + $0x6c] sm:$0xf]
    %v3342 = vld [vmem:[#allocation10 + $0x70] sm:$0xf]
    %v3343 = vld [vmem:[#allocation10 + $0x74] sm:$0xf]
    %v3344 = vld [vmem:[#allocation10 + $0x78] sm:$0xf]
    %v3345 = vld [vmem:[#allocation10 + $0x7c] sm:$0xf]
    %v3346 = vld [vmem:[%s11] sm:$0x1]
    %v3348 = vlaneseq
    %v3349 = vshrl.u32 %v3348, 7
    %v3350 = vsub.s32 0, %v3349
    %v3351 = vrot.slane %v3346, %v3350
    %v3385 = vunpack.c.l.b16 %v3314
    %v3386 = vunpack.c.l.b16 %v3315
    %v3387 = vunpack.c.l.b16 %v3316
    %v3388 = vunpack.c.l.b16 %v3317
    %v3389 = vunpack.c.l.b16 %v3318
    %v3390 = vunpack.c.l.b16 %v3319
    %v3391 = vunpack.c.l.b16 %v3320
    %v3392 = vunpack.c.l.b16 %v3321
    %v3393 = vunpack.c.l.b16 %v3322
    %v3394 = vunpack.c.l.b16 %v3323
    %v3395 = vunpack.c.l.b16 %v3324
    %v3396 = vunpack.c.l.b16 %v3325
    %v3397 = vunpack.c.l.b16 %v3326
    %v3398 = vunpack.c.l.b16 %v3327
    %v3399 = vunpack.c.l.b16 %v3328
    %v3400 = vunpack.c.l.b16 %v3329
    %v3401 = vunpack.c.l.b16 %v3330
    %v3402 = vunpack.c.l.b16 %v3331
    %v3403 = vunpack.c.l.b16 %v3332
    %v3404 = vunpack.c.l.b16 %v3333
    %v3405 = vunpack.c.l.b16 %v3334
    %v3406 = vunpack.c.l.b16 %v3335
    %v3407 = vunpack.c.l.b16 %v3336
    %v3408 = vunpack.c.l.b16 %v3337
    %v3409 = vunpack.c.l.b16 %v3338
    %v3410 = vunpack.c.l.b16 %v3339
    %v3411 = vunpack.c.l.b16 %v3340
    %v3412 = vunpack.c.l.b16 %v3341
    %v3413 = vunpack.c.l.b16 %v3342
    %v3414 = vunpack.c.l.b16 %v3343
    %v3415 = vunpack.c.l.b16 %v3344
    %v3416 = vunpack.c.l.b16 %v3345
    %v3417 = vpack.c.b16 %v3386, %v3385
    %v3418 = vpack.c.b16 %v3388, %v3387
    %v3419 = vpack.c.b16 %v3390, %v3389
    %v3420 = vpack.c.b16 %v3392, %v3391
    %v3421 = vpack.c.b16 %v3394, %v3393
    %v3422 = vpack.c.b16 %v3396, %v3395
    %v3423 = vpack.c.b16 %v3398, %v3397
    %v3424 = vpack.c.b16 %v3400, %v3399
    %v3425 = vpack.c.b16 %v3402, %v3401
    %v3426 = vpack.c.b16 %v3404, %v3403
    %v3427 = vpack.c.b16 %v3406, %v3405
    %v3428 = vpack.c.b16 %v3408, %v3407
    %v3429 = vpack.c.b16 %v3410, %v3409
    %v3430 = vpack.c.b16 %v3412, %v3411
    %v3431 = vpack.c.b16 %v3414, %v3413
    %v3432 = vpack.c.b16 %v3416, %v3415
    %3449 = vmatprep.subr.bf16.mxu0 0
    %3450 = vmatpush1.bf16.msra.mxu0 %v3417
    %3451 = vmatprep.subr.bf16.mxu0 0
    %3452 = vmatpush1.bf16.msra.mxu0 %v3418
    %3453 = vmatprep.subr.bf16.mxu0 0
    %3454 = vmatpush1.bf16.msra.mxu0 %v3419
    %3455 = vmatprep.subr.bf16.mxu0 0
    %3456 = vmatpush1.bf16.msra.mxu0 %v3420
    %3457 = vmatprep.subr.bf16.mxu0 0
    %3458 = vmatpush1.bf16.msra.mxu0 %v3421
    %3459 = vmatprep.subr.bf16.mxu0 0
    %3460 = vmatpush1.bf16.msra.mxu0 %v3422
    %3461 = vmatprep.subr.bf16.mxu0 0
    %3462 = vmatpush1.bf16.msra.mxu0 %v3423
    %3463 = vmatprep.subr.bf16.mxu0 0
    %3464 = vmatpush1.bf16.msra.mxu0 %v3424
    %3465 = vmatprep.subr.bf16.mxu0 0
    %3466 = vmatpush1.bf16.msra.mxu0 %v3425
    %3467 = vmatprep.subr.bf16.mxu0 0
    %3468 = vmatpush1.bf16.msra.mxu0 %v3426
    %3469 = vmatprep.subr.bf16.mxu0 0
    %3470 = vmatpush1.bf16.msra.mxu0 %v3427
    %3471 = vmatprep.subr.bf16.mxu0 0
    %3472 = vmatpush1.bf16.msra.mxu0 %v3428
    %3473 = vmatprep.subr.bf16.mxu0 0
    %3474 = vmatpush1.bf16.msra.mxu0 %v3429
    %3475 = vmatprep.subr.bf16.mxu0 0
    %3476 = vmatpush1.bf16.msra.mxu0 %v3430
    %3477 = vmatprep.subr.bf16.mxu0 0
    %3478 = vmatpush1.bf16.msra.mxu0 %v3431
    %3479 = vmatprep.subr.bf16.mxu0 0
    %3480 = vmatpush1.bf16.msra.mxu0 %v3432
    %3481 = vmatprep.mubr.bf16.mxu0 %v3313
    %3482 = vmatmul.mubr.bf16.gmra.mrb[0].mxu0 %v3312
    %v3483 = vpop.f32.mrb[0].mxu0
    %v3484 = vadd.f32 %v3351, %v3483
    %v3485 = vpop.f32.mrb[0].mxu0
    %v3486 = vpop.f32.mrb[0].mxu0
    %v3487 = vpop.f32.mrb[0].mxu0
    %3488 = vdwg.mxu0
    %v3489 = vmul.f32 %v3484, 0.2
    %v3490 = vmax.f32 %v3484, %v3489
    %v3491 = vpack.c.bf16 %v3490, %v3490
    %v3492 = vld [vmem:[#allocation12] sm:$0xf]
    %v3493 = vld [vmem:[#allocation12 + $0x4] sm:$0xf]
    %v3494 = vld [vmem:[#allocation12 + $0x8] sm:$0xf]
    %v3495 = vld [vmem:[#allocation12 + $0xc] sm:$0xf]
    %v3496 = vld [vmem:[#allocation12 + $0x10] sm:$0xf]
    %v3497 = vld [vmem:[#allocation12 + $0x14] sm:$0xf]
    %v3498 = vld [vmem:[#allocation12 + $0x18] sm:$0xf]
    %v3499 = vld [vmem:[#allocation12 + $0x1c] sm:$0xf]
    %v3500 = vld [vmem:[#allocation12 + $0x20] sm:$0xf]
    %v3501 = vld [vmem:[#allocation12 + $0x24] sm:$0xf]
    %v3502 = vld [vmem:[#allocation12 + $0x28] sm:$0xf]
    %v3503 = vld [vmem:[#allocation12 + $0x2c] sm:$0xf]
    %v3504 = vld [vmem:[#allocation12 + $0x30] sm:$0xf]
    %v3505 = vld [vmem:[#allocation12 + $0x34] sm:$0xf]
    %v3506 = vld [vmem:[#allocation12 + $0x38] sm:$0xf]
    %v3507 = vld [vmem:[#allocation12 + $0x3c] sm:$0xf]
    %v3508 = vld [vmem:[%s13] sm:$0x1]
    %v3510 = vlaneseq
    %v3511 = vshrl.u32 %v3510, 7
    %v3512 = vsub.s32 0, %v3511
    %v3513 = vrot.slane %v3508, %v3512
    %v3531 = vunpack.c.l.b16 %v3492
    %v3532 = vunpack.c.l.b16 %v3493
    %v3533 = vunpack.c.l.b16 %v3494
    %v3534 = vunpack.c.l.b16 %v3495
    %v3535 = vunpack.c.l.b16 %v3496
    %v3536 = vunpack.c.l.b16 %v3497
    %v3537 = vunpack.c.l.b16 %v3498
    %v3538 = vunpack.c.l.b16 %v3499
    %v3539 = vunpack.c.l.b16 %v3500
    %v3540 = vunpack.c.l.b16 %v3501
    %v3541 = vunpack.c.l.b16 %v3502
    %v3542 = vunpack.c.l.b16 %v3503
    %v3543 = vunpack.c.l.b16 %v3504
    %v3544 = vunpack.c.l.b16 %v3505
    %v3545 = vunpack.c.l.b16 %v3506
    %v3546 = vunpack.c.l.b16 %v3507
    %v3547 = vpack.c.b16 %v3532, %v3531
    %v3548 = vpack.c.b16 %v3534, %v3533
    %v3549 = vpack.c.b16 %v3536, %v3535
    %v3550 = vpack.c.b16 %v3538, %v3537
    %v3551 = vpack.c.b16 %v3540, %v3539
    %v3552 = vpack.c.b16 %v3542, %v3541
    %v3553 = vpack.c.b16 %v3544, %v3543
    %v3554 = vpack.c.b16 %v3546, %v3545
    %3563 = vmatprep.subr.bf16.mxu0 0
    %3564 = vmatpush1.bf16.msra.mxu0 %v3547
    %3565 = vmatprep.subr.bf16.mxu0 0
    %3566 = vmatpush1.bf16.msra.mxu0 %v3548
    %3567 = vmatprep.subr.bf16.mxu0 0
    %3568 = vmatpush1.bf16.msra.mxu0 %v3549
    %3569 = vmatprep.subr.bf16.mxu0 0
    %3570 = vmatpush1.bf16.msra.mxu0 %v3550
    %3571 = vmatprep.subr.bf16.mxu0 0
    %3572 = vmatpush1.bf16.msra.mxu0 %v3551
    %3573 = vmatprep.subr.bf16.mxu0 0
    %3574 = vmatpush1.bf16.msra.mxu0 %v3552
    %3575 = vmatprep.subr.bf16.mxu0 0
    %3576 = vmatpush1.bf16.msra.mxu0 %v3553
    %3577 = vmatprep.subr.bf16.mxu0 0
    %3578 = vmatpush1.bf16.msra.mxu0 %v3554
    %3579 = vmatprep.subr.bf16.mxu0 0
    %3580 = vmatpush1.bf16.msra.mxu0 0
    %3581 = vmatprep.subr.bf16.mxu0 0
    %3582 = vmatpush1.bf16.msra.mxu0 0
    %3583 = vmatprep.subr.bf16.mxu0 0
    %3584 = vmatpush1.bf16.msra.mxu0 0
    %3585 = vmatprep.subr.bf16.mxu0 0
    %3586 = vmatpush1.bf16.msra.mxu0 0
    %3587 = vmatprep.subr.bf16.mxu0 0
    %3588 = vmatpush1.bf16.msra.mxu0 0
    %3589 = vmatprep.subr.bf16.mxu0 0
    %3590 = vmatpush1.bf16.msra.mxu0 0
    %3591 = vmatprep.subr.bf16.mxu0 0
    %3592 = vmatpush1.bf16.msra.mxu0 0
    %3593 = vmatprep.subr.bf16.mxu0 0
    %3594 = vmatpush1.bf16.msra.mxu0 0
    %3595 = vmatprep.mubr.bf16.mxu0 0
    %3596 = vmatmul.mubr.bf16.gmra.mrb[0].mxu0 %v3491
    %v3597 = vpop.f32.mrb[0].mxu0
    %v3598 = vadd.f32 %v3513, %v3597
    %v3599 = vpop.f32.mrb[0].mxu0
    %v3600 = vpop.f32.mrb[0].mxu0
    %v3601 = vpop.f32.mrb[0].mxu0
    %3602 = vdwg.mxu0
    %v3603 = vld [vmem:[%s1] sm:$0xff]
    %v3604 = vlaneseq
    %v3605 = vand.u32 %v3604, 127
    %3606 = vset.pattern.permute.xlu0 0
    %3607 = vperm.xlu0 %3606, %v3603
    %v3608 = vpop.permute.xlu0 %3607
    %vm3609 = vcmp.eq.s32.totalorder %v3605, %v3608
    %v3610 = vsel %vm3609, 1, 0
    %v3611 = vcvt.s32.f32 %v3610
    %v3612 = vmul.f32 %v3598, %v3611
    %3613 = vadd.xlane.f32.xlu0 %v3612
    %v3614 = vpop.xlane.xlu0 %3613
    %3615 = vmax.xlane.f32.xlu0 %v3598
    %v3616 = vpop.xlane.xlu0 %3615
    %v3617 = vsub.f32 %v3598, %v3616
    %v3618 = vmul.f32 %v3617, 1.442695
    %v3619 = vpow.pop %v3618
    %3620 = vadd.xlane.f32.xlu0 %v3619
    %v3621 = vpop.xlane.xlu0 %3620
    %v3622 = vlog2.pop %v3621
    %v3623 = vmul.f32 %v3622, 0.6931472
    %v3624 = vadd.f32 %v3616, %v3623
    %v3625 = vsub.f32 %v3614, %v3624
    %v3626 = vmul.f32 %v155, 256.0
    %v3627 = vsub.f32 %v3625, %v3626
    %vm3628 = vcmask 7168
    %3629 = vst.msk [vmem:[%s14] sm:$0xff] %vm3628, %v3627
    // Predicated region
    $region86: #{tpu_custom_call.1} parent=1 // pred_check
      _
    $region87: #{tpu_custom_call.1} parent=1 // pred_check_branch
      %3631 = sbr.rel (0) target = $region89
    $region88: #{tpu_custom_call.1} parent=1 // pred_region
      _
    $region89: #{tpu_custom_call.1} parent=1 // pred_fallthru
      _
    // Predicated region
    $region90: #{tpu_custom_call.1} parent=1 // pred_check
      _
    $region91: #{tpu_custom_call.1} parent=1 // pred_check_branch
      %3633 = sbr.rel (0) target = $region93
    $region92: #{tpu_custom_call.1} parent=1 // pred_region
      _
    $region93: #{tpu_custom_call.1} parent=1 // pred_fallthru
      _
    %3634 = vsyncpa [#allocation3], 1
    %3635 = vsyncpa [#allocation5], 1
    %3636 = vsyncpa [#allocation8], 1
    %3637 = vsyncpa [#allocation11], 1

</llo_original>
